<compile_context>
chip_gen: v7x
topology: tpu7x:2x2x1
jax: 0.10.0
libtpu: 0.0.40
codegen_flags: <defaults>
</compile_context>

<pallas_src>
import math
import functools

import jax
import jax.numpy as jnp
from jax.experimental import pallas as pl
from jax.experimental.pallas import tpu as pltpu


# ----------------------------------------------------------------------------
# Fused decoder kernel: one grid step == one decoder layer.
# ----------------------------------------------------------------------------

def _decoder_kernel(
    x0_ref,      # (B, S, D)      f32  embedded + pos-encoded input
    e_ref,       # (B, Ssrc, D)   f32  encoder outputs
    tm_ref,      # (B, S, S)      f32  additive target mask (0 / -1e9)
    sm_ref,      # (B, 1, Ssrc)   f32  additive source mask (0 / -1e9)
    fnorm_ref,   # (2, D)         f32  final Norm [alpha, bias]
    wqkv_ref,    # (1, 2, D, 3D)  bf16 [self, cross] fused Wq|Wk|Wv
    wo_ref,      # (1, 2, D, D)   bf16 [self, cross] output projections
    wc1_ref,     # (1, 3D, F)     bf16 conv1 weights (tap-major rows)
    wc2_ref,     # (1, 3F, D)     bf16 conv2 weights (tap-major rows)
    bqkv_ref,    # (1, 2, 3D)     f32  [self, cross] fused qkv biases
    bvec_ref,    # (1, 9, D)      f32  n1a,n1b,n2a,n2b,n3a,n3b,bo1,bo2,c2b
    bf_ref,      # (1, 1, F)      f32  conv1 bias
    o_ref,       # (B, S, D)      f32  output; also the resident running x
    *, heads, eps,
):
    layer = pl.program_id(0)
    n_layers = pl.num_programs(0)

    B, S, D = o_ref.shape
    Ssrc = e_ref.shape[1]
    dk = D // heads
    scale = 1.0 / math.sqrt(dk)
    inv_dm1 = 1.0 / (D - 1)
    bf16 = jnp.bfloat16

    # Layer 0: seed the resident activation from the embedded input.
    @pl.when(layer == 0)
    def _():
        o_ref[...] = x0_ref[...]

    x = o_ref[...]
    e = e_ref[...]

    def norm_rows(y, a, b):
        mean = jnp.mean(y, axis=-1, keepdims=True)
        var = jnp.sum((y - mean) ** 2, axis=-1, keepdims=True) * inv_dm1
        inv = pl.reciprocal(jnp.sqrt(var) + eps, approx=True)   # EUP slot
        return a * (y - mean) * inv + b

    def layer_norm(y, idx):
        return norm_rows(y,
                         bvec_ref[0, idx:idx + 1, :],
                         bvec_ref[0, idx + 1:idx + 2, :])

    def attention(q, k, v, wo, bo, mask_add):
        """q:(B,Sq,D) k,v:(B,Sk,D) f32; per-head scores + one fused Wo dot."""
        Sq, Sk = q.shape[1], k.shape[1]
        ohs = []
        for h in range(heads):                       # static unroll (H small)
            qh = q[:, :, h * dk:(h + 1) * dk].astype(bf16)
            kh = k[:, :, h * dk:(h + 1) * dk].astype(bf16)
            vh = v[:, :, h * dk:(h + 1) * dk].astype(bf16)
            s = jnp.einsum("bqd,bkd->bqk", qh, kh,
                           preferred_element_type=jnp.float32) * scale
            s = s + mask_add                         # additive mask (no where)
            s = s - jnp.max(s, axis=-1, keepdims=True)
            p = jnp.exp(s)
            p = p * pl.reciprocal(jnp.sum(p, axis=-1, keepdims=True),
                                  approx=True)
            ohs.append(jnp.einsum("bqk,bkd->bqd", p.astype(bf16), vh,
                                  preferred_element_type=jnp.float32))
        o = jnp.concatenate(ohs, axis=-1)            # (B, Sq, D) concat heads
        of = jnp.dot(o.reshape(B * Sq, D).astype(bf16), wo,
                     preferred_element_type=jnp.float32) + bo
        return of.reshape(B, Sq, D)

    # ---- self-attention (pre-norm, residual) --------------------------------
    x2 = layer_norm(x, 0)
    qkv = (jnp.dot(x2.reshape(B * S, D).astype(bf16), wqkv_ref[0, 0],
                   preferred_element_type=jnp.float32)
           + bqkv_ref[0, 0:1, :]).reshape(B, S, 3 * D)
    q1 = qkv[:, :, 0:D]
    k1 = qkv[:, :, D:2 * D]
    v1 = qkv[:, :, 2 * D:3 * D]
    x = x + attention(q1, k1, v1, wo_ref[0, 0], bvec_ref[0, 6:7, :], tm_ref[...])

    # ---- cross-attention -----------------------------------------------------
    x2 = layer_norm(x, 2)
    w2 = wqkv_ref[0, 1]                              # (D, 3D) bf16
    b2 = bqkv_ref[0, 1:2, :]                         # (1, 3D) f32
    q2 = (jnp.dot(x2.reshape(B * S, D).astype(bf16), w2[:, 0:D],
                  preferred_element_type=jnp.float32)
          + b2[:, 0:D]).reshape(B, S, D)
    kv = (jnp.dot(e.reshape(B * Ssrc, D).astype(bf16), w2[:, D:3 * D],
                  preferred_element_type=jnp.float32)
          + b2[:, D:3 * D]).reshape(B, Ssrc, 2 * D)
    k2 = kv[:, :, 0:D]
    v2 = kv[:, :, D:2 * D]
    x = x + attention(q2, k2, v2, wo_ref[0, 1], bvec_ref[0, 7:8, :], sm_ref[...])

    # ---- conv feed-forward ---------------------------------------------------
    # Edge-row masks for the k=3/p=1 taps (also kill cross-batch wrap of roll).
    row = jax.lax.broadcasted_iota(jnp.int32, (1, S, 1), 1)
    mask_first = (row != 0).astype(jnp.float32)      # zeroes t = 0      row
    mask_last = (row != S - 1).astype(jnp.float32)   # zeroes t = S - 1  row
    total = B * S

    def conv3(y, w, b, relu):
        """Conv1d(kernel=3, padding=1) over time, channels-last, ONE matmul."""
        Cin = y.shape[-1]
        yf = y.reshape(total, Cin)
        # roll along the (flattened) time axis; wrapped / cross-batch rows are
        # exactly the edge rows and get zeroed by the masks.
        y_prev = pltpu.roll(yf, 1, 0).reshape(B, S, Cin) * mask_first
        y_next = pltpu.roll(yf, total - 1, 0).reshape(B, S, Cin) * mask_last
        cat = jnp.concatenate([y_prev, y, y_next], axis=-1)      # (B,S,3*Cin)
        out = jnp.dot(cat.reshape(total, 3 * Cin).astype(bf16), w,
                      preferred_element_type=jnp.float32) + b
        if relu:
            out = jnp.maximum(out, 0.0)
        return out.reshape(B, S, -1)

    x2 = layer_norm(x, 4)
    h1 = conv3(x2, wc1_ref[0], bf_ref[0], relu=True)              # (B,S,F)
    x = x + conv3(h1, wc2_ref[0], bvec_ref[0, 8:9, :], relu=False)

    @pl.when(layer < n_layers - 1)
    def _():
        o_ref[...] = x

    @pl.when(layer == n_layers - 1)
    def _():
        o_ref[...] = norm_rows(x, fnorm_ref[0:1, :], fnorm_ref[1:2, :])


# ----------------------------------------------------------------------------
# Wrapper-side helpers: masks, positional encoding, params, packing
# ----------------------------------------------------------------------------

def create_combined_mask(trg):
    """Vectorized equivalent of FasttextCNNDecoder.create_combined_mask
    (faithfully reproduces the reference's `for j in range(B-1)` behaviour)."""
    B, S = trg.shape
    look = 1.0 - jnp.triu(jnp.ones((S, S), jnp.float32), k=1)       # lower tri
    is_pad = (trg == 0)
    has_pad = jnp.any(is_pad, axis=1)
    first = jnp.argmax(is_pad, axis=1)
    ps = jnp.where(has_pad, first, 0).astype(jnp.int32)             # (B,)
    big = jnp.int32(S + 1)
    ps_eff = jnp.where(ps != 0, ps, big)
    # batch b is zeroed at rows >= min{ps[j] : j <= min(b, B-2), ps[j] != 0}
    b_idx = jnp.arange(B)[:, None]
    j_idx = jnp.arange(B)[None, :]
    valid = j_idx <= jnp.minimum(b_idx, B - 2)
    thr = jnp.min(jnp.where(valid, ps_eff[None, :], big), axis=1)   # (B,)
    row_ids = jnp.arange(S)[None, :, None]
    keep = row_ids < thr[:, None, None]
    combined = jnp.where(keep, look[None, :, :], 0.0)
    return combined[:, None, :, :]                                   # (B,1,S,S)


def sinusoidal_pe(max_len, d_model):
    pos = jnp.arange(max_len, dtype=jnp.float32)[:, None]
    i = jnp.arange(0, d_model, 2, dtype=jnp.float32)
    div = jnp.exp(-math.log(10000.0) * i / d_model)
    pe = jnp.zeros((max_len, d_model), jnp.float32)
    pe = pe.at[:, 0::2].set(jnp.sin(pos * div))
    pe = pe.at[:, 1::2].set(jnp.cos(pos * div))
    return pe


def _init_attn(key, d_model):
    ks = jax.random.split(key, 4)
    sc = 1.0 / math.sqrt(d_model)
    return {
        "wq": jax.random.normal(ks[0], (d_model, d_model), jnp.float32) * sc,
        "wk": jax.random.normal(ks[1], (d_model, d_model), jnp.float32) * sc,
        "wv": jax.random.normal(ks[2], (d_model, d_model), jnp.float32) * sc,
        "wo": jax.random.normal(ks[3], (d_model, d_model), jnp.float32) * sc,
        "bq": jnp.zeros((d_model,), jnp.float32),
        "bk": jnp.zeros((d_model,), jnp.float32),
        "bv": jnp.zeros((d_model,), jnp.float32),
        "bo": jnp.zeros((d_model,), jnp.float32),
    }


def init_params(key, vocab, max_seq, d_model, d_ff, N):
    keys = jax.random.split(key, 3 * N + 2)
    emb = jax.random.normal(keys[0], (vocab, d_model), jnp.float32) * 0.1
    emb = emb.at[0].set(0.0)                 # padding_idx=0 row is zero
    layers = []
    for i in range(N):
        k1, k2, k3 = keys[1 + 3 * i], keys[2 + 3 * i], keys[3 + 3 * i]
        kc1, kc2 = jax.random.split(k3)
        layers.append({
            "n1_a": jnp.ones((d_model,), jnp.float32), "n1_b": jnp.zeros((d_model,), jnp.float32),
            "n2_a": jnp.ones((d_model,), jnp.float32), "n2_b": jnp.zeros((d_model,), jnp.float32),
            "n3_a": jnp.ones((d_model,), jnp.float32), "n3_b": jnp.zeros((d_model,), jnp.float32),
            "attn1": _init_attn(k1, d_model),
            "attn2": _init_attn(k2, d_model),
            "conv1_w": jax.random.normal(kc1, (3, d_model, d_ff), jnp.float32)
                       * (1.0 / math.sqrt(3 * d_model)),
            "conv1_b": jnp.zeros((d_ff,), jnp.float32),
            "conv2_w": jax.random.normal(kc2, (3, d_ff, d_model), jnp.float32)
                       * (1.0 / math.sqrt(3 * d_ff)),
            "conv2_b": jnp.zeros((d_model,), jnp.float32),
        })
    return {
        "embedding": emb,
        "pe": sinusoidal_pe(max_seq, d_model),
        "pe_alpha": jnp.float32(1.0),
        "layers": layers,
        "norm_a": jnp.ones((d_model,), jnp.float32),
        "norm_b": jnp.zeros((d_model,), jnp.float32),
    }


def pack_params(params):
    """One-time, off-hot-path repacking into lane-dense kernel slabs."""
    layers = params["layers"]
    D = params["embedding"].shape[1]

    def attn_cat(a):
        wqkv = jnp.concatenate([a["wq"], a["wk"], a["wv"]], axis=1)   # (D,3D)
        bqkv = jnp.concatenate([a["bq"], a["bk"], a["bv"]], axis=0)   # (3D,)
        return wqkv, bqkv

    wqkv_l, wo_l, bqkv_l, bvec_l, wc1_l, wc2_l, bf_l = [], [], [], [], [], [], []
    for l in layers:
        w1, b1 = attn_cat(l["attn1"])
        w2, b2 = attn_cat(l["attn2"])
        wqkv_l.append(jnp.stack([w1, w2]))                           # (2,D,3D)
        bqkv_l.append(jnp.stack([b1, b2]))                           # (2,3D)
        wo_l.append(jnp.stack([l["attn1"]["wo"], l["attn2"]["wo"]])) # (2,D,D)
        bvec_l.append(jnp.stack([l["n1_a"], l["n1_b"], l["n2_a"], l["n2_b"],
                                 l["n3_a"], l["n3_b"],
                                 l["attn1"]["bo"], l["attn2"]["bo"],
                                 l["conv2_b"]]))                     # (9,D)
        wc1_l.append(l["conv1_w"].reshape(3 * D, -1))                # (3D,F)
        wc2_l.append(l["conv2_w"].reshape(-1, D))                    # (3F,D)
        bf_l.append(l["conv1_b"].reshape(1, -1))                     # (1,F)

    bf16 = jnp.bfloat16
    return {
        "embedding": params["embedding"],
        "pe": params["pe"],
        "pe_alpha": params["pe_alpha"],
        "wqkv": jnp.stack(wqkv_l).astype(bf16),    # (N,2,D,3D)
        "wo": jnp.stack(wo_l).astype(bf16),        # (N,2,D,D)
        "wc1": jnp.stack(wc1_l).astype(bf16),      # (N,3D,F)
        "wc2": jnp.stack(wc2_l).astype(bf16),      # (N,3F,D)
        "bqkv": jnp.stack(bqkv_l),                 # (N,2,3D)  f32
        "bvec": jnp.stack(bvec_l),                 # (N,9,D)   f32
        "bf": jnp.stack(bf_l),                     # (N,1,F)   f32
        "fnorm": jnp.stack([params["norm_a"], params["norm_b"]]),   # (2,D)
    }


# ----------------------------------------------------------------------------
# Full forward pass
# ----------------------------------------------------------------------------

def fasttext_cnn_decoder(trg, e_outputs, src_mask, packed, *, heads, N):
    B, S = trg.shape
    D = packed["embedding"].shape[1]
    Ssrc = e_outputs.shape[1]
    F = packed["wc1"].shape[-1]

    # embedding (frozen, padding_idx=0) + scaled positional encoding (XLA side)
    x0 = jnp.take(packed["embedding"], trg, axis=0)
    x0 = x0 + packed["pe_alpha"] * packed["pe"][:S][None, :, :]

    # additive masks (0 keep / -1e9 drop), built once in the wrapper
    trg_mask = create_combined_mask(trg)[:, 0]                       # (B,S,S)
    tm_add = jnp.where(trg_mask == 0.0, -1e9, 0.0).astype(jnp.float32)
    sm_add = jnp.where(src_mask.reshape(B, 1, Ssrc) == 0, -1e9, 0.0
                       ).astype(jnp.float32)

    kernel = functools.partial(_decoder_kernel, heads=heads, eps=1e-6)

    c3 = lambda i: (0, 0, 0)          # layer-invariant blocks (DMA'd once)
    l3 = lambda i: (i, 0, 0)          # per-layer 3-D blocks
    l4 = lambda i: (i, 0, 0, 0)       # per-layer 4-D blocks

    out = pl.pallas_call(
        kernel,
        out_shape=jax.ShapeDtypeStruct((B, S, D), jnp.float32),
        grid=(N,),
        in_specs=[
            pl.BlockSpec((B, S, D), c3),                 # x0
            pl.BlockSpec((B, Ssrc, D), c3),              # e_outputs
            pl.BlockSpec((B, S, S), c3),                 # additive trg mask
            pl.BlockSpec((B, 1, Ssrc), c3),              # additive src mask
            pl.BlockSpec((2, D), lambda i: (0, 0)),      # final Norm
            pl.BlockSpec((1, 2, D, 3 * D), l4),          # wqkv   (bf16)
            pl.BlockSpec((1, 2, D, D), l4),              # wo     (bf16)
            pl.BlockSpec((1, 3 * D, F), l3),             # conv1 W (bf16)
            pl.BlockSpec((1, 3 * F, D), l3),             # conv2 W (bf16)
            pl.BlockSpec((1, 2, 3 * D), l3),             # qkv biases
            pl.BlockSpec((1, 9, D), l3),                 # norms + bo1/bo2/c2b
            pl.BlockSpec((1, 1, F), l3),                 # conv1 bias
        ],
        out_specs=pl.BlockSpec((B, S, D), c3),           # resident accumulator
        compiler_params=pltpu.CompilerParams(
            dimension_semantics=("arbitrary",),          # sequential over layers
            vmem_limit_bytes=64 * 1024 * 1024,           # explicit budget (v7x-safe)
        ),
    )(x0, e_outputs.astype(jnp.float32), tm_add, sm_add,
      packed["fnorm"],
      packed["wqkv"], packed["wo"], packed["wc1"], packed["wc2"],
      packed["bqkv"], packed["bvec"], packed["bf"])
    return out


# ----------------------------------------------------------------------------

if __name__ == "__main__":
    vocab_len = 50
    max_seq_length = 16
    d_model = 32
    d_ff = 64
    N = 2
    heads = 4
    B, S, S_src = 2, 8, 8

    root = jax.random.PRNGKey(0)
    k_par, k_trg, k_enc = jax.random.split(root, 3)

    params = init_params(k_par, vocab_len, max_seq_length, d_model, d_ff, N)
    packed = pack_params(params)             # one-time weight repacking

    trg = jax.random.randint(k_trg, (B, S), 1, vocab_len, dtype=jnp.int32)
    trg = trg.at[0, S - 2:].set(0)           # batch 0 has padding at the tail
    e_outputs = jax.random.normal(k_enc, (B, S_src, d_model), jnp.float32)
    src_mask = jnp.ones((B, 1, S_src), jnp.float32)

    fwd = jax.jit(functools.partial(fasttext_cnn_decoder, heads=heads, N=N))
    out = fwd(trg, e_outputs, src_mask, packed)
    out = jax.block_until_ready(out)

    assert out.shape == (B, S, d_model)
    assert bool(jnp.all(jnp.isfinite(out)))
    print("KERNEL_OK")
</pallas_src>

<mosaic_0001>
module attributes {stable_mosaic.version = 11 : i64} {
  func.func @_decoder_kernel(%arg0: i32, %arg1: memref<2x8x32xf32, #tpu.memory_space<vmem>>, %arg2: memref<2x8x32xf32, #tpu.memory_space<vmem>>, %arg3: memref<2x8x8xf32, #tpu.memory_space<vmem>>, %arg4: memref<2x1x8xf32, #tpu.memory_space<vmem>>, %arg5: memref<2x32xf32, #tpu.memory_space<vmem>>, %arg6: memref<1x2x32x96xbf16, #tpu.memory_space<vmem>>, %arg7: memref<1x2x32x32xbf16, #tpu.memory_space<vmem>>, %arg8: memref<1x96x64xbf16, #tpu.memory_space<vmem>>, %arg9: memref<1x192x32xbf16, #tpu.memory_space<vmem>>, %arg10: memref<1x2x96xf32, #tpu.memory_space<vmem>>, %arg11: memref<1x9x32xf32, #tpu.memory_space<vmem>>, %arg12: memref<1x1x64xf32, #tpu.memory_space<vmem>>, %arg13: memref<2x8x32xf32, #tpu.memory_space<vmem>>) attributes {dimension_semantics = [#tpu.dimension_semantics<arbitrary>], iteration_bounds = array<i64: 2>, scalar_prefetch = 0 : i64, scratch_operands = 0 : i64, tpu.core_type = #tpu.core_type<tc>, window_params = [{pipeline_mode = #tpu.pipeline_mode<synchronous>, transform_indices = @transform_0, window_bounds = array<i64: 2, 8, 32>}, {pipeline_mode = #tpu.pipeline_mode<synchronous>, transform_indices = @transform_1, window_bounds = array<i64: 2, 8, 32>}, {pipeline_mode = #tpu.pipeline_mode<synchronous>, transform_indices = @transform_2, window_bounds = array<i64: 2, 8, 8>}, {pipeline_mode = #tpu.pipeline_mode<synchronous>, transform_indices = @transform_3, window_bounds = array<i64: 2, 1, 8>}, {pipeline_mode = #tpu.pipeline_mode<synchronous>, transform_indices = @transform_4, window_bounds = array<i64: 2, 32>}, {transform_indices = @transform_5, window_bounds = array<i64: 1, 2, 32, 96>}, {transform_indices = @transform_6, window_bounds = array<i64: 1, 2, 32, 32>}, {transform_indices = @transform_7, window_bounds = array<i64: 1, 96, 64>}, {transform_indices = @transform_8, window_bounds = array<i64: 1, 192, 32>}, {transform_indices = @transform_9, window_bounds = array<i64: 1, 2, 96>}, {transform_indices = @transform_10, window_bounds = array<i64: 1, 9, 32>}, {transform_indices = @transform_11, window_bounds = array<i64: 1, 1, 64>}, {pipeline_mode = #tpu.pipeline_mode<synchronous>, transform_indices = @transform_12, window_bounds = array<i64: 2, 8, 32>}]} {
    %c0_i32 = arith.constant 0 : i32
    %0 = arith.cmpi eq, %arg0, %c0_i32 : i32
    %1 = arith.extui %0 : i1 to i32
    %c0_i32_0 = arith.constant 0 : i32
    %2 = arith.cmpi ne, %1, %c0_i32_0 : i32
    scf.if %2 {
      %c0_131 = arith.constant 0 : index
      %c0_132 = arith.constant 0 : index
      %c0_133 = arith.constant 0 : index
      %391 = vector.load %arg1[%c0_131, %c0_132, %c0_133] : memref<2x8x32xf32, #tpu.memory_space<vmem>>, vector<2x8x32xf32>
      %c0_134 = arith.constant 0 : index
      %c0_135 = arith.constant 0 : index
      %c0_136 = arith.constant 0 : index
      %392 = vector.load %arg13[%c0_134, %c0_135, %c0_136] : memref<2x8x32xf32, #tpu.memory_space<vmem>>, vector<2x8x32xf32>
      tpu.vector_store %arg13[%c0_134, %c0_135, %c0_136], %391 {strides = array<i32>} : memref<2x8x32xf32, #tpu.memory_space<vmem>>, vector<2x8x32xf32>,
    } else {
    }
    %c0 = arith.constant 0 : index
    %c0_1 = arith.constant 0 : index
    %c0_2 = arith.constant 0 : index
    %3 = vector.load %arg13[%c0, %c0_1, %c0_2] : memref<2x8x32xf32, #tpu.memory_space<vmem>>, vector<2x8x32xf32>
    %c0_3 = arith.constant 0 : index
    %c0_4 = arith.constant 0 : index
    %c0_5 = arith.constant 0 : index
    %4 = vector.load %arg2[%c0_3, %c0_4, %c0_5] : memref<2x8x32xf32, #tpu.memory_space<vmem>>, vector<2x8x32xf32>
    %c0_6 = arith.constant 0 : index
    %c0_7 = arith.constant 0 : index
    %c0_8 = arith.constant 0 : index
    %5 = vector.load %arg11[%c0_6, %c0_7, %c0_8] : memref<1x9x32xf32, #tpu.memory_space<vmem>>, vector<1x1x32xf32>
    %6 = vector.shape_cast %5 : vector<1x1x32xf32> to vector<1x32xf32>
    %c0_9 = arith.constant 0 : index
    %c1 = arith.constant 1 : index
    %c0_10 = arith.constant 0 : index
    %7 = vector.load %arg11[%c0_9, %c1, %c0_10] : memref<1x9x32xf32, #tpu.memory_space<vmem>>, vector<1x1x32xf32>
    %8 = vector.shape_cast %7 : vector<1x1x32xf32> to vector<1x32xf32>
    %cst = arith.constant dense<0.000000e+00> : vector<2x8xf32>
    %9 = vector.multi_reduction <add>, %3, %cst [2] : vector<2x8x32xf32> to vector<2x8xf32>
    %10 = vector.shape_cast %9 : vector<2x8xf32> to vector<2x8x1xf32>
    %cst_11 = arith.constant 3.200000e+01 : f32
    %11 = vector.broadcast %cst_11 : f32 to vector<2x8x1xf32>
    %12 = arith.divf %10, %11 : vector<2x8x1xf32>
    %13 = vector.broadcast %12 : vector<2x8x1xf32> to vector<2x8x32xf32>
    %14 = arith.subf %3, %13 : vector<2x8x32xf32>
    %15 = arith.mulf %14, %14 : vector<2x8x32xf32>
    %cst_12 = arith.constant dense<0.000000e+00> : vector<2x8xf32>
    %16 = vector.multi_reduction <add>, %15, %cst_12 [2] : vector<2x8x32xf32> to vector<2x8xf32>
    %17 = vector.shape_cast %16 : vector<2x8xf32> to vector<2x8x1xf32>
    %cst_13 = arith.constant 0.0322580636 : f32
    %18 = vector.broadcast %cst_13 : f32 to vector<2x8x1xf32>
    %19 = arith.mulf %17, %18 : vector<2x8x1xf32>
    %20 = math.sqrt %19 : vector<2x8x1xf32>
    %cst_14 = arith.constant 9.99999997E-7 : f32
    %21 = vector.broadcast %cst_14 : f32 to vector<2x8x1xf32>
    %22 = arith.addf %20, %21 : vector<2x8x1xf32>
    %23 = tpu.reciprocal %22 {approx = true} : vector<2x8x1xf32> -> vector<2x8x1xf32>
    %24 = vector.broadcast %12 : vector<2x8x1xf32> to vector<2x8x32xf32>
    %25 = arith.subf %3, %24 : vector<2x8x32xf32>
    %26 = vector.shape_cast %6 : vector<1x32xf32> to vector<1x1x32xf32>
    %27 = vector.broadcast %26 : vector<1x1x32xf32> to vector<2x8x32xf32>
    %28 = arith.mulf %27, %25 : vector<2x8x32xf32>
    %29 = vector.broadcast %23 : vector<2x8x1xf32> to vector<2x8x32xf32>
    %30 = arith.mulf %28, %29 : vector<2x8x32xf32>
    %31 = vector.shape_cast %8 : vector<1x32xf32> to vector<1x1x32xf32>
    %32 = vector.broadcast %31 : vector<1x1x32xf32> to vector<2x8x32xf32>
    %33 = arith.addf %30, %32 : vector<2x8x32xf32>
    %34 = vector.shape_cast %33 : vector<2x8x32xf32> to vector<16x32xf32>
    %35 = arith.truncf %34 : vector<16x32xf32> to vector<16x32xbf16>
    %c0_15 = arith.constant 0 : index
    %c0_16 = arith.constant 0 : index
    %c0_17 = arith.constant 0 : index
    %c0_18 = arith.constant 0 : index
    %36 = vector.load %arg6[%c0_15, %c0_16, %c0_17, %c0_18] : memref<1x2x32x96xbf16, #tpu.memory_space<vmem>>, vector<1x1x32x96xbf16>
    %37 = vector.shape_cast %36 : vector<1x1x32x96xbf16> to vector<32x96xbf16>
    %cst_19 = arith.constant dense<0.000000e+00> : vector<16x96xf32>
    %38 = tpu.matmul %35, %37, %cst_19 {dimension_numbers = #tpu.dot_dimension_numbers<[1], [0], [0], [1], [0, 0, 1, 1], [], []>} : vector<16x32xbf16>, vector<32x96xbf16>, vector<16x96xf32> -> vector<16x96xf32>
    %c0_20 = arith.constant 0 : index
    %c0_21 = arith.constant 0 : index
    %c0_22 = arith.constant 0 : index
    %39 = vector.load %arg10[%c0_20, %c0_21, %c0_22] : memref<1x2x96xf32, #tpu.memory_space<vmem>>, vector<1x1x96xf32>
    %40 = vector.shape_cast %39 : vector<1x1x96xf32> to vector<1x96xf32>
    %41 = vector.broadcast %40 : vector<1x96xf32> to vector<16x96xf32>
    %42 = arith.addf %38, %41 : vector<16x96xf32>
    %43 = vector.shape_cast %42 : vector<16x96xf32> to vector<2x8x96xf32>
    %44 = vector.extract_strided_slice %43 {offsets = [0, 0, 0], sizes = [2, 8, 32], strides = [1, 1, 1]} : vector<2x8x96xf32> to vector<2x8x32xf32>
    %45 = vector.extract_strided_slice %43 {offsets = [0, 0, 32], sizes = [2, 8, 32], strides = [1, 1, 1]} : vector<2x8x96xf32> to vector<2x8x32xf32>
    %46 = vector.extract_strided_slice %43 {offsets = [0, 0, 64], sizes = [2, 8, 32], strides = [1, 1, 1]} : vector<2x8x96xf32> to vector<2x8x32xf32>
    %c0_23 = arith.constant 0 : index
    %c0_24 = arith.constant 0 : index
    %c0_25 = arith.constant 0 : index
    %c0_26 = arith.constant 0 : index
    %47 = vector.load %arg7[%c0_23, %c0_24, %c0_25, %c0_26] : memref<1x2x32x32xbf16, #tpu.memory_space<vmem>>, vector<1x1x32x32xbf16>
    %48 = vector.shape_cast %47 : vector<1x1x32x32xbf16> to vector<32x32xbf16>
    %c0_27 = arith.constant 0 : index
    %c6 = arith.constant 6 : index
    %c0_28 = arith.constant 0 : index
    %49 = vector.load %arg11[%c0_27, %c6, %c0_28] : memref<1x9x32xf32, #tpu.memory_space<vmem>>, vector<1x1x32xf32>
    %50 = vector.shape_cast %49 : vector<1x1x32xf32> to vector<1x32xf32>
    %c0_29 = arith.constant 0 : index
    %c0_30 = arith.constant 0 : index
    %c0_31 = arith.constant 0 : index
    %51 = vector.load %arg3[%c0_29, %c0_30, %c0_31] : memref<2x8x8xf32, #tpu.memory_space<vmem>>, vector<2x8x8xf32>
    %52 = vector.extract_strided_slice %44 {offsets = [0, 0, 0], sizes = [2, 8, 8], strides = [1, 1, 1]} : vector<2x8x32xf32> to vector<2x8x8xf32>
    %53 = arith.truncf %52 : vector<2x8x8xf32> to vector<2x8x8xbf16>
    %54 = vector.extract_strided_slice %45 {offsets = [0, 0, 0], sizes = [2, 8, 8], strides = [1, 1, 1]} : vector<2x8x32xf32> to vector<2x8x8xf32>
    %55 = arith.truncf %54 : vector<2x8x8xf32> to vector<2x8x8xbf16>
    %56 = vector.extract_strided_slice %46 {offsets = [0, 0, 0], sizes = [2, 8, 8], strides = [1, 1, 1]} : vector<2x8x32xf32> to vector<2x8x8xf32>
    %57 = arith.truncf %56 : vector<2x8x8xf32> to vector<2x8x8xbf16>
    "tpu.trace_start"() <{level = 10 : i32, message = "bqd,bkd->bqk"}> : () -> ()
    %cst_32 = arith.constant dense<0.000000e+00> : vector<2x8x8xf32>
    %58 = tpu.matmul %53, %55, %cst_32 {dimension_numbers = #tpu.dot_dimension_numbers<[2], [2], [1], [1], [0, 0, 0, 1, 1, 1], [0], [0]>} : vector<2x8x8xbf16>, vector<2x8x8xbf16>, vector<2x8x8xf32> -> vector<2x8x8xf32>
    "tpu.trace_stop"() : () -> ()
    %cst_33 = arith.constant 0.353553385 : f32
    %59 = vector.broadcast %cst_33 : f32 to vector<2x8x8xf32>
    %60 = arith.mulf %58, %59 : vector<2x8x8xf32>
    %61 = arith.addf %60, %51 : vector<2x8x8xf32>
    %cst_34 = arith.constant dense<0xFF800000> : vector<2x8xf32>
    %62 = vector.multi_reduction <maximumf>, %61, %cst_34 [2] : vector<2x8x8xf32> to vector<2x8xf32>
    %63 = vector.shape_cast %62 : vector<2x8xf32> to vector<2x8x1xf32>
    %64 = vector.broadcast %63 : vector<2x8x1xf32> to vector<2x8x8xf32>
    %65 = arith.subf %61, %64 : vector<2x8x8xf32>
    %66 = math.exp %65 : vector<2x8x8xf32>
    %cst_35 = arith.constant dense<0.000000e+00> : vector<2x8xf32>
    %67 = vector.multi_reduction <add>, %66, %cst_35 [2] : vector<2x8x8xf32> to vector<2x8xf32>
    %68 = vector.shape_cast %67 : vector<2x8xf32> to vector<2x8x1xf32>
    %69 = tpu.reciprocal %68 {approx = true} : vector<2x8x1xf32> -> vector<2x8x1xf32>
    %70 = vector.broadcast %69 : vector<2x8x1xf32> to vector<2x8x8xf32>
    %71 = arith.mulf %66, %70 : vector<2x8x8xf32>
    %72 = arith.truncf %71 : vector<2x8x8xf32> to vector<2x8x8xbf16>
    "tpu.trace_start"() <{level = 10 : i32, message = "bqk,bkd->bqd"}> : () -> ()
    %cst_36 = arith.constant dense<0.000000e+00> : vector<2x8x8xf32>
    %73 = tpu.matmul %72, %57, %cst_36 {dimension_numbers = #tpu.dot_dimension_numbers<[2], [1], [1], [2], [0, 0, 0, 1, 1, 2], [0], [0]>} : vector<2x8x8xbf16>, vector<2x8x8xbf16>, vector<2x8x8xf32> -> vector<2x8x8xf32>
    "tpu.trace_stop"() : () -> ()
    %74 = vector.extract_strided_slice %44 {offsets = [0, 0, 8], sizes = [2, 8, 8], strides = [1, 1, 1]} : vector<2x8x32xf32> to vector<2x8x8xf32>
    %75 = arith.truncf %74 : vector<2x8x8xf32> to vector<2x8x8xbf16>
    %76 = vector.extract_strided_slice %45 {offsets = [0, 0, 8], sizes = [2, 8, 8], strides = [1, 1, 1]} : vector<2x8x32xf32> to vector<2x8x8xf32>
    %77 = arith.truncf %76 : vector<2x8x8xf32> to vector<2x8x8xbf16>
    %78 = vector.extract_strided_slice %46 {offsets = [0, 0, 8], sizes = [2, 8, 8], strides = [1, 1, 1]} : vector<2x8x32xf32> to vector<2x8x8xf32>
    %79 = arith.truncf %78 : vector<2x8x8xf32> to vector<2x8x8xbf16>
    "tpu.trace_start"() <{level = 10 : i32, message = "bqd,bkd->bqk"}> : () -> ()
    %cst_37 = arith.constant dense<0.000000e+00> : vector<2x8x8xf32>
    %80 = tpu.matmul %75, %77, %cst_37 {dimension_numbers = #tpu.dot_dimension_numbers<[2], [2], [1], [1], [0, 0, 0, 1, 1, 1], [0], [0]>} : vector<2x8x8xbf16>, vector<2x8x8xbf16>, vector<2x8x8xf32> -> vector<2x8x8xf32>
    "tpu.trace_stop"() : () -> ()
    %cst_38 = arith.constant 0.353553385 : f32
    %81 = vector.broadcast %cst_38 : f32 to vector<2x8x8xf32>
    %82 = arith.mulf %80, %81 : vector<2x8x8xf32>
    %83 = arith.addf %82, %51 : vector<2x8x8xf32>
    %cst_39 = arith.constant dense<0xFF800000> : vector<2x8xf32>
    %84 = vector.multi_reduction <maximumf>, %83, %cst_39 [2] : vector<2x8x8xf32> to vector<2x8xf32>
    %85 = vector.shape_cast %84 : vector<2x8xf32> to vector<2x8x1xf32>
    %86 = vector.broadcast %85 : vector<2x8x1xf32> to vector<2x8x8xf32>
    %87 = arith.subf %83, %86 : vector<2x8x8xf32>
    %88 = math.exp %87 : vector<2x8x8xf32>
    %cst_40 = arith.constant dense<0.000000e+00> : vector<2x8xf32>
    %89 = vector.multi_reduction <add>, %88, %cst_40 [2] : vector<2x8x8xf32> to vector<2x8xf32>
    %90 = vector.shape_cast %89 : vector<2x8xf32> to vector<2x8x1xf32>
    %91 = tpu.reciprocal %90 {approx = true} : vector<2x8x1xf32> -> vector<2x8x1xf32>
    %92 = vector.broadcast %91 : vector<2x8x1xf32> to vector<2x8x8xf32>
    %93 = arith.mulf %88, %92 : vector<2x8x8xf32>
    %94 = arith.truncf %93 : vector<2x8x8xf32> to vector<2x8x8xbf16>
    "tpu.trace_start"() <{level = 10 : i32, message = "bqk,bkd->bqd"}> : () -> ()
    %cst_41 = arith.constant dense<0.000000e+00> : vector<2x8x8xf32>
    %95 = tpu.matmul %94, %79, %cst_41 {dimension_numbers = #tpu.dot_dimension_numbers<[2], [1], [1], [2], [0, 0, 0, 1, 1, 2], [0], [0]>} : vector<2x8x8xbf16>, vector<2x8x8xbf16>, vector<2x8x8xf32> -> vector<2x8x8xf32>
    "tpu.trace_stop"() : () -> ()
    %96 = vector.extract_strided_slice %44 {offsets = [0, 0, 16], sizes = [2, 8, 8], strides = [1, 1, 1]} : vector<2x8x32xf32> to vector<2x8x8xf32>
    %97 = arith.truncf %96 : vector<2x8x8xf32> to vector<2x8x8xbf16>
    %98 = vector.extract_strided_slice %45 {offsets = [0, 0, 16], sizes = [2, 8, 8], strides = [1, 1, 1]} : vector<2x8x32xf32> to vector<2x8x8xf32>
    %99 = arith.truncf %98 : vector<2x8x8xf32> to vector<2x8x8xbf16>
    %100 = vector.extract_strided_slice %46 {offsets = [0, 0, 16], sizes = [2, 8, 8], strides = [1, 1, 1]} : vector<2x8x32xf32> to vector<2x8x8xf32>
    %101 = arith.truncf %100 : vector<2x8x8xf32> to vector<2x8x8xbf16>
    "tpu.trace_start"() <{level = 10 : i32, message = "bqd,bkd->bqk"}> : () -> ()
    %cst_42 = arith.constant dense<0.000000e+00> : vector<2x8x8xf32>
    %102 = tpu.matmul %97, %99, %cst_42 {dimension_numbers = #tpu.dot_dimension_numbers<[2], [2], [1], [1], [0, 0, 0, 1, 1, 1], [0], [0]>} : vector<2x8x8xbf16>, vector<2x8x8xbf16>, vector<2x8x8xf32> -> vector<2x8x8xf32>
    "tpu.trace_stop"() : () -> ()
    %cst_43 = arith.constant 0.353553385 : f32
    %103 = vector.broadcast %cst_43 : f32 to vector<2x8x8xf32>
    %104 = arith.mulf %102, %103 : vector<2x8x8xf32>
    %105 = arith.addf %104, %51 : vector<2x8x8xf32>
    %cst_44 = arith.constant dense<0xFF800000> : vector<2x8xf32>
    %106 = vector.multi_reduction <maximumf>, %105, %cst_44 [2] : vector<2x8x8xf32> to vector<2x8xf32>
    %107 = vector.shape_cast %106 : vector<2x8xf32> to vector<2x8x1xf32>
    %108 = vector.broadcast %107 : vector<2x8x1xf32> to vector<2x8x8xf32>
    %109 = arith.subf %105, %108 : vector<2x8x8xf32>
    %110 = math.exp %109 : vector<2x8x8xf32>
    %cst_45 = arith.constant dense<0.000000e+00> : vector<2x8xf32>
    %111 = vector.multi_reduction <add>, %110, %cst_45 [2] : vector<2x8x8xf32> to vector<2x8xf32>
    %112 = vector.shape_cast %111 : vector<2x8xf32> to vector<2x8x1xf32>
    %113 = tpu.reciprocal %112 {approx = true} : vector<2x8x1xf32> -> vector<2x8x1xf32>
    %114 = vector.broadcast %113 : vector<2x8x1xf32> to vector<2x8x8xf32>
    %115 = arith.mulf %110, %114 : vector<2x8x8xf32>
    %116 = arith.truncf %115 : vector<2x8x8xf32> to vector<2x8x8xbf16>
    "tpu.trace_start"() <{level = 10 : i32, message = "bqk,bkd->bqd"}> : () -> ()
    %cst_46 = arith.constant dense<0.000000e+00> : vector<2x8x8xf32>
    %117 = tpu.matmul %116, %101, %cst_46 {dimension_numbers = #tpu.dot_dimension_numbers<[2], [1], [1], [2], [0, 0, 0, 1, 1, 2], [0], [0]>} : vector<2x8x8xbf16>, vector<2x8x8xbf16>, vector<2x8x8xf32> -> vector<2x8x8xf32>
    "tpu.trace_stop"() : () -> ()
    %118 = vector.extract_strided_slice %44 {offsets = [0, 0, 24], sizes = [2, 8, 8], strides = [1, 1, 1]} : vector<2x8x32xf32> to vector<2x8x8xf32>
    %119 = arith.truncf %118 : vector<2x8x8xf32> to vector<2x8x8xbf16>
    %120 = vector.extract_strided_slice %45 {offsets = [0, 0, 24], sizes = [2, 8, 8], strides = [1, 1, 1]} : vector<2x8x32xf32> to vector<2x8x8xf32>
    %121 = arith.truncf %120 : vector<2x8x8xf32> to vector<2x8x8xbf16>
    %122 = vector.extract_strided_slice %46 {offsets = [0, 0, 24], sizes = [2, 8, 8], strides = [1, 1, 1]} : vector<2x8x32xf32> to vector<2x8x8xf32>
    %123 = arith.truncf %122 : vector<2x8x8xf32> to vector<2x8x8xbf16>
    "tpu.trace_start"() <{level = 10 : i32, message = "bqd,bkd->bqk"}> : () -> ()
    %cst_47 = arith.constant dense<0.000000e+00> : vector<2x8x8xf32>
    %124 = tpu.matmul %119, %121, %cst_47 {dimension_numbers = #tpu.dot_dimension_numbers<[2], [2], [1], [1], [0, 0, 0, 1, 1, 1], [0], [0]>} : vector<2x8x8xbf16>, vector<2x8x8xbf16>, vector<2x8x8xf32> -> vector<2x8x8xf32>
    "tpu.trace_stop"() : () -> ()
    %cst_48 = arith.constant 0.353553385 : f32
    %125 = vector.broadcast %cst_48 : f32 to vector<2x8x8xf32>
    %126 = arith.mulf %124, %125 : vector<2x8x8xf32>
    %127 = arith.addf %126, %51 : vector<2x8x8xf32>
    %cst_49 = arith.constant dense<0xFF800000> : vector<2x8xf32>
    %128 = vector.multi_reduction <maximumf>, %127, %cst_49 [2] : vector<2x8x8xf32> to vector<2x8xf32>
    %129 = vector.shape_cast %128 : vector<2x8xf32> to vector<2x8x1xf32>
    %130 = vector.broadcast %129 : vector<2x8x1xf32> to vector<2x8x8xf32>
    %131 = arith.subf %127, %130 : vector<2x8x8xf32>
    %132 = math.exp %131 : vector<2x8x8xf32>
    %cst_50 = arith.constant dense<0.000000e+00> : vector<2x8xf32>
    %133 = vector.multi_reduction <add>, %132, %cst_50 [2] : vector<2x8x8xf32> to vector<2x8xf32>
    %134 = vector.shape_cast %133 : vector<2x8xf32> to vector<2x8x1xf32>
    %135 = tpu.reciprocal %134 {approx = true} : vector<2x8x1xf32> -> vector<2x8x1xf32>
    %136 = vector.broadcast %135 : vector<2x8x1xf32> to vector<2x8x8xf32>
    %137 = arith.mulf %132, %136 : vector<2x8x8xf32>
    %138 = arith.truncf %137 : vector<2x8x8xf32> to vector<2x8x8xbf16>
    "tpu.trace_start"() <{level = 10 : i32, message = "bqk,bkd->bqd"}> : () -> ()
    %cst_51 = arith.constant dense<0.000000e+00> : vector<2x8x8xf32>
    %139 = tpu.matmul %138, %123, %cst_51 {dimension_numbers = #tpu.dot_dimension_numbers<[2], [1], [1], [2], [0, 0, 0, 1, 1, 2], [0], [0]>} : vector<2x8x8xbf16>, vector<2x8x8xbf16>, vector<2x8x8xf32> -> vector<2x8x8xf32>
    "tpu.trace_stop"() : () -> ()
    %140 = tpu.concatenate %73, %95, %117, %139 in 2 : vector<2x8x8xf32>, vector<2x8x8xf32>, vector<2x8x8xf32>, vector<2x8x8xf32> -> vector<2x8x32xf32>
    %141 = vector.shape_cast %140 : vector<2x8x32xf32> to vector<16x32xf32>
    %142 = arith.truncf %141 : vector<16x32xf32> to vector<16x32xbf16>
    %cst_52 = arith.constant dense<0.000000e+00> : vector<16x32xf32>
    %143 = tpu.matmul %142, %48, %cst_52 {dimension_numbers = #tpu.dot_dimension_numbers<[1], [0], [0], [1], [0, 0, 1, 1], [], []>} : vector<16x32xbf16>, vector<32x32xbf16>, vector<16x32xf32> -> vector<16x32xf32>
    %144 = vector.broadcast %50 : vector<1x32xf32> to vector<16x32xf32>
    %145 = arith.addf %143, %144 : vector<16x32xf32>
    %146 = vector.shape_cast %145 : vector<16x32xf32> to vector<2x8x32xf32>
    %147 = arith.addf %3, %146 : vector<2x8x32xf32>
    %c0_53 = arith.constant 0 : index
    %c2 = arith.constant 2 : index
    %c0_54 = arith.constant 0 : index
    %148 = vector.load %arg11[%c0_53, %c2, %c0_54] : memref<1x9x32xf32, #tpu.memory_space<vmem>>, vector<1x1x32xf32>
    %149 = vector.shape_cast %148 : vector<1x1x32xf32> to vector<1x32xf32>
    %c0_55 = arith.constant 0 : index
    %c3 = arith.constant 3 : index
    %c0_56 = arith.constant 0 : index
    %150 = vector.load %arg11[%c0_55, %c3, %c0_56] : memref<1x9x32xf32, #tpu.memory_space<vmem>>, vector<1x1x32xf32>
    %151 = vector.shape_cast %150 : vector<1x1x32xf32> to vector<1x32xf32>
    %cst_57 = arith.constant dense<0.000000e+00> : vector<2x8xf32>
    %152 = vector.multi_reduction <add>, %147, %cst_57 [2] : vector<2x8x32xf32> to vector<2x8xf32>
    %153 = vector.shape_cast %152 : vector<2x8xf32> to vector<2x8x1xf32>
    %cst_58 = arith.constant 3.200000e+01 : f32
    %154 = vector.broadcast %cst_58 : f32 to vector<2x8x1xf32>
    %155 = arith.divf %153, %154 : vector<2x8x1xf32>
    %156 = vector.broadcast %155 : vector<2x8x1xf32> to vector<2x8x32xf32>
    %157 = arith.subf %147, %156 : vector<2x8x32xf32>
    %158 = arith.mulf %157, %157 : vector<2x8x32xf32>
    %cst_59 = arith.constant dense<0.000000e+00> : vector<2x8xf32>
    %159 = vector.multi_reduction <add>, %158, %cst_59 [2] : vector<2x8x32xf32> to vector<2x8xf32>
    %160 = vector.shape_cast %159 : vector<2x8xf32> to vector<2x8x1xf32>
    %cst_60 = arith.constant 0.0322580636 : f32
    %161 = vector.broadcast %cst_60 : f32 to vector<2x8x1xf32>
    %162 = arith.mulf %160, %161 : vector<2x8x1xf32>
    %163 = math.sqrt %162 : vector<2x8x1xf32>
    %cst_61 = arith.constant 9.99999997E-7 : f32
    %164 = vector.broadcast %cst_61 : f32 to vector<2x8x1xf32>
    %165 = arith.addf %163, %164 : vector<2x8x1xf32>
    %166 = tpu.reciprocal %165 {approx = true} : vector<2x8x1xf32> -> vector<2x8x1xf32>
    %167 = vector.broadcast %155 : vector<2x8x1xf32> to vector<2x8x32xf32>
    %168 = arith.subf %147, %167 : vector<2x8x32xf32>
    %169 = vector.shape_cast %149 : vector<1x32xf32> to vector<1x1x32xf32>
    %170 = vector.broadcast %169 : vector<1x1x32xf32> to vector<2x8x32xf32>
    %171 = arith.mulf %170, %168 : vector<2x8x32xf32>
    %172 = vector.broadcast %166 : vector<2x8x1xf32> to vector<2x8x32xf32>
    %173 = arith.mulf %171, %172 : vector<2x8x32xf32>
    %174 = vector.shape_cast %151 : vector<1x32xf32> to vector<1x1x32xf32>
    %175 = vector.broadcast %174 : vector<1x1x32xf32> to vector<2x8x32xf32>
    %176 = arith.addf %173, %175 : vector<2x8x32xf32>
    %c0_62 = arith.constant 0 : index
    %c1_63 = arith.constant 1 : index
    %c0_64 = arith.constant 0 : index
    %c0_65 = arith.constant 0 : index
    %177 = vector.load %arg6[%c0_62, %c1_63, %c0_64, %c0_65] : memref<1x2x32x96xbf16, #tpu.memory_space<vmem>>, vector<1x1x32x96xbf16>
    %178 = vector.shape_cast %177 : vector<1x1x32x96xbf16> to vector<32x96xbf16>
    %c0_66 = arith.constant 0 : index
    %c1_67 = arith.constant 1 : index
    %c0_68 = arith.constant 0 : index
    %179 = vector.load %arg10[%c0_66, %c1_67, %c0_68] : memref<1x2x96xf32, #tpu.memory_space<vmem>>, vector<1x1x96xf32>
    %180 = vector.shape_cast %179 : vector<1x1x96xf32> to vector<1x96xf32>
    %181 = vector.shape_cast %176 : vector<2x8x32xf32> to vector<16x32xf32>
    %182 = arith.truncf %181 : vector<16x32xf32> to vector<16x32xbf16>
    %183 = vector.extract_strided_slice %178 {offsets = [0, 0], sizes = [32, 32], strides = [1, 1]} : vector<32x96xbf16> to vector<32x32xbf16>
    %cst_69 = arith.constant dense<0.000000e+00> : vector<16x32xf32>
    %184 = tpu.matmul %182, %183, %cst_69 {dimension_numbers = #tpu.dot_dimension_numbers<[1], [0], [0], [1], [0, 0, 1, 1], [], []>} : vector<16x32xbf16>, vector<32x32xbf16>, vector<16x32xf32> -> vector<16x32xf32>
    %185 = vector.extract_strided_slice %180 {offsets = [0, 0], sizes = [1, 32], strides = [1, 1]} : vector<1x96xf32> to vector<1x32xf32>
    %186 = vector.broadcast %185 : vector<1x32xf32> to vector<16x32xf32>
    %187 = arith.addf %184, %186 : vector<16x32xf32>
    %188 = vector.shape_cast %187 : vector<16x32xf32> to vector<2x8x32xf32>
    %189 = vector.shape_cast %4 : vector<2x8x32xf32> to vector<16x32xf32>
    %190 = arith.truncf %189 : vector<16x32xf32> to vector<16x32xbf16>
    %191 = vector.extract_strided_slice %178 {offsets = [0, 32], sizes = [32, 64], strides = [1, 1]} : vector<32x96xbf16> to vector<32x64xbf16>
    %cst_70 = arith.constant dense<0.000000e+00> : vector<16x64xf32>
    %192 = tpu.matmul %190, %191, %cst_70 {dimension_numbers = #tpu.dot_dimension_numbers<[1], [0], [0], [1], [0, 0, 1, 1], [], []>} : vector<16x32xbf16>, vector<32x64xbf16>, vector<16x64xf32> -> vector<16x64xf32>
    %193 = vector.extract_strided_slice %180 {offsets = [0, 32], sizes = [1, 64], strides = [1, 1]} : vector<1x96xf32> to vector<1x64xf32>
    %194 = vector.broadcast %193 : vector<1x64xf32> to vector<16x64xf32>
    %195 = arith.addf %192, %194 : vector<16x64xf32>
    %196 = vector.shape_cast %195 : vector<16x64xf32> to vector<2x8x64xf32>
    %197 = vector.extract_strided_slice %196 {offsets = [0, 0, 0], sizes = [2, 8, 32], strides = [1, 1, 1]} : vector<2x8x64xf32> to vector<2x8x32xf32>
    %198 = vector.extract_strided_slice %196 {offsets = [0, 0, 32], sizes = [2, 8, 32], strides = [1, 1, 1]} : vector<2x8x64xf32> to vector<2x8x32xf32>
    %c0_71 = arith.constant 0 : index
    %c1_72 = arith.constant 1 : index
    %c0_73 = arith.constant 0 : index
    %c0_74 = arith.constant 0 : index
    %199 = vector.load %arg7[%c0_71, %c1_72, %c0_73, %c0_74] : memref<1x2x32x32xbf16, #tpu.memory_space<vmem>>, vector<1x1x32x32xbf16>
    %200 = vector.shape_cast %199 : vector<1x1x32x32xbf16> to vector<32x32xbf16>
    %c0_75 = arith.constant 0 : index
    %c7 = arith.constant 7 : index
    %c0_76 = arith.constant 0 : index
    %201 = vector.load %arg11[%c0_75, %c7, %c0_76] : memref<1x9x32xf32, #tpu.memory_space<vmem>>, vector<1x1x32xf32>
    %202 = vector.shape_cast %201 : vector<1x1x32xf32> to vector<1x32xf32>
    %c0_77 = arith.constant 0 : index
    %c0_78 = arith.constant 0 : index
    %c0_79 = arith.constant 0 : index
    %203 = vector.load %arg4[%c0_77, %c0_78, %c0_79] : memref<2x1x8xf32, #tpu.memory_space<vmem>>, vector<2x1x8xf32>
    %204 = vector.extract_strided_slice %188 {offsets = [0, 0, 0], sizes = [2, 8, 8], strides = [1, 1, 1]} : vector<2x8x32xf32> to vector<2x8x8xf32>
    %205 = arith.truncf %204 : vector<2x8x8xf32> to vector<2x8x8xbf16>
    %206 = vector.extract_strided_slice %197 {offsets = [0, 0, 0], sizes = [2, 8, 8], strides = [1, 1, 1]} : vector<2x8x32xf32> to vector<2x8x8xf32>
    %207 = arith.truncf %206 : vector<2x8x8xf32> to vector<2x8x8xbf16>
    %208 = vector.extract_strided_slice %198 {offsets = [0, 0, 0], sizes = [2, 8, 8], strides = [1, 1, 1]} : vector<2x8x32xf32> to vector<2x8x8xf32>
    %209 = arith.truncf %208 : vector<2x8x8xf32> to vector<2x8x8xbf16>
    "tpu.trace_start"() <{level = 10 : i32, message = "bqd,bkd->bqk"}> : () -> ()
    %cst_80 = arith.constant dense<0.000000e+00> : vector<2x8x8xf32>
    %210 = tpu.matmul %205, %207, %cst_80 {dimension_numbers = #tpu.dot_dimension_numbers<[2], [2], [1], [1], [0, 0, 0, 1, 1, 1], [0], [0]>} : vector<2x8x8xbf16>, vector<2x8x8xbf16>, vector<2x8x8xf32> -> vector<2x8x8xf32>
    "tpu.trace_stop"() : () -> ()
    %cst_81 = arith.constant 0.353553385 : f32
    %211 = vector.broadcast %cst_81 : f32 to vector<2x8x8xf32>
    %212 = arith.mulf %210, %211 : vector<2x8x8xf32>
    %213 = vector.broadcast %203 : vector<2x1x8xf32> to vector<2x8x8xf32>
    %214 = arith.addf %212, %213 : vector<2x8x8xf32>
    %cst_82 = arith.constant dense<0xFF800000> : vector<2x8xf32>
    %215 = vector.multi_reduction <maximumf>, %214, %cst_82 [2] : vector<2x8x8xf32> to vector<2x8xf32>
    %216 = vector.shape_cast %215 : vector<2x8xf32> to vector<2x8x1xf32>
    %217 = vector.broadcast %216 : vector<2x8x1xf32> to vector<2x8x8xf32>
    %218 = arith.subf %214, %217 : vector<2x8x8xf32>
    %219 = math.exp %218 : vector<2x8x8xf32>
    %cst_83 = arith.constant dense<0.000000e+00> : vector<2x8xf32>
    %220 = vector.multi_reduction <add>, %219, %cst_83 [2] : vector<2x8x8xf32> to vector<2x8xf32>
    %221 = vector.shape_cast %220 : vector<2x8xf32> to vector<2x8x1xf32>
    %222 = tpu.reciprocal %221 {approx = true} : vector<2x8x1xf32> -> vector<2x8x1xf32>
    %223 = vector.broadcast %222 : vector<2x8x1xf32> to vector<2x8x8xf32>
    %224 = arith.mulf %219, %223 : vector<2x8x8xf32>
    %225 = arith.truncf %224 : vector<2x8x8xf32> to vector<2x8x8xbf16>
    "tpu.trace_start"() <{level = 10 : i32, message = "bqk,bkd->bqd"}> : () -> ()
    %cst_84 = arith.constant dense<0.000000e+00> : vector<2x8x8xf32>
    %226 = tpu.matmul %225, %209, %cst_84 {dimension_numbers = #tpu.dot_dimension_numbers<[2], [1], [1], [2], [0, 0, 0, 1, 1, 2], [0], [0]>} : vector<2x8x8xbf16>, vector<2x8x8xbf16>, vector<2x8x8xf32> -> vector<2x8x8xf32>
    "tpu.trace_stop"() : () -> ()
    %227 = vector.extract_strided_slice %188 {offsets = [0, 0, 8], sizes = [2, 8, 8], strides = [1, 1, 1]} : vector<2x8x32xf32> to vector<2x8x8xf32>
    %228 = arith.truncf %227 : vector<2x8x8xf32> to vector<2x8x8xbf16>
    %229 = vector.extract_strided_slice %197 {offsets = [0, 0, 8], sizes = [2, 8, 8], strides = [1, 1, 1]} : vector<2x8x32xf32> to vector<2x8x8xf32>
    %230 = arith.truncf %229 : vector<2x8x8xf32> to vector<2x8x8xbf16>
    %231 = vector.extract_strided_slice %198 {offsets = [0, 0, 8], sizes = [2, 8, 8], strides = [1, 1, 1]} : vector<2x8x32xf32> to vector<2x8x8xf32>
    %232 = arith.truncf %231 : vector<2x8x8xf32> to vector<2x8x8xbf16>
    "tpu.trace_start"() <{level = 10 : i32, message = "bqd,bkd->bqk"}> : () -> ()
    %cst_85 = arith.constant dense<0.000000e+00> : vector<2x8x8xf32>
    %233 = tpu.matmul %228, %230, %cst_85 {dimension_numbers = #tpu.dot_dimension_numbers<[2], [2], [1], [1], [0, 0, 0, 1, 1, 1], [0], [0]>} : vector<2x8x8xbf16>, vector<2x8x8xbf16>, vector<2x8x8xf32> -> vector<2x8x8xf32>
    "tpu.trace_stop"() : () -> ()
    %cst_86 = arith.constant 0.353553385 : f32
    %234 = vector.broadcast %cst_86 : f32 to vector<2x8x8xf32>
    %235 = arith.mulf %233, %234 : vector<2x8x8xf32>
    %236 = vector.broadcast %203 : vector<2x1x8xf32> to vector<2x8x8xf32>
    %237 = arith.addf %235, %236 : vector<2x8x8xf32>
    %cst_87 = arith.constant dense<0xFF800000> : vector<2x8xf32>
    %238 = vector.multi_reduction <maximumf>, %237, %cst_87 [2] : vector<2x8x8xf32> to vector<2x8xf32>
    %239 = vector.shape_cast %238 : vector<2x8xf32> to vector<2x8x1xf32>
    %240 = vector.broadcast %239 : vector<2x8x1xf32> to vector<2x8x8xf32>
    %241 = arith.subf %237, %240 : vector<2x8x8xf32>
    %242 = math.exp %241 : vector<2x8x8xf32>
    %cst_88 = arith.constant dense<0.000000e+00> : vector<2x8xf32>
    %243 = vector.multi_reduction <add>, %242, %cst_88 [2] : vector<2x8x8xf32> to vector<2x8xf32>
    %244 = vector.shape_cast %243 : vector<2x8xf32> to vector<2x8x1xf32>
    %245 = tpu.reciprocal %244 {approx = true} : vector<2x8x1xf32> -> vector<2x8x1xf32>
    %246 = vector.broadcast %245 : vector<2x8x1xf32> to vector<2x8x8xf32>
    %247 = arith.mulf %242, %246 : vector<2x8x8xf32>
    %248 = arith.truncf %247 : vector<2x8x8xf32> to vector<2x8x8xbf16>
    "tpu.trace_start"() <{level = 10 : i32, message = "bqk,bkd->bqd"}> : () -> ()
    %cst_89 = arith.constant dense<0.000000e+00> : vector<2x8x8xf32>
    %249 = tpu.matmul %248, %232, %cst_89 {dimension_numbers = #tpu.dot_dimension_numbers<[2], [1], [1], [2], [0, 0, 0, 1, 1, 2], [0], [0]>} : vector<2x8x8xbf16>, vector<2x8x8xbf16>, vector<2x8x8xf32> -> vector<2x8x8xf32>
    "tpu.trace_stop"() : () -> ()
    %250 = vector.extract_strided_slice %188 {offsets = [0, 0, 16], sizes = [2, 8, 8], strides = [1, 1, 1]} : vector<2x8x32xf32> to vector<2x8x8xf32>
    %251 = arith.truncf %250 : vector<2x8x8xf32> to vector<2x8x8xbf16>
    %252 = vector.extract_strided_slice %197 {offsets = [0, 0, 16], sizes = [2, 8, 8], strides = [1, 1, 1]} : vector<2x8x32xf32> to vector<2x8x8xf32>
    %253 = arith.truncf %252 : vector<2x8x8xf32> to vector<2x8x8xbf16>
    %254 = vector.extract_strided_slice %198 {offsets = [0, 0, 16], sizes = [2, 8, 8], strides = [1, 1, 1]} : vector<2x8x32xf32> to vector<2x8x8xf32>
    %255 = arith.truncf %254 : vector<2x8x8xf32> to vector<2x8x8xbf16>
    "tpu.trace_start"() <{level = 10 : i32, message = "bqd,bkd->bqk"}> : () -> ()
    %cst_90 = arith.constant dense<0.000000e+00> : vector<2x8x8xf32>
    %256 = tpu.matmul %251, %253, %cst_90 {dimension_numbers = #tpu.dot_dimension_numbers<[2], [2], [1], [1], [0, 0, 0, 1, 1, 1], [0], [0]>} : vector<2x8x8xbf16>, vector<2x8x8xbf16>, vector<2x8x8xf32> -> vector<2x8x8xf32>
    "tpu.trace_stop"() : () -> ()
    %cst_91 = arith.constant 0.353553385 : f32
    %257 = vector.broadcast %cst_91 : f32 to vector<2x8x8xf32>
    %258 = arith.mulf %256, %257 : vector<2x8x8xf32>
    %259 = vector.broadcast %203 : vector<2x1x8xf32> to vector<2x8x8xf32>
    %260 = arith.addf %258, %259 : vector<2x8x8xf32>
    %cst_92 = arith.constant dense<0xFF800000> : vector<2x8xf32>
    %261 = vector.multi_reduction <maximumf>, %260, %cst_92 [2] : vector<2x8x8xf32> to vector<2x8xf32>
    %262 = vector.shape_cast %261 : vector<2x8xf32> to vector<2x8x1xf32>
    %263 = vector.broadcast %262 : vector<2x8x1xf32> to vector<2x8x8xf32>
    %264 = arith.subf %260, %263 : vector<2x8x8xf32>
    %265 = math.exp %264 : vector<2x8x8xf32>
    %cst_93 = arith.constant dense<0.000000e+00> : vector<2x8xf32>
    %266 = vector.multi_reduction <add>, %265, %cst_93 [2] : vector<2x8x8xf32> to vector<2x8xf32>
    %267 = vector.shape_cast %266 : vector<2x8xf32> to vector<2x8x1xf32>
    %268 = tpu.reciprocal %267 {approx = true} : vector<2x8x1xf32> -> vector<2x8x1xf32>
    %269 = vector.broadcast %268 : vector<2x8x1xf32> to vector<2x8x8xf32>
    %270 = arith.mulf %265, %269 : vector<2x8x8xf32>
    %271 = arith.truncf %270 : vector<2x8x8xf32> to vector<2x8x8xbf16>
    "tpu.trace_start"() <{level = 10 : i32, message = "bqk,bkd->bqd"}> : () -> ()
    %cst_94 = arith.constant dense<0.000000e+00> : vector<2x8x8xf32>
    %272 = tpu.matmul %271, %255, %cst_94 {dimension_numbers = #tpu.dot_dimension_numbers<[2], [1], [1], [2], [0, 0, 0, 1, 1, 2], [0], [0]>} : vector<2x8x8xbf16>, vector<2x8x8xbf16>, vector<2x8x8xf32> -> vector<2x8x8xf32>
    "tpu.trace_stop"() : () -> ()
    %273 = vector.extract_strided_slice %188 {offsets = [0, 0, 24], sizes = [2, 8, 8], strides = [1, 1, 1]} : vector<2x8x32xf32> to vector<2x8x8xf32>
    %274 = arith.truncf %273 : vector<2x8x8xf32> to vector<2x8x8xbf16>
    %275 = vector.extract_strided_slice %197 {offsets = [0, 0, 24], sizes = [2, 8, 8], strides = [1, 1, 1]} : vector<2x8x32xf32> to vector<2x8x8xf32>
    %276 = arith.truncf %275 : vector<2x8x8xf32> to vector<2x8x8xbf16>
    %277 = vector.extract_strided_slice %198 {offsets = [0, 0, 24], sizes = [2, 8, 8], strides = [1, 1, 1]} : vector<2x8x32xf32> to vector<2x8x8xf32>
    %278 = arith.truncf %277 : vector<2x8x8xf32> to vector<2x8x8xbf16>
    "tpu.trace_start"() <{level = 10 : i32, message = "bqd,bkd->bqk"}> : () -> ()
    %cst_95 = arith.constant dense<0.000000e+00> : vector<2x8x8xf32>
    %279 = tpu.matmul %274, %276, %cst_95 {dimension_numbers = #tpu.dot_dimension_numbers<[2], [2], [1], [1], [0, 0, 0, 1, 1, 1], [0], [0]>} : vector<2x8x8xbf16>, vector<2x8x8xbf16>, vector<2x8x8xf32> -> vector<2x8x8xf32>
    "tpu.trace_stop"() : () -> ()
    %cst_96 = arith.constant 0.353553385 : f32
    %280 = vector.broadcast %cst_96 : f32 to vector<2x8x8xf32>
    %281 = arith.mulf %279, %280 : vector<2x8x8xf32>
    %282 = vector.broadcast %203 : vector<2x1x8xf32> to vector<2x8x8xf32>
    %283 = arith.addf %281, %282 : vector<2x8x8xf32>
    %cst_97 = arith.constant dense<0xFF800000> : vector<2x8xf32>
    %284 = vector.multi_reduction <maximumf>, %283, %cst_97 [2] : vector<2x8x8xf32> to vector<2x8xf32>
    %285 = vector.shape_cast %284 : vector<2x8xf32> to vector<2x8x1xf32>
    %286 = vector.broadcast %285 : vector<2x8x1xf32> to vector<2x8x8xf32>
    %287 = arith.subf %283, %286 : vector<2x8x8xf32>
    %288 = math.exp %287 : vector<2x8x8xf32>
    %cst_98 = arith.constant dense<0.000000e+00> : vector<2x8xf32>
    %289 = vector.multi_reduction <add>, %288, %cst_98 [2] : vector<2x8x8xf32> to vector<2x8xf32>
    %290 = vector.shape_cast %289 : vector<2x8xf32> to vector<2x8x1xf32>
    %291 = tpu.reciprocal %290 {approx = true} : vector<2x8x1xf32> -> vector<2x8x1xf32>
    %292 = vector.broadcast %291 : vector<2x8x1xf32> to vector<2x8x8xf32>
    %293 = arith.mulf %288, %292 : vector<2x8x8xf32>
    %294 = arith.truncf %293 : vector<2x8x8xf32> to vector<2x8x8xbf16>
    "tpu.trace_start"() <{level = 10 : i32, message = "bqk,bkd->bqd"}> : () -> ()
    %cst_99 = arith.constant dense<0.000000e+00> : vector<2x8x8xf32>
    %295 = tpu.matmul %294, %278, %cst_99 {dimension_numbers = #tpu.dot_dimension_numbers<[2], [1], [1], [2], [0, 0, 0, 1, 1, 2], [0], [0]>} : vector<2x8x8xbf16>, vector<2x8x8xbf16>, vector<2x8x8xf32> -> vector<2x8x8xf32>
    "tpu.trace_stop"() : () -> ()
    %296 = tpu.concatenate %226, %249, %272, %295 in 2 : vector<2x8x8xf32>, vector<2x8x8xf32>, vector<2x8x8xf32>, vector<2x8x8xf32> -> vector<2x8x32xf32>
    %297 = vector.shape_cast %296 : vector<2x8x32xf32> to vector<16x32xf32>
    %298 = arith.truncf %297 : vector<16x32xf32> to vector<16x32xbf16>
    %cst_100 = arith.constant dense<0.000000e+00> : vector<16x32xf32>
    %299 = tpu.matmul %298, %200, %cst_100 {dimension_numbers = #tpu.dot_dimension_numbers<[1], [0], [0], [1], [0, 0, 1, 1], [], []>} : vector<16x32xbf16>, vector<32x32xbf16>, vector<16x32xf32> -> vector<16x32xf32>
    %300 = vector.broadcast %202 : vector<1x32xf32> to vector<16x32xf32>
    %301 = arith.addf %299, %300 : vector<16x32xf32>
    %302 = vector.shape_cast %301 : vector<16x32xf32> to vector<2x8x32xf32>
    %303 = arith.addf %147, %302 : vector<2x8x32xf32>
    %304 = tpu.iota {dimensions = array<i32: 1>} : vector<1x8x1xi32>
    %c0_i32_101 = arith.constant 0 : i32
    %305 = vector.broadcast %c0_i32_101 : i32 to vector<1x8x1xi32>
    %306 = arith.cmpi ne, %304, %305 : vector<1x8x1xi32>
    %307 = arith.extui %306 : vector<1x8x1xi1> to vector<1x8x1xi32>
    %308 = arith.sitofp %307 : vector<1x8x1xi32> to vector<1x8x1xf32>
    %c7_i32 = arith.constant 7 : i32
    %309 = vector.broadcast %c7_i32 : i32 to vector<1x8x1xi32>
    %310 = arith.cmpi ne, %304, %309 : vector<1x8x1xi32>
    %311 = arith.extui %310 : vector<1x8x1xi1> to vector<1x8x1xi32>
    %312 = arith.sitofp %311 : vector<1x8x1xi32> to vector<1x8x1xf32>
    %c0_102 = arith.constant 0 : index
    %c4 = arith.constant 4 : index
    %c0_103 = arith.constant 0 : index
    %313 = vector.load %arg11[%c0_102, %c4, %c0_103] : memref<1x9x32xf32, #tpu.memory_space<vmem>>, vector<1x1x32xf32>
    %314 = vector.shape_cast %313 : vector<1x1x32xf32> to vector<1x32xf32>
    %c0_104 = arith.constant 0 : index
    %c5 = arith.constant 5 : index
    %c0_105 = arith.constant 0 : index
    %315 = vector.load %arg11[%c0_104, %c5, %c0_105] : memref<1x9x32xf32, #tpu.memory_space<vmem>>, vector<1x1x32xf32>
    %316 = vector.shape_cast %315 : vector<1x1x32xf32> to vector<1x32xf32>
    %cst_106 = arith.constant dense<0.000000e+00> : vector<2x8xf32>
    %317 = vector.multi_reduction <add>, %303, %cst_106 [2] : vector<2x8x32xf32> to vector<2x8xf32>
    %318 = vector.shape_cast %317 : vector<2x8xf32> to vector<2x8x1xf32>
    %cst_107 = arith.constant 3.200000e+01 : f32
    %319 = vector.broadcast %cst_107 : f32 to vector<2x8x1xf32>
    %320 = arith.divf %318, %319 : vector<2x8x1xf32>
    %321 = vector.broadcast %320 : vector<2x8x1xf32> to vector<2x8x32xf32>
    %322 = arith.subf %303, %321 : vector<2x8x32xf32>
    %323 = arith.mulf %322, %322 : vector<2x8x32xf32>
    %cst_108 = arith.constant dense<0.000000e+00> : vector<2x8xf32>
    %324 = vector.multi_reduction <add>, %323, %cst_108 [2] : vector<2x8x32xf32> to vector<2x8xf32>
    %325 = vector.shape_cast %324 : vector<2x8xf32> to vector<2x8x1xf32>
    %cst_109 = arith.constant 0.0322580636 : f32
    %326 = vector.broadcast %cst_109 : f32 to vector<2x8x1xf32>
    %327 = arith.mulf %325, %326 : vector<2x8x1xf32>
    %328 = math.sqrt %327 : vector<2x8x1xf32>
    %cst_110 = arith.constant 9.99999997E-7 : f32
    %329 = vector.broadcast %cst_110 : f32 to vector<2x8x1xf32>
    %330 = arith.addf %328, %329 : vector<2x8x1xf32>
    %331 = tpu.reciprocal %330 {approx = true} : vector<2x8x1xf32> -> vector<2x8x1xf32>
    %332 = vector.broadcast %320 : vector<2x8x1xf32> to vector<2x8x32xf32>
    %333 = arith.subf %303, %332 : vector<2x8x32xf32>
    %334 = vector.shape_cast %314 : vector<1x32xf32> to vector<1x1x32xf32>
    %335 = vector.broadcast %334 : vector<1x1x32xf32> to vector<2x8x32xf32>
    %336 = arith.mulf %335, %333 : vector<2x8x32xf32>
    %337 = vector.broadcast %331 : vector<2x8x1xf32> to vector<2x8x32xf32>
    %338 = arith.mulf %336, %337 : vector<2x8x32xf32>
    %339 = vector.shape_cast %316 : vector<1x32xf32> to vector<1x1x32xf32>
    %340 = vector.broadcast %339 : vector<1x1x32xf32> to vector<2x8x32xf32>
    %341 = arith.addf %338, %340 : vector<2x8x32xf32>
    %c0_111 = arith.constant 0 : index
    %c0_112 = arith.constant 0 : index
    %c0_113 = arith.constant 0 : index
    %342 = vector.load %arg8[%c0_111, %c0_112, %c0_113] : memref<1x96x64xbf16, #tpu.memory_space<vmem>>, vector<1x96x64xbf16>
    %343 = vector.shape_cast %342 : vector<1x96x64xbf16> to vector<96x64xbf16>
    %c0_114 = arith.constant 0 : index
    %c0_115 = arith.constant 0 : index
    %c0_116 = arith.constant 0 : index
    %344 = vector.load %arg12[%c0_114, %c0_115, %c0_116] : memref<1x1x64xf32, #tpu.memory_space<vmem>>, vector<1x1x64xf32>
    %345 = vector.shape_cast %344 : vector<1x1x64xf32> to vector<1x64xf32>
    %346 = vector.shape_cast %341 : vector<2x8x32xf32> to vector<16x32xf32>
    %c1_i32 = arith.constant 1 : i32
    %347 = tpu.dynamic_rotate %346 by %c1_i32 dim 0 : vector<16x32xf32>, i32 -> vector<16x32xf32>
    %348 = vector.shape_cast %347 : vector<16x32xf32> to vector<2x8x32xf32>
    %349 = vector.broadcast %308 : vector<1x8x1xf32> to vector<2x8x32xf32>
    %350 = arith.mulf %348, %349 : vector<2x8x32xf32>
    %c15_i32 = arith.constant 15 : i32
    %351 = tpu.dynamic_rotate %346 by %c15_i32 dim 0 : vector<16x32xf32>, i32 -> vector<16x32xf32>
    %352 = vector.shape_cast %351 : vector<16x32xf32> to vector<2x8x32xf32>
    %353 = vector.broadcast %312 : vector<1x8x1xf32> to vector<2x8x32xf32>
    %354 = arith.mulf %352, %353 : vector<2x8x32xf32>
    %355 = tpu.concatenate %350, %341, %354 in 2 : vector<2x8x32xf32>, vector<2x8x32xf32>, vector<2x8x32xf32> -> vector<2x8x96xf32>
    %356 = vector.shape_cast %355 : vector<2x8x96xf32> to vector<16x96xf32>
    %357 = arith.truncf %356 : vector<16x96xf32> to vector<16x96xbf16>
    %cst_117 = arith.constant dense<0.000000e+00> : vector<16x64xf32>
    %358 = tpu.matmul %357, %343, %cst_117 {dimension_numbers = #tpu.dot_dimension_numbers<[1], [0], [0], [1], [0, 0, 1, 1], [], []>} : vector<16x96xbf16>, vector<96x64xbf16>, vector<16x64xf32> -> vector<16x64xf32>
    %359 = vector.broadcast %345 : vector<1x64xf32> to vector<16x64xf32>
    %360 = arith.addf %358, %359 : vector<16x64xf32>
    %cst_118 = arith.constant 0.000000e+00 : f32
    %361 = vector.broadcast %cst_118 : f32 to vector<16x64xf32>
    %362 = arith.maximumf %360, %361 : vector<16x64xf32>
    %363 = vector.shape_cast %362 : vector<16x64xf32> to vector<2x8x64xf32>
    %c0_119 = arith.constant 0 : index
    %c0_120 = arith.constant 0 : index
    %c0_121 = arith.constant 0 : index
    %364 = vector.load %arg9[%c0_119, %c0_120, %c0_121] : memref<1x192x32xbf16, #tpu.memory_space<vmem>>, vector<1x192x32xbf16>
    %365 = vector.shape_cast %364 : vector<1x192x32xbf16> to vector<192x32xbf16>
    %c0_122 = arith.constant 0 : index
    %c8 = arith.constant 8 : index
    %c0_123 = arith.constant 0 : index
    %366 = vector.load %arg11[%c0_122, %c8, %c0_123] : memref<1x9x32xf32, #tpu.memory_space<vmem>>, vector<1x1x32xf32>
    %367 = vector.shape_cast %366 : vector<1x1x32xf32> to vector<1x32xf32>
    %368 = vector.shape_cast %363 : vector<2x8x64xf32> to vector<16x64xf32>
    %c1_i32_124 = arith.constant 1 : i32
    %369 = tpu.dynamic_rotate %368 by %c1_i32_124 dim 0 : vector<16x64xf32>, i32 -> vector<16x64xf32>
    %370 = vector.shape_cast %369 : vector<16x64xf32> to vector<2x8x64xf32>
    %371 = vector.broadcast %308 : vector<1x8x1xf32> to vector<2x8x64xf32>
    %372 = arith.mulf %370, %371 : vector<2x8x64xf32>
    %c15_i32_125 = arith.constant 15 : i32
    %373 = tpu.dynamic_rotate %368 by %c15_i32_125 dim 0 : vector<16x64xf32>, i32 -> vector<16x64xf32>
    %374 = vector.shape_cast %373 : vector<16x64xf32> to vector<2x8x64xf32>
    %375 = vector.broadcast %312 : vector<1x8x1xf32> to vector<2x8x64xf32>
    %376 = arith.mulf %374, %375 : vector<2x8x64xf32>
    %377 = tpu.concatenate %372, %363, %376 in 2 : vector<2x8x64xf32>, vector<2x8x64xf32>, vector<2x8x64xf32> -> vector<2x8x192xf32>
    %378 = vector.shape_cast %377 : vector<2x8x192xf32> to vector<16x192xf32>
    %379 = arith.truncf %378 : vector<16x192xf32> to vector<16x192xbf16>
    %cst_126 = arith.constant dense<0.000000e+00> : vector<16x32xf32>
    %380 = tpu.matmul %379, %365, %cst_126 {dimension_numbers = #tpu.dot_dimension_numbers<[1], [0], [0], [1], [0, 0, 1, 1], [], []>} : vector<16x192xbf16>, vector<192x32xbf16>, vector<16x32xf32> -> vector<16x32xf32>
    %381 = vector.broadcast %367 : vector<1x32xf32> to vector<16x32xf32>
    %382 = arith.addf %380, %381 : vector<16x32xf32>
    %383 = vector.shape_cast %382 : vector<16x32xf32> to vector<2x8x32xf32>
    %384 = arith.addf %303, %383 : vector<2x8x32xf32>
    %c1_i32_127 = arith.constant 1 : i32
    %385 = arith.cmpi slt, %arg0, %c1_i32_127 : i32
    %386 = arith.extui %385 : i1 to i32
    %c0_i32_128 = arith.constant 0 : i32
    %387 = arith.cmpi ne, %386, %c0_i32_128 : i32
    scf.if %387 {
      %c0_131 = arith.constant 0 : index
      %c0_132 = arith.constant 0 : index
      %c0_133 = arith.constant 0 : index
      %391 = vector.load %arg13[%c0_131, %c0_132, %c0_133] : memref<2x8x32xf32, #tpu.memory_space<vmem>>, vector<2x8x32xf32>
      tpu.vector_store %arg13[%c0_131, %c0_132, %c0_133], %384 {strides = array<i32>} : memref<2x8x32xf32, #tpu.memory_space<vmem>>, vector<2x8x32xf32>,
    } else {
    }
    %c1_i32_129 = arith.constant 1 : i32
    %388 = arith.cmpi eq, %arg0, %c1_i32_129 : i32
    %389 = arith.extui %388 : i1 to i32
    %c0_i32_130 = arith.constant 0 : i32
    %390 = arith.cmpi ne, %389, %c0_i32_130 : i32
    scf.if %390 {
      %c0_131 = arith.constant 0 : index
      %c0_132 = arith.constant 0 : index
      %391 = vector.load %arg5[%c0_131, %c0_132] : memref<2x32xf32, #tpu.memory_space<vmem>>, vector<1x32xf32>
      %c1_133 = arith.constant 1 : index
      %c0_134 = arith.constant 0 : index
      %392 = vector.load %arg5[%c1_133, %c0_134] : memref<2x32xf32, #tpu.memory_space<vmem>>, vector<1x32xf32>
      %cst_135 = arith.constant dense<0.000000e+00> : vector<2x8xf32>
      %393 = vector.multi_reduction <add>, %384, %cst_135 [2] : vector<2x8x32xf32> to vector<2x8xf32>
      %394 = vector.shape_cast %393 : vector<2x8xf32> to vector<2x8x1xf32>
      %cst_136 = arith.constant 3.200000e+01 : f32
      %395 = vector.broadcast %cst_136 : f32 to vector<2x8x1xf32>
      %396 = arith.divf %394, %395 : vector<2x8x1xf32>
      %397 = vector.broadcast %396 : vector<2x8x1xf32> to vector<2x8x32xf32>
      %398 = arith.subf %384, %397 : vector<2x8x32xf32>
      %399 = arith.mulf %398, %398 : vector<2x8x32xf32>
      %cst_137 = arith.constant dense<0.000000e+00> : vector<2x8xf32>
      %400 = vector.multi_reduction <add>, %399, %cst_137 [2] : vector<2x8x32xf32> to vector<2x8xf32>
      %401 = vector.shape_cast %400 : vector<2x8xf32> to vector<2x8x1xf32>
      %cst_138 = arith.constant 0.0322580636 : f32
      %402 = vector.broadcast %cst_138 : f32 to vector<2x8x1xf32>
      %403 = arith.mulf %401, %402 : vector<2x8x1xf32>
      %404 = math.sqrt %403 : vector<2x8x1xf32>
      %cst_139 = arith.constant 9.99999997E-7 : f32
      %405 = vector.broadcast %cst_139 : f32 to vector<2x8x1xf32>
      %406 = arith.addf %404, %405 : vector<2x8x1xf32>
      %407 = tpu.reciprocal %406 {approx = true} : vector<2x8x1xf32> -> vector<2x8x1xf32>
      %408 = vector.broadcast %396 : vector<2x8x1xf32> to vector<2x8x32xf32>
      %409 = arith.subf %384, %408 : vector<2x8x32xf32>
      %410 = vector.shape_cast %391 : vector<1x32xf32> to vector<1x1x32xf32>
      %411 = vector.broadcast %410 : vector<1x1x32xf32> to vector<2x8x32xf32>
      %412 = arith.mulf %411, %409 : vector<2x8x32xf32>
      %413 = vector.broadcast %407 : vector<2x8x1xf32> to vector<2x8x32xf32>
      %414 = arith.mulf %412, %413 : vector<2x8x32xf32>
      %415 = vector.shape_cast %392 : vector<1x32xf32> to vector<1x1x32xf32>
      %416 = vector.broadcast %415 : vector<1x1x32xf32> to vector<2x8x32xf32>
      %417 = arith.addf %414, %416 : vector<2x8x32xf32>
      %c0_140 = arith.constant 0 : index
      %c0_141 = arith.constant 0 : index
      %c0_142 = arith.constant 0 : index
      %418 = vector.load %arg13[%c0_140, %c0_141, %c0_142] : memref<2x8x32xf32, #tpu.memory_space<vmem>>, vector<2x8x32xf32>
      tpu.vector_store %arg13[%c0_140, %c0_141, %c0_142], %417 {strides = array<i32>} : memref<2x8x32xf32, #tpu.memory_space<vmem>>, vector<2x8x32xf32>,
    } else {
    }
    return
  }
  func.func @transform_0(%arg0: i32) -> (i32, i32, i32) {
    %c0_i32 = arith.constant 0 : i32
    %c0_i32_0 = arith.constant 0 : i32
    %c0_i32_1 = arith.constant 0 : i32
    %c0_i32_2 = arith.constant 0 : i32
    return %c0_i32, %c0_i32_0, %c0_i32_1 : i32, i32, i32
  }
  func.func @transform_1(%arg0: i32) -> (i32, i32, i32) {
    %c0_i32 = arith.constant 0 : i32
    %c0_i32_0 = arith.constant 0 : i32
    %c0_i32_1 = arith.constant 0 : i32
    %c0_i32_2 = arith.constant 0 : i32
    return %c0_i32, %c0_i32_0, %c0_i32_1 : i32, i32, i32
  }
  func.func @transform_2(%arg0: i32) -> (i32, i32, i32) {
    %c0_i32 = arith.constant 0 : i32
    %c0_i32_0 = arith.constant 0 : i32
    %c0_i32_1 = arith.constant 0 : i32
    %c0_i32_2 = arith.constant 0 : i32
    return %c0_i32, %c0_i32_0, %c0_i32_1 : i32, i32, i32
  }
  func.func @transform_3(%arg0: i32) -> (i32, i32, i32) {
    %c0_i32 = arith.constant 0 : i32
    %c0_i32_0 = arith.constant 0 : i32
    %c0_i32_1 = arith.constant 0 : i32
    %c0_i32_2 = arith.constant 0 : i32
    return %c0_i32, %c0_i32_0, %c0_i32_1 : i32, i32, i32
  }
  func.func @transform_4(%arg0: i32) -> (i32, i32) {
    %c0_i32 = arith.constant 0 : i32
    %c0_i32_0 = arith.constant 0 : i32
    %c0_i32_1 = arith.constant 0 : i32
    return %c0_i32, %c0_i32_0 : i32, i32
  }
  func.func @transform_5(%arg0: i32) -> (i32, i32, i32, i32) {
    %c0_i32 = arith.constant 0 : i32
    %c0_i32_0 = arith.constant 0 : i32
    %c0_i32_1 = arith.constant 0 : i32
    %c0_i32_2 = arith.constant 0 : i32
    return %arg0, %c0_i32, %c0_i32_0, %c0_i32_1 : i32, i32, i32, i32
  }
  func.func @transform_6(%arg0: i32) -> (i32, i32, i32, i32) {
    %c0_i32 = arith.constant 0 : i32
    %c0_i32_0 = arith.constant 0 : i32
    %c0_i32_1 = arith.constant 0 : i32
    %c0_i32_2 = arith.constant 0 : i32
    return %arg0, %c0_i32, %c0_i32_0, %c0_i32_1 : i32, i32, i32, i32
  }
  func.func @transform_7(%arg0: i32) -> (i32, i32, i32) {
    %c0_i32 = arith.constant 0 : i32
    %c0_i32_0 = arith.constant 0 : i32
    %c0_i32_1 = arith.constant 0 : i32
    return %arg0, %c0_i32, %c0_i32_0 : i32, i32, i32
  }
  func.func @transform_8(%arg0: i32) -> (i32, i32, i32) {
    %c0_i32 = arith.constant 0 : i32
    %c0_i32_0 = arith.constant 0 : i32
    %c0_i32_1 = arith.constant 0 : i32
    return %arg0, %c0_i32, %c0_i32_0 : i32, i32, i32
  }
  func.func @transform_9(%arg0: i32) -> (i32, i32, i32) {
    %c0_i32 = arith.constant 0 : i32
    %c0_i32_0 = arith.constant 0 : i32
    %c0_i32_1 = arith.constant 0 : i32
    return %arg0, %c0_i32, %c0_i32_0 : i32, i32, i32
  }
  func.func @transform_10(%arg0: i32) -> (i32, i32, i32) {
    %c0_i32 = arith.constant 0 : i32
    %c0_i32_0 = arith.constant 0 : i32
    %c0_i32_1 = arith.constant 0 : i32
    return %arg0, %c0_i32, %c0_i32_0 : i32, i32, i32
  }
  func.func @transform_11(%arg0: i32) -> (i32, i32, i32) {
    %c0_i32 = arith.constant 0 : i32
    %c0_i32_0 = arith.constant 0 : i32
    %c0_i32_1 = arith.constant 0 : i32
    return %arg0, %c0_i32, %c0_i32_0 : i32, i32, i32
  }
  func.func @transform_12(%arg0: i32) -> (i32, i32, i32) {
    %c0_i32 = arith.constant 0 : i32
    %c0_i32_0 = arith.constant 0 : i32
    %c0_i32_1 = arith.constant 0 : i32
    %c0_i32_2 = arith.constant 0 : i32
    return %c0_i32, %c0_i32_0, %c0_i32_1 : i32, i32, i32
  }
}

</mosaic_0001>

<llo_original>
// kernel: fasttext_cnn_decoder.1
$region0: #{fasttext_cnn_decoder.1}
  #allocation0 [shape = 'u32[]', space=smem, size = 0x4, offset = 0x4, fixed_abs, tag = 'smem constant byte address 0x4 - core index']
  #allocation1 [shape = 'u32[144,128]{1,0:T(1,128)}', space=vmem, size = 0x12000, scoped, tag = 'internal scratch']
  %s0 = inlined_call_operand.hbm [shape: f32[2,8,32], index: 0, kind: input, shape index: {}]
  %s1 = inlined_call_operand.hbm [shape: f32[2,8,32], index: 1, kind: input, shape index: {}]
  %s2 = inlined_call_operand.hbm [shape: f32[2,8,8], index: 2, kind: input, shape index: {}]
  %s3 = inlined_call_operand.hbm [shape: f32[2,1,8], index: 3, kind: input, shape index: {}]
  %s4 = inlined_call_operand.hbm [shape: f32[2,32], index: 4, kind: input, shape index: {}]
  %s5 = inlined_call_operand.hbm [shape: bf16[2,2,32,96], index: 5, kind: input, shape index: {}]
  %s6 = inlined_call_operand.hbm [shape: bf16[2,2,32,32], index: 6, kind: input, shape index: {}]
  %s7 = inlined_call_operand.hbm [shape: bf16[2,96,64], index: 7, kind: input, shape index: {}]
  %s8 = inlined_call_operand.hbm [shape: bf16[2,192,32], index: 8, kind: input, shape index: {}]
  %s9 = inlined_call_operand.hbm [shape: f32[2,2,96], index: 9, kind: input, shape index: {}]
  %s10 = inlined_call_operand.hbm [shape: f32[2,9,32], index: 10, kind: input, shape index: {}]
  %s11 = inlined_call_operand.hbm [shape: f32[2,1,64], index: 11, kind: input, shape index: {}]
  %s12 = inlined_call_operand.hbm [shape: f32[2,8,32], index: 12, kind: output, shape index: {}]
  %s13 = sld [smem:[#allocation0]]
  $region141: #{fasttext_cnn_decoder.1} parent=0
    _
  %s15 = ssub.s32 1, %s13
  %s16 = scalar_select 0, %s15, %s13
  $region1: #{fasttext_cnn_decoder.1} parent=0
    #allocation2 [shape = 'u8[8192]{0}', space=vmem, size = 0x2000, scoped, tag = 'input window, operand 0, single buffered']
    #allocation3 [shape = 's32[2]{0}', space=sflag, size = 0x8, scoped, tag = 'scoped memory for fasttext_cnn_decoder.1']
    #allocation4 [shape = 's32[2]{0}', space=sflag, size = 0x8, scoped, tag = 'scoped memory for fasttext_cnn_decoder.1']
    #allocation5 [shape = 'u8[8192]{0}', space=vmem, size = 0x2000, scoped, tag = 'input window, operand 1, single buffered']
    #allocation6 [shape = 's32[1]{0}', space=sflag, size = 0x4, scoped, tag = 'scoped memory for fasttext_cnn_decoder.1']
    #allocation7 [shape = 'u8[8192]{0}', space=vmem, size = 0x2000, scoped, tag = 'input window, operand 2, single buffered']
    #allocation8 [shape = 'u8[1024]{0}', space=vmem, size = 0x400, scoped, tag = 'input window, operand 3, single buffered']
    #allocation9 [shape = 's32[1]{0}', space=sflag, size = 0x4, scoped, tag = 'scoped memory for fasttext_cnn_decoder.1']
    #allocation10 [shape = 'u8[1024]{0}', space=vmem, size = 0x400, scoped, tag = 'input window, operand 4, single buffered']
    #allocation11 [shape = 'u8[32768]{0}', space=vmem, size = 0x8000, scoped, tag = 'input window, operand 5']
    #allocation12 [shape = 's32[2]{0}', space=sflag, size = 0x8, scoped, tag = 'scoped memory for fasttext_cnn_decoder.1']
    #allocation13 [shape = 'u8[32768]{0}', space=vmem, size = 0x8000, scoped, tag = 'input window, operand 6']
    #allocation14 [shape = 'u8[49152]{0}', space=vmem, size = 0xc000, scoped, tag = 'input window, operand 7']
    #allocation15 [shape = 's32[2]{0}', space=sflag, size = 0x8, scoped, tag = 'scoped memory for fasttext_cnn_decoder.1']
    #allocation16 [shape = 'u8[98304]{0}', space=vmem, size = 0x18000, scoped, tag = 'input window, operand 8']
    #allocation17 [shape = 'u8[2048]{0}', space=vmem, size = 0x800, scoped, tag = 'input window, operand 9']
    #allocation18 [shape = 's32[2]{0}', space=sflag, size = 0x8, scoped, tag = 'scoped memory for fasttext_cnn_decoder.1']
    #allocation19 [shape = 'u8[16384]{0}', space=vmem, size = 0x4000, scoped, tag = 'input window, operand 10']
    #allocation20 [shape = 'u8[1024]{0}', space=vmem, size = 0x400, scoped, tag = 'input window, operand 11']
    #allocation21 [shape = 's32[2]{0}', space=sflag, size = 0x8, scoped, tag = 'scoped memory for fasttext_cnn_decoder.1']
    #allocation22 [shape = 'u8[8192]{0}', space=vmem, size = 0x2000, scoped, tag = 'output window, operand 0, single buffered']
    %17 = vsyncpa [#allocation3], 0
    %18 = vsyncpa [#allocation6], 0
    %19 = vsyncpa [#allocation9], 0
    %20 = vsyncpa [#allocation12], 0
    %s21 = scalar_lea.sflag [#allocation12], 1
    %22 = vsyncpa %s21, 0
    %23 = vsyncpa [#allocation15], 0
    %s24 = scalar_lea.sflag [#allocation15], 1
    %25 = vsyncpa %s24, 0
    %26 = vsyncpa [#allocation18], 0
    %s27 = scalar_lea.sflag [#allocation18], 1
    %28 = vsyncpa %s27, 0
    %29 = vsyncpa [#allocation21], 0
    %s30 = scalar_lea.sflag [#allocation21], 1
    %31 = vsyncpa %s30, 0
    %32 = vsyncpa [#allocation4], 0
    loop: start=0, step=1, limit=4
    $region2: #{fasttext_cnn_decoder.1} parent=1 // loop_pre_header
      _
    $region3: #{fasttext_cnn_decoder.1} parent=1 // loop_header
      %s34 = sphi 0, %s38
      %p35 = scmp.ge.s32.totalorder %s34, 4
      %s42 = sphi 0, %s42
      %s44 = sphi 0, %s42
      %s45 = sphi 0, %s44
      %s59 = sphi 0, %s45
      %s63 = sphi 0, %s63
      %s65 = sphi 0, %s63
      %s66 = sphi 0, %s65
      %s80 = sphi 0, %s66
      %s84 = sphi 0, %s84
      %s86 = sphi 0, %s84
      %s87 = sphi 0, %s86
      %s101 = sphi 0, %s87
      %s105 = sphi 0, %s105
      %s107 = sphi 0, %s105
      %s108 = sphi 0, %s107
      %s122 = sphi 0, %s108
      %s126 = sphi 0, %s126
      %s128 = sphi 0, %s126
      %s129 = sphi 0, %s128
      %s143 = sphi 0, %s129
      %s149 = sphi 0, %s151
      %s152 = sphi 0, %s149
      %s153 = sphi 0, %s152
      %s169 = sphi 0, %s153
      %s175 = sphi 0, %s177
      %s178 = sphi 0, %s175
      %s179 = sphi 0, %s178
      %s195 = sphi 0, %s179
      %s201 = sphi 0, %s203
      %s204 = sphi 0, %s201
      %s205 = sphi 0, %s204
      %s221 = sphi 0, %s205
      %s227 = sphi 0, %s229
      %s230 = sphi 0, %s227
      %s231 = sphi 0, %s230
      %s247 = sphi 0, %s231
      %s253 = sphi 0, %s255
      %s256 = sphi 0, %s253
      %s257 = sphi 0, %s256
      %s273 = sphi 0, %s257
      %s279 = sphi 0, %s281
      %s282 = sphi 0, %s279
      %s283 = sphi 0, %s282
      %s299 = sphi 0, %s283
      %s305 = sphi 0, %s307
      %s308 = sphi 0, %s305
      %s309 = sphi 0, %s308
      %s325 = sphi 0, %s309
      %s329 = sphi 0, %s329
      %s331 = sphi 0, %s329
      %s332 = sphi 0, %s331
      %s346 = sphi 0, %s332
    $region4: #{fasttext_cnn_decoder.1} parent=1 // loop_header_branch
      %37 = sbr.rel (%p35) target = $region8
    $region5: #{fasttext_cnn_decoder.1} parent=1 // loop_body
      %s39 = ssub.s32 %s34, 1
      %s40 = ssub.s32 %s34, 2
      %s41 = sadd.s32 %s34, 1
      %s43 = sadd.s32 %s42, 1
      %p46 = scmp.eq.s32.totalorder %s34, 1
      %p47 = scmp.ne.s32.totalorder %s42, %s44
      %p48 = scmp.eq.s32.totalorder %s34, 0
      %p49 = por %p47, %p48
      %p50 = scmp.ne.s32.totalorder %s42, %s44
      %p51 = scmp.eq.s32.totalorder %s39, 1
      %p52 = por %p50, %p51
      %p53 = scmp.ne.s32.totalorder %s44, %s45
      %p54 = scmp.eq.s32.totalorder %s39, 0
      %p55 = por %p53, %p54
      %p56 = scmp.ne.s32.totalorder %s44, %s45
      %p57 = scmp.eq.s32.totalorder %s40, 1
      %p58 = por %p56, %p57
      %p60 = scmp.ne.s32.totalorder %s45, %s59
      %p61 = scmp.eq.s32.totalorder %s40, 0
      %p62 = por %p60, %p61
      %s64 = sadd.s32 %s63, 1
      %p67 = scmp.eq.s32.totalorder %s34, 1
      %p68 = scmp.ne.s32.totalorder %s63, %s65
      %p69 = scmp.eq.s32.totalorder %s34, 0
      %p70 = por %p68, %p69
      %p71 = scmp.ne.s32.totalorder %s63, %s65
      %p72 = scmp.eq.s32.totalorder %s39, 1
      %p73 = por %p71, %p72
      %p74 = scmp.ne.s32.totalorder %s65, %s66
      %p75 = scmp.eq.s32.totalorder %s39, 0
      %p76 = por %p74, %p75
      %p77 = scmp.ne.s32.totalorder %s65, %s66
      %p78 = scmp.eq.s32.totalorder %s40, 1
      %p79 = por %p77, %p78
      %p81 = scmp.ne.s32.totalorder %s66, %s80
      %p82 = scmp.eq.s32.totalorder %s40, 0
      %p83 = por %p81, %p82
      %s85 = sadd.s32 %s84, 1
      %p88 = scmp.eq.s32.totalorder %s34, 1
      %p89 = scmp.ne.s32.totalorder %s84, %s86
      %p90 = scmp.eq.s32.totalorder %s34, 0
      %p91 = por %p89, %p90
      %p92 = scmp.ne.s32.totalorder %s84, %s86
      %p93 = scmp.eq.s32.totalorder %s39, 1
      %p94 = por %p92, %p93
      %p95 = scmp.ne.s32.totalorder %s86, %s87
      %p96 = scmp.eq.s32.totalorder %s39, 0
      %p97 = por %p95, %p96
      %p98 = scmp.ne.s32.totalorder %s86, %s87
      %p99 = scmp.eq.s32.totalorder %s40, 1
      %p100 = por %p98, %p99
      %p102 = scmp.ne.s32.totalorder %s87, %s101
      %p103 = scmp.eq.s32.totalorder %s40, 0
      %p104 = por %p102, %p103
      %s106 = sadd.s32 %s105, 1
      %p109 = scmp.eq.s32.totalorder %s34, 1
      %p110 = scmp.ne.s32.totalorder %s105, %s107
      %p111 = scmp.eq.s32.totalorder %s34, 0
      %p112 = por %p110, %p111
      %p113 = scmp.ne.s32.totalorder %s105, %s107
      %p114 = scmp.eq.s32.totalorder %s39, 1
      %p115 = por %p113, %p114
      %p116 = scmp.ne.s32.totalorder %s107, %s108
      %p117 = scmp.eq.s32.totalorder %s39, 0
      %p118 = por %p116, %p117
      %p119 = scmp.ne.s32.totalorder %s107, %s108
      %p120 = scmp.eq.s32.totalorder %s40, 1
      %p121 = por %p119, %p120
      %p123 = scmp.ne.s32.totalorder %s108, %s122
      %p124 = scmp.eq.s32.totalorder %s40, 0
      %p125 = por %p123, %p124
      %s127 = sadd.s32 %s126, 1
      %p130 = scmp.eq.s32.totalorder %s34, 1
      %p131 = scmp.ne.s32.totalorder %s126, %s128
      %p132 = scmp.eq.s32.totalorder %s34, 0
      %p133 = por %p131, %p132
      %p134 = scmp.ne.s32.totalorder %s126, %s128
      %p135 = scmp.eq.s32.totalorder %s39, 1
      %p136 = por %p134, %p135
      %p137 = scmp.ne.s32.totalorder %s128, %s129
      %p138 = scmp.eq.s32.totalorder %s39, 0
      %p139 = por %p137, %p138
      %p140 = scmp.ne.s32.totalorder %s128, %s129
      %p141 = scmp.eq.s32.totalorder %s40, 1
      %p142 = por %p140, %p141
      %p144 = scmp.ne.s32.totalorder %s129, %s143
      %p145 = scmp.eq.s32.totalorder %s40, 0
      %p146 = por %p144, %p145
      %s147 = ssub.s32 %s34, %s41
      %p148 = scmp.eq.s32.totalorder %s147, 0
      %s150 = sadd.s32 %s149, 1
      %s151 = scalar_select %p148, %s149, %s150
      %p154 = pneg %p148
      %p155 = scmp.eq.s32.totalorder %s34, 1
      %p156 = por %p154, %p155
      %p157 = scmp.ne.s32.totalorder %s149, %s152
      %p158 = scmp.eq.s32.totalorder %s34, 0
      %p159 = por %p157, %p158
      %p160 = scmp.ne.s32.totalorder %s149, %s152
      %p161 = scmp.eq.s32.totalorder %s39, 1
      %p162 = por %p160, %p161
      %p163 = scmp.ne.s32.totalorder %s152, %s153
      %p164 = scmp.eq.s32.totalorder %s39, 0
      %p165 = por %p163, %p164
      %p166 = scmp.ne.s32.totalorder %s152, %s153
      %p167 = scmp.eq.s32.totalorder %s40, 1
      %p168 = por %p166, %p167
      %p170 = scmp.ne.s32.totalorder %s153, %s169
      %p171 = scmp.eq.s32.totalorder %s40, 0
      %p172 = por %p170, %p171
      %s173 = ssub.s32 %s34, %s41
      %p174 = scmp.eq.s32.totalorder %s173, 0
      %s176 = sadd.s32 %s175, 1
      %s177 = scalar_select %p174, %s175, %s176
      %p180 = pneg %p174
      %p181 = scmp.eq.s32.totalorder %s34, 1
      %p182 = por %p180, %p181
      %p183 = scmp.ne.s32.totalorder %s175, %s178
      %p184 = scmp.eq.s32.totalorder %s34, 0
      %p185 = por %p183, %p184
      %p186 = scmp.ne.s32.totalorder %s175, %s178
      %p187 = scmp.eq.s32.totalorder %s39, 1
      %p188 = por %p186, %p187
      %p189 = scmp.ne.s32.totalorder %s178, %s179
      %p190 = scmp.eq.s32.totalorder %s39, 0
      %p191 = por %p189, %p190
      %p192 = scmp.ne.s32.totalorder %s178, %s179
      %p193 = scmp.eq.s32.totalorder %s40, 1
      %p194 = por %p192, %p193
      %p196 = scmp.ne.s32.totalorder %s179, %s195
      %p197 = scmp.eq.s32.totalorder %s40, 0
      %p198 = por %p196, %p197
      %s199 = ssub.s32 %s34, %s41
      %p200 = scmp.eq.s32.totalorder %s199, 0
      %s202 = sadd.s32 %s201, 1
      %s203 = scalar_select %p200, %s201, %s202
      %p206 = pneg %p200
      %p207 = scmp.eq.s32.totalorder %s34, 1
      %p208 = por %p206, %p207
      %p209 = scmp.ne.s32.totalorder %s201, %s204
      %p210 = scmp.eq.s32.totalorder %s34, 0
      %p211 = por %p209, %p210
      %p212 = scmp.ne.s32.totalorder %s201, %s204
      %p213 = scmp.eq.s32.totalorder %s39, 1
      %p214 = por %p212, %p213
      %p215 = scmp.ne.s32.totalorder %s204, %s205
      %p216 = scmp.eq.s32.totalorder %s39, 0
      %p217 = por %p215, %p216
      %p218 = scmp.ne.s32.totalorder %s204, %s205
      %p219 = scmp.eq.s32.totalorder %s40, 1
      %p220 = por %p218, %p219
      %p222 = scmp.ne.s32.totalorder %s205, %s221
      %p223 = scmp.eq.s32.totalorder %s40, 0
      %p224 = por %p222, %p223
      %s225 = ssub.s32 %s34, %s41
      %p226 = scmp.eq.s32.totalorder %s225, 0
      %s228 = sadd.s32 %s227, 1
      %s229 = scalar_select %p226, %s227, %s228
      %p232 = pneg %p226
      %p233 = scmp.eq.s32.totalorder %s34, 1
      %p234 = por %p232, %p233
      %p235 = scmp.ne.s32.totalorder %s227, %s230
      %p236 = scmp.eq.s32.totalorder %s34, 0
      %p237 = por %p235, %p236
      %p238 = scmp.ne.s32.totalorder %s227, %s230
      %p239 = scmp.eq.s32.totalorder %s39, 1
      %p240 = por %p238, %p239
      %p241 = scmp.ne.s32.totalorder %s230, %s231
      %p242 = scmp.eq.s32.totalorder %s39, 0
      %p243 = por %p241, %p242
      %p244 = scmp.ne.s32.totalorder %s230, %s231
      %p245 = scmp.eq.s32.totalorder %s40, 1
      %p246 = por %p244, %p245
      %p248 = scmp.ne.s32.totalorder %s231, %s247
      %p249 = scmp.eq.s32.totalorder %s40, 0
      %p250 = por %p248, %p249
      %s251 = ssub.s32 %s34, %s41
      %p252 = scmp.eq.s32.totalorder %s251, 0
      %s254 = sadd.s32 %s253, 1
      %s255 = scalar_select %p252, %s253, %s254
      %p258 = pneg %p252
      %p259 = scmp.eq.s32.totalorder %s34, 1
      %p260 = por %p258, %p259
      %p261 = scmp.ne.s32.totalorder %s253, %s256
      %p262 = scmp.eq.s32.totalorder %s34, 0
      %p263 = por %p261, %p262
      %p264 = scmp.ne.s32.totalorder %s253, %s256
      %p265 = scmp.eq.s32.totalorder %s39, 1
      %p266 = por %p264, %p265
      %p267 = scmp.ne.s32.totalorder %s256, %s257
      %p268 = scmp.eq.s32.totalorder %s39, 0
      %p269 = por %p267, %p268
      %p270 = scmp.ne.s32.totalorder %s256, %s257
      %p271 = scmp.eq.s32.totalorder %s40, 1
      %p272 = por %p270, %p271
      %p274 = scmp.ne.s32.totalorder %s257, %s273
      %p275 = scmp.eq.s32.totalorder %s40, 0
      %p276 = por %p274, %p275
      %s277 = ssub.s32 %s34, %s41
      %p278 = scmp.eq.s32.totalorder %s277, 0
      %s280 = sadd.s32 %s279, 1
      %s281 = scalar_select %p278, %s279, %s280
      %p284 = pneg %p278
      %p285 = scmp.eq.s32.totalorder %s34, 1
      %p286 = por %p284, %p285
      %p287 = scmp.ne.s32.totalorder %s279, %s282
      %p288 = scmp.eq.s32.totalorder %s34, 0
      %p289 = por %p287, %p288
      %p290 = scmp.ne.s32.totalorder %s279, %s282
      %p291 = scmp.eq.s32.totalorder %s39, 1
      %p292 = por %p290, %p291
      %p293 = scmp.ne.s32.totalorder %s282, %s283
      %p294 = scmp.eq.s32.totalorder %s39, 0
      %p295 = por %p293, %p294
      %p296 = scmp.ne.s32.totalorder %s282, %s283
      %p297 = scmp.eq.s32.totalorder %s40, 1
      %p298 = por %p296, %p297
      %p300 = scmp.ne.s32.totalorder %s283, %s299
      %p301 = scmp.eq.s32.totalorder %s40, 0
      %p302 = por %p300, %p301
      %s303 = ssub.s32 %s34, %s41
      %p304 = scmp.eq.s32.totalorder %s303, 0
      %s306 = sadd.s32 %s305, 1
      %s307 = scalar_select %p304, %s305, %s306
      %p310 = pneg %p304
      %p311 = scmp.eq.s32.totalorder %s34, 1
      %p312 = por %p310, %p311
      %p313 = scmp.ne.s32.totalorder %s305, %s308
      %p314 = scmp.eq.s32.totalorder %s34, 0
      %p315 = por %p313, %p314
      %p316 = scmp.ne.s32.totalorder %s305, %s308
      %p317 = scmp.eq.s32.totalorder %s39, 1
      %p318 = por %p316, %p317
      %p319 = scmp.ne.s32.totalorder %s308, %s309
      %p320 = scmp.eq.s32.totalorder %s39, 0
      %p321 = por %p319, %p320
      %p322 = scmp.ne.s32.totalorder %s308, %s309
      %p323 = scmp.eq.s32.totalorder %s40, 1
      %p324 = por %p322, %p323
      %p326 = scmp.ne.s32.totalorder %s309, %s325
      %p327 = scmp.eq.s32.totalorder %s40, 0
      %p328 = por %p326, %p327
      %s330 = sadd.s32 %s329, 1
      %p333 = scmp.eq.s32.totalorder %s34, 1
      %p334 = scmp.ne.s32.totalorder %s329, %s331
      %p335 = scmp.eq.s32.totalorder %s34, 0
      %p336 = por %p334, %p335
      %p337 = scmp.ne.s32.totalorder %s329, %s331
      %p338 = scmp.eq.s32.totalorder %s39, 1
      %p339 = por %p337, %p338
      %p340 = scmp.ne.s32.totalorder %s331, %s332
      %p341 = scmp.eq.s32.totalorder %s39, 0
      %p342 = por %p340, %p341
      %p343 = scmp.ne.s32.totalorder %s331, %s332
      %p344 = scmp.eq.s32.totalorder %s40, 1
      %p345 = por %p343, %p344
      %p347 = scmp.ne.s32.totalorder %s332, %s346
      %p348 = scmp.eq.s32.totalorder %s40, 0
      %p349 = por %p347, %p348
      %p350 = scmp.le.s32.totalorder 1, %s34
      %p351 = scmp.lt.s32.totalorder %s34, 3
      %p352 = pnand %p350, %p351
      %p353 = pneg %p352
      // Predicated region
      $region9: #{fasttext_cnn_decoder.1} parent=5 // pred_check
        _
      $region10: #{fasttext_cnn_decoder.1} parent=5 // pred_check_branch
        %355 = sbr.rel (%p352) target = $region12
      $region11: #{fasttext_cnn_decoder.1} parent=5 // pred_region
        %s356 = ssub.s32 %s34, 1
        // Predicated region
        $region13: #{fasttext_cnn_decoder.1} parent=11 // pred_check
          %p357 = pneg %p55
        $region14: #{fasttext_cnn_decoder.1} parent=11 // pred_check_branch
          %359 = sbr.rel (%p357) target = $region16
        $region15: #{fasttext_cnn_decoder.1} parent=11 // pred_region
          %s361 = ssub.s32 256, 256
          %362 = vsyncadd [#allocation3], %s361
          %s363 = sshll.u32 [#allocation2], 4
          %s364 = int_to_ptr.vmem [resolvable:$true] %s363
          %369 = dma.hbm_to_vmem [thread:$0]  %s0, 256, %s364, [#allocation3], 128, 128, 8
        $region16: #{fasttext_cnn_decoder.1} parent=11 // pred_fallthru
          _
        // Predicated region
        $region17: #{fasttext_cnn_decoder.1} parent=11 // pred_check
          %p370 = pneg %p76
        $region18: #{fasttext_cnn_decoder.1} parent=11 // pred_check_branch
          %372 = sbr.rel (%p370) target = $region20
        $region19: #{fasttext_cnn_decoder.1} parent=11 // pred_region
          %s374 = ssub.s32 256, 256
          %375 = vsyncadd [#allocation6], %s374
          %s376 = sshll.u32 [#allocation5], 4
          %s377 = int_to_ptr.vmem [resolvable:$true] %s376
          %382 = dma.hbm_to_vmem [thread:$0]  %s1, 256, %s377, [#allocation6], 128, 128, 8
        $region20: #{fasttext_cnn_decoder.1} parent=11 // pred_fallthru
          _
        // Predicated region
        $region21: #{fasttext_cnn_decoder.1} parent=11 // pred_check
          %p383 = pneg %p97
        $region22: #{fasttext_cnn_decoder.1} parent=11 // pred_check_branch
          %385 = sbr.rel (%p383) target = $region24
        $region23: #{fasttext_cnn_decoder.1} parent=11 // pred_region
          %s387 = ssub.s32 256, 256
          %388 = vsyncadd [#allocation6], %s387
          %s389 = sshll.u32 [#allocation7], 4
          %s390 = int_to_ptr.vmem [resolvable:$true] %s389
          %395 = dma.hbm_to_vmem [thread:$0]  %s2, 256, %s390, [#allocation6], 128, 128, 8
        $region24: #{fasttext_cnn_decoder.1} parent=11 // pred_fallthru
          _
        // Predicated region
        $region25: #{fasttext_cnn_decoder.1} parent=11 // pred_check
          %p396 = pneg %p118
        $region26: #{fasttext_cnn_decoder.1} parent=11 // pred_check_branch
          %398 = sbr.rel (%p396) target = $region28
        $region27: #{fasttext_cnn_decoder.1} parent=11 // pred_region
          %s400 = ssub.s32 32, 32
          %401 = vsyncadd [#allocation9], %s400
          %s402 = sshll.u32 [#allocation8], 4
          %s403 = int_to_ptr.vmem [resolvable:$true] %s402
          %408 = dma.hbm_to_vmem [thread:$0]  %s3, 32, %s403, [#allocation9], 16, 16, 1
        $region28: #{fasttext_cnn_decoder.1} parent=11 // pred_fallthru
          _
        // Predicated region
        $region29: #{fasttext_cnn_decoder.1} parent=11 // pred_check
          %p409 = pneg %p139
        $region30: #{fasttext_cnn_decoder.1} parent=11 // pred_check_branch
          %411 = sbr.rel (%p409) target = $region32
        $region31: #{fasttext_cnn_decoder.1} parent=11 // pred_region
          %s413 = ssub.s32 32, 32
          %414 = vsyncadd [#allocation9], %s413
          %s416 = sshll.u32 [#allocation10], 4
          %s417 = int_to_ptr.vmem [resolvable:$true] %s416
          %419 = dma.hbm_to_vmem [thread:$0]  %s4, 32, %s417, [#allocation9]
        $region32: #{fasttext_cnn_decoder.1} parent=11 // pred_fallthru
          _
      $region12: #{fasttext_cnn_decoder.1} parent=5 // pred_fallthru
        _
      %p420 = scmp.lt.s32.totalorder %s34, 2
      // Predicated region
      $region33: #{fasttext_cnn_decoder.1} parent=5 // pred_check
        %p421 = pneg %p420
      $region34: #{fasttext_cnn_decoder.1} parent=5 // pred_check_branch
        %423 = sbr.rel (%p421) target = $region36
      $region35: #{fasttext_cnn_decoder.1} parent=5 // pred_region
        // Predicated region
        $region37: #{fasttext_cnn_decoder.1} parent=35 // pred_check
          %p424 = pneg %p159
        $region38: #{fasttext_cnn_decoder.1} parent=35 // pred_check_branch
          %426 = sbr.rel (%p424) target = $region40
        $region39: #{fasttext_cnn_decoder.1} parent=35 // pred_region
          %s427 = sand.u32 %s34, 1
          %s428 = scalar_lea.sflag [#allocation12], %s427
          %s429 = sand.u32 %s149, 1
          %s430 = smul.addr %s429, 32
          %s431 = scalar_lea.vmem [#allocation11], %s430
          %s433 = ssub.s32 512, 512
          %434 = vsyncadd %s428, %s433
          %s435 = smul.addr %s34, 8
          %s436 = smul.addr %s435, 64
          %s437 = scalar_lea.hbm %s5, %s436
          %s438 = sshll.u32 %s431, 4
          %s439 = int_to_ptr.vmem [resolvable:$true] %s438
          %444 = dma.hbm_to_vmem [thread:$0]  %s437, 512, %s439, %s428, 64, 64, 4
        $region40: #{fasttext_cnn_decoder.1} parent=35 // pred_fallthru
          _
        // Predicated region
        $region41: #{fasttext_cnn_decoder.1} parent=35 // pred_check
          %p445 = pneg %p185
        $region42: #{fasttext_cnn_decoder.1} parent=35 // pred_check_branch
          %447 = sbr.rel (%p445) target = $region44
        $region43: #{fasttext_cnn_decoder.1} parent=35 // pred_region
          %s448 = sand.u32 %s34, 1
          %s449 = scalar_lea.sflag [#allocation12], %s448
          %s450 = sand.u32 %s175, 1
          %s451 = smul.addr %s450, 32
          %s452 = scalar_lea.vmem [#allocation13], %s451
          %s454 = ssub.s32 512, 512
          %455 = vsyncadd %s449, %s454
          %s456 = smul.addr %s34, 8
          %s457 = smul.addr %s456, 64
          %s458 = scalar_lea.hbm %s6, %s457
          %s459 = sshll.u32 %s452, 4
          %s460 = int_to_ptr.vmem [resolvable:$true] %s459
          %465 = dma.hbm_to_vmem [thread:$0]  %s458, 512, %s460, %s449, 64, 64, 4
        $region44: #{fasttext_cnn_decoder.1} parent=35 // pred_fallthru
          _
        // Predicated region
        $region45: #{fasttext_cnn_decoder.1} parent=35 // pred_check
          %p466 = pneg %p211
        $region46: #{fasttext_cnn_decoder.1} parent=35 // pred_check_branch
          %468 = sbr.rel (%p466) target = $region48
        $region47: #{fasttext_cnn_decoder.1} parent=35 // pred_region
          %s469 = sand.u32 %s34, 1
          %s470 = scalar_lea.sflag [#allocation15], %s469
          %s471 = sand.u32 %s201, 1
          %s472 = smul.addr %s471, 48
          %s473 = scalar_lea.vmem [#allocation14], %s472
          %s475 = ssub.s32 768, 768
          %476 = vsyncadd %s470, %s475
          %s477 = smul.addr %s34, 12
          %s478 = smul.addr %s477, 64
          %s479 = scalar_lea.hbm %s7, %s478
          %s480 = sshll.u32 %s473, 4
          %s481 = int_to_ptr.vmem [resolvable:$true] %s480
          %486 = dma.hbm_to_vmem [thread:$0]  %s479, 768, %s481, %s470, 64, 64, 4
        $region48: #{fasttext_cnn_decoder.1} parent=35 // pred_fallthru
          _
        // Predicated region
        $region49: #{fasttext_cnn_decoder.1} parent=35 // pred_check
          %p487 = pneg %p237
        $region50: #{fasttext_cnn_decoder.1} parent=35 // pred_check_branch
          %489 = sbr.rel (%p487) target = $region52
        $region51: #{fasttext_cnn_decoder.1} parent=35 // pred_region
          %s490 = sand.u32 %s34, 1
          %s491 = scalar_lea.sflag [#allocation15], %s490
          %s492 = sand.u32 %s227, 1
          %s493 = smul.addr %s492, 96
          %s494 = scalar_lea.vmem [#allocation16], %s493
          %s496 = ssub.s32 1536, 1536
          %497 = vsyncadd %s491, %s496
          %s498 = smul.addr %s34, 24
          %s499 = smul.addr %s498, 64
          %s500 = scalar_lea.hbm %s8, %s499
          %s501 = sshll.u32 %s494, 4
          %s502 = int_to_ptr.vmem [resolvable:$true] %s501
          %507 = dma.hbm_to_vmem [thread:$0]  %s500, 1536, %s502, %s491, 64, 64, 4
        $region52: #{fasttext_cnn_decoder.1} parent=35 // pred_fallthru
          _
        // Predicated region
        $region53: #{fasttext_cnn_decoder.1} parent=35 // pred_check
          %p508 = pneg %p263
        $region54: #{fasttext_cnn_decoder.1} parent=35 // pred_check_branch
          %510 = sbr.rel (%p508) target = $region56
        $region55: #{fasttext_cnn_decoder.1} parent=35 // pred_region
          %s511 = sand.u32 %s34, 1
          %s512 = scalar_lea.sflag [#allocation18], %s511
          %s513 = sand.u32 %s253, 1
          %s514 = smul.addr %s513, 2
          %s515 = scalar_lea.vmem [#allocation17], %s514
          %s517 = ssub.s32 32, 32
          %518 = vsyncadd %s512, %s517
          %s519 = smul.addr %s34, 32
          %s520 = scalar_lea.hbm %s9, %s519
          %s522 = sshll.u32 %s515, 4
          %s523 = int_to_ptr.vmem [resolvable:$true] %s522
          %525 = dma.hbm_to_vmem [thread:$0]  %s520, 32, %s523, %s512
        $region56: #{fasttext_cnn_decoder.1} parent=35 // pred_fallthru
          _
        // Predicated region
        $region57: #{fasttext_cnn_decoder.1} parent=35 // pred_check
          %p526 = pneg %p289
        $region58: #{fasttext_cnn_decoder.1} parent=35 // pred_check_branch
          %528 = sbr.rel (%p526) target = $region60
        $region59: #{fasttext_cnn_decoder.1} parent=35 // pred_region
          %s529 = sand.u32 %s34, 1
          %s530 = scalar_lea.sflag [#allocation18], %s529
          %s531 = sand.u32 %s279, 1
          %s532 = smul.addr %s531, 16
          %s533 = scalar_lea.vmem [#allocation19], %s532
          %s535 = ssub.s32 256, 256
          %536 = vsyncadd %s530, %s535
          %s537 = smul.addr %s34, 2
          %s538 = smul.addr %s537, 128
          %s539 = scalar_lea.hbm %s10, %s538
          %s540 = sshll.u32 %s533, 4
          %s541 = int_to_ptr.vmem [resolvable:$true] %s540
          %546 = dma.hbm_to_vmem [thread:$0]  %s539, 256, %s541, %s530, 128, 128, 8
        $region60: #{fasttext_cnn_decoder.1} parent=35 // pred_fallthru
          _
        // Predicated region
        $region61: #{fasttext_cnn_decoder.1} parent=35 // pred_check
          %p547 = pneg %p315
        $region62: #{fasttext_cnn_decoder.1} parent=35 // pred_check_branch
          %549 = sbr.rel (%p547) target = $region64
        $region63: #{fasttext_cnn_decoder.1} parent=35 // pred_region
          %s550 = sand.u32 %s305, 1
          %s551 = scalar_lea.sflag [#allocation21], %s550
          %s552 = sand.u32 %s305, 1
          %s553 = scalar_lea.vmem [#allocation20], %s552
          %s555 = ssub.s32 16, 16
          %556 = vsyncadd %s551, %s555
          %s557 = smul.addr %s34, 16
          %s558 = scalar_lea.hbm %s11, %s557
          %s560 = sshll.u32 %s553, 4
          %s561 = int_to_ptr.vmem [resolvable:$true] %s560
          %563 = dma.hbm_to_vmem [thread:$0]  %s558, 16, %s561, %s551
        $region64: #{fasttext_cnn_decoder.1} parent=35 // pred_fallthru
          _
      $region36: #{fasttext_cnn_decoder.1} parent=5 // pred_fallthru
        _
      %p564 = scmp.le.s32.totalorder 1, %s34
      %p565 = scmp.lt.s32.totalorder %s34, 3
      %p566 = pnand %p564, %p565
      %p567 = pneg %p566
      // Predicated region
      $region65: #{fasttext_cnn_decoder.1} parent=5 // pred_check
        _
      $region66: #{fasttext_cnn_decoder.1} parent=5 // pred_check_branch
        %569 = sbr.rel (%p566) target = $region68
      $region67: #{fasttext_cnn_decoder.1} parent=5 // pred_region
        %s570 = ssub.s32 %s34, 1
        // Predicated region
        $region69: #{fasttext_cnn_decoder.1} parent=67 // pred_check
          %p571 = pneg %p55
        $region70: #{fasttext_cnn_decoder.1} parent=67 // pred_check_branch
          %573 = sbr.rel (%p571) target = $region72
        $region71: #{fasttext_cnn_decoder.1} parent=67 // pred_region
          %574 = dma.done [#allocation3], 256
        $region72: #{fasttext_cnn_decoder.1} parent=67 // pred_fallthru
          _
        // Predicated region
        $region73: #{fasttext_cnn_decoder.1} parent=67 // pred_check
          %p575 = pneg %p76
        $region74: #{fasttext_cnn_decoder.1} parent=67 // pred_check_branch
          %577 = sbr.rel (%p575) target = $region76
        $region75: #{fasttext_cnn_decoder.1} parent=67 // pred_region
          %578 = dma.done [#allocation6], 256
        $region76: #{fasttext_cnn_decoder.1} parent=67 // pred_fallthru
          _
        // Predicated region
        $region77: #{fasttext_cnn_decoder.1} parent=67 // pred_check
          %p579 = pneg %p97
        $region78: #{fasttext_cnn_decoder.1} parent=67 // pred_check_branch
          %581 = sbr.rel (%p579) target = $region80
        $region79: #{fasttext_cnn_decoder.1} parent=67 // pred_region
          %582 = dma.done [#allocation6], 256
        $region80: #{fasttext_cnn_decoder.1} parent=67 // pred_fallthru
          _
        // Predicated region
        $region81: #{fasttext_cnn_decoder.1} parent=67 // pred_check
          %p583 = pneg %p118
        $region82: #{fasttext_cnn_decoder.1} parent=67 // pred_check_branch
          %585 = sbr.rel (%p583) target = $region84
        $region83: #{fasttext_cnn_decoder.1} parent=67 // pred_region
          %586 = dma.done [#allocation9], 32
        $region84: #{fasttext_cnn_decoder.1} parent=67 // pred_fallthru
          _
        // Predicated region
        $region85: #{fasttext_cnn_decoder.1} parent=67 // pred_check
          %p587 = pneg %p139
        $region86: #{fasttext_cnn_decoder.1} parent=67 // pred_check_branch
          %589 = sbr.rel (%p587) target = $region88
        $region87: #{fasttext_cnn_decoder.1} parent=67 // pred_region
          %590 = dma.done [#allocation9], 32
        $region88: #{fasttext_cnn_decoder.1} parent=67 // pred_fallthru
          _
        %s591 = sand.u32 %s39, 1
        %s592 = scalar_lea.sflag [#allocation12], %s591
        %s593 = sand.u32 %s152, 1
        %s594 = smul.addr %s593, 32
        %s595 = scalar_lea.vmem [#allocation11], %s594
        // Predicated region
        $region89: #{fasttext_cnn_decoder.1} parent=67 // pred_check
          %p596 = pneg %p165
        $region90: #{fasttext_cnn_decoder.1} parent=67 // pred_check_branch
          %598 = sbr.rel (%p596) target = $region92
        $region91: #{fasttext_cnn_decoder.1} parent=67 // pred_region
          %599 = dma.done %s592, 512
        $region92: #{fasttext_cnn_decoder.1} parent=67 // pred_fallthru
          _
        %s600 = sand.u32 %s39, 1
        %s601 = scalar_lea.sflag [#allocation12], %s600
        %s602 = sand.u32 %s178, 1
        %s603 = smul.addr %s602, 32
        %s604 = scalar_lea.vmem [#allocation13], %s603
        // Predicated region
        $region93: #{fasttext_cnn_decoder.1} parent=67 // pred_check
          %p605 = pneg %p191
        $region94: #{fasttext_cnn_decoder.1} parent=67 // pred_check_branch
          %607 = sbr.rel (%p605) target = $region96
        $region95: #{fasttext_cnn_decoder.1} parent=67 // pred_region
          %608 = dma.done %s601, 512
        $region96: #{fasttext_cnn_decoder.1} parent=67 // pred_fallthru
          _
        %s609 = sand.u32 %s39, 1
        %s610 = scalar_lea.sflag [#allocation15], %s609
        %s611 = sand.u32 %s204, 1
        %s612 = smul.addr %s611, 48
        %s613 = scalar_lea.vmem [#allocation14], %s612
        // Predicated region
        $region97: #{fasttext_cnn_decoder.1} parent=67 // pred_check
          %p614 = pneg %p217
        $region98: #{fasttext_cnn_decoder.1} parent=67 // pred_check_branch
          %616 = sbr.rel (%p614) target = $region100
        $region99: #{fasttext_cnn_decoder.1} parent=67 // pred_region
          %617 = dma.done %s610, 768
        $region100: #{fasttext_cnn_decoder.1} parent=67 // pred_fallthru
          _
        %s618 = sand.u32 %s39, 1
        %s619 = scalar_lea.sflag [#allocation15], %s618
        %s620 = sand.u32 %s230, 1
        %s621 = smul.addr %s620, 96
        %s622 = scalar_lea.vmem [#allocation16], %s621
        // Predicated region
        $region101: #{fasttext_cnn_decoder.1} parent=67 // pred_check
          %p623 = pneg %p243
        $region102: #{fasttext_cnn_decoder.1} parent=67 // pred_check_branch
          %625 = sbr.rel (%p623) target = $region104
        $region103: #{fasttext_cnn_decoder.1} parent=67 // pred_region
          %626 = dma.done %s619, 1536
        $region104: #{fasttext_cnn_decoder.1} parent=67 // pred_fallthru
          _
        %s627 = sand.u32 %s39, 1
        %s628 = scalar_lea.sflag [#allocation18], %s627
        %s629 = sand.u32 %s256, 1
        %s630 = smul.addr %s629, 2
        %s631 = scalar_lea.vmem [#allocation17], %s630
        // Predicated region
        $region105: #{fasttext_cnn_decoder.1} parent=67 // pred_check
          %p632 = pneg %p269
        $region106: #{fasttext_cnn_decoder.1} parent=67 // pred_check_branch
          %634 = sbr.rel (%p632) target = $region108
        $region107: #{fasttext_cnn_decoder.1} parent=67 // pred_region
          %635 = dma.done %s628, 32
        $region108: #{fasttext_cnn_decoder.1} parent=67 // pred_fallthru
          _
        %s636 = sand.u32 %s39, 1
        %s637 = scalar_lea.sflag [#allocation18], %s636
        %s638 = sand.u32 %s282, 1
        %s639 = smul.addr %s638, 16
        %s640 = scalar_lea.vmem [#allocation19], %s639
        // Predicated region
        $region109: #{fasttext_cnn_decoder.1} parent=67 // pred_check
          %p641 = pneg %p295
        $region110: #{fasttext_cnn_decoder.1} parent=67 // pred_check_branch
          %643 = sbr.rel (%p641) target = $region112
        $region111: #{fasttext_cnn_decoder.1} parent=67 // pred_region
          %644 = dma.done %s637, 256
        $region112: #{fasttext_cnn_decoder.1} parent=67 // pred_fallthru
          _
        %s645 = sand.u32 %s308, 1
        %s646 = scalar_lea.sflag [#allocation21], %s645
        %s647 = sand.u32 %s308, 1
        %s648 = scalar_lea.vmem [#allocation20], %s647
        // Predicated region
        $region113: #{fasttext_cnn_decoder.1} parent=67 // pred_check
          %p649 = pneg %p321
        $region114: #{fasttext_cnn_decoder.1} parent=67 // pred_check_branch
          %651 = sbr.rel (%p649) target = $region116
        $region115: #{fasttext_cnn_decoder.1} parent=67 // pred_region
          %652 = dma.done %s646, 16
        $region116: #{fasttext_cnn_decoder.1} parent=67 // pred_fallthru
          _
        %p653 = pneg %p55
        %p654 = pneg %p52
        %p655 = pneg %p76
        %p656 = pneg %p73
        %p657 = pneg %p97
        %p658 = pneg %p94
        %p659 = pneg %p118
        %p660 = pneg %p115
        %p661 = pneg %p139
        %p662 = pneg %p136
        %s663 = sand.u32 %s39, 1
        %s664 = scalar_lea.sflag [#allocation12], %s663
        %s665 = sand.u32 %s152, 1
        %s666 = smul.addr %s665, 32
        %s667 = scalar_lea.vmem [#allocation11], %s666
        %p668 = pneg %p165
        %p669 = pneg %p162
        %s670 = sand.u32 %s39, 1
        %s671 = scalar_lea.sflag [#allocation12], %s670
        %s672 = sand.u32 %s178, 1
        %s673 = smul.addr %s672, 32
        %s674 = scalar_lea.vmem [#allocation13], %s673
        %p675 = pneg %p191
        %p676 = pneg %p188
        %s677 = sand.u32 %s39, 1
        %s678 = scalar_lea.sflag [#allocation15], %s677
        %s679 = sand.u32 %s204, 1
        %s680 = smul.addr %s679, 48
        %s681 = scalar_lea.vmem [#allocation14], %s680
        %p682 = pneg %p217
        %p683 = pneg %p214
        %s684 = sand.u32 %s39, 1
        %s685 = scalar_lea.sflag [#allocation15], %s684
        %s686 = sand.u32 %s230, 1
        %s687 = smul.addr %s686, 96
        %s688 = scalar_lea.vmem [#allocation16], %s687
        %p689 = pneg %p243
        %p690 = pneg %p240
        %s691 = sand.u32 %s39, 1
        %s692 = scalar_lea.sflag [#allocation18], %s691
        %s693 = sand.u32 %s256, 1
        %s694 = smul.addr %s693, 2
        %s695 = scalar_lea.vmem [#allocation17], %s694
        %p696 = pneg %p269
        %p697 = pneg %p266
        %s698 = sand.u32 %s39, 1
        %s699 = scalar_lea.sflag [#allocation18], %s698
        %s700 = sand.u32 %s282, 1
        %s701 = smul.addr %s700, 16
        %s702 = scalar_lea.vmem [#allocation19], %s701
        %p703 = pneg %p295
        %p704 = pneg %p292
        %s705 = sand.u32 %s308, 1
        %s706 = scalar_lea.sflag [#allocation21], %s705
        %s707 = sand.u32 %s308, 1
        %s708 = scalar_lea.vmem [#allocation20], %s707
        %p709 = pneg %p321
        %p710 = pneg %p318
        %p711 = pneg %p342
        %p712 = pneg %p339
        %p714 = scmp.eq.s32.totalorder %s39, 0
        // Predicated region
        $region117: #{fasttext_cnn_decoder.1} parent=67 // pred_check
          %p715 = pneg %p714
        $region118: #{fasttext_cnn_decoder.1} parent=67 // pred_check_branch
          %717 = sbr.rel (%p715) target = $region120
        $region119: #{fasttext_cnn_decoder.1} parent=67 // pred_region
          %v718 = vld [vmem:[#allocation2] sm:$0xff]
          %v719 = vld [vmem:[#allocation2 + $0x8] sm:$0xff]
          %vm720 = vcmask 261120
          %721 = vst.msk [vmem:[#allocation22] sm:$0xff] %vm720, %v718
          %722 = vst.msk [vmem:[#allocation22 + $0x8] sm:$0xff] %vm720, %v719
        $region120: #{fasttext_cnn_decoder.1} parent=67 // pred_fallthru
          _
        %v723 = vld [vmem:[#allocation22] sm:$0xff]
        %v724 = vld [vmem:[#allocation22 + $0x8] sm:$0xff]
        %v725 = vld [vmem:[#allocation5] sm:$0xff]
        %v726 = vld [vmem:[#allocation5 + $0x8] sm:$0xff]
        %v727 = vld [vmem:[%s640] sm:$0x1]
        %v728 = vld [vmem:[%s640 + $0x1] sm:$0x1]
        %vm729 = vcmask 261120
        %v730 = vsel %vm729, %v723, 0.0
        %731 = vadd.xlane.f32.xlu0 %v730
        %v732 = vpop.xlane.xlu0 %731
        %v733 = vsel %vm729, %v724, 0.0
        %734 = vadd.xlane.f32.xlu0 %v733
        %v735 = vpop.xlane.xlu0 %734
        %v736 = vrcp.pop 32.0
        %v737 = vmul.f32 %v732, %v736
        %v738 = vmul.f32 %v735, %v736
        %v739 = vsub.f32 %v723, %v737
        %v740 = vsub.f32 %v724, %v738
        %v741 = vmul.f32 %v739, %v739
        %v742 = vmul.f32 %v740, %v740
        %v743 = vsel %vm729, %v741, 0.0
        %744 = vadd.xlane.f32.xlu0 %v743
        %v745 = vpop.xlane.xlu0 %744
        %v746 = vsel %vm729, %v742, 0.0
        %747 = vadd.xlane.f32.xlu0 %v746
        %v748 = vpop.xlane.xlu0 %747
        %v749 = vmul.f32 %v745, 0.032258064
        %v750 = vmul.f32 %v748, 0.032258064
        %v751 = vrsqrt.pop %v749
        %v752 = vmul.f32 %v749, %v751
        %vm753 = vcmp.eq.f32.partialorder %v749, inf
        %v754 = vsel %vm753, %v749, %v752
        %vm755 = vcmp.eq.f32.partialorder %v749, 0.0
        %v756 = vand.u32 %v749, 2147483648
        %v757 = vsel %vm755, %v756, %v754
        %v758 = vrsqrt.pop %v750
        %v759 = vmul.f32 %v750, %v758
        %vm760 = vcmp.eq.f32.partialorder %v750, inf
        %v761 = vsel %vm760, %v750, %v759
        %vm762 = vcmp.eq.f32.partialorder %v750, 0.0
        %v763 = vand.u32 %v750, 2147483648
        %v764 = vsel %vm762, %v763, %v761
        %v765 = vadd.f32 %v757, 1e-06
        %v766 = vadd.f32 %v764, 1e-06
        %v767 = vrcp.pop %v765
        %v768 = vrcp.pop %v766
        %v769 = vlaneseq
        %v770 = vshrl.u32 %v769, 7
        %v771 = vsub.s32 0, %v770
        %v772 = vrot.slane %v727, %v771
        %v773 = vmul.f32 %v772, %v739
        %v774 = vmul.f32 %v772, %v740
        %v775 = vmul.f32 %v773, %v767
        %v776 = vmul.f32 %v774, %v768
        %v777 = vlaneseq
        %v778 = vshrl.u32 %v777, 7
        %v779 = vsub.s32 0, %v778
        %v780 = vrot.slane %v728, %v779
        %v781 = vadd.f32 %v775, %v780
        %v782 = vadd.f32 %v776, %v780
        %v783 = vpack.c.bf16 %v782, %v781
        %v784 = vld [vmem:[%s595] sm:$0xf]
        %v785 = vld [vmem:[%s595 + $0x4] sm:$0xf]
        %v786 = vld [vmem:[%s595 + $0x8] sm:$0xf]
        %v787 = vld [vmem:[%s595 + $0xc] sm:$0xf]
        %v788 = vld [vmem:[%s631] sm:$0x1]
        %v789 = vlaneseq
        %v790 = vshrl.u32 %v789, 7
        %v791 = vsub.s32 0, %v790
        %v792 = vrot.slane %v788, %v791
        %v797 = vunpack.c.l.b16 %v784
        %v798 = vunpack.c.l.b16 %v785
        %v799 = vunpack.c.l.b16 %v786
        %v800 = vunpack.c.l.b16 %v787
        %v801 = vpack.c.b16 %v798, %v797
        %v802 = vpack.c.b16 %v800, %v799
        %v806 = vsel %vm729, %v783, 0
        %808 = vmatprep.subr.bf16.mxu0 0
        %809 = vmatpush1.bf16.msra.mxu0 %v801
        %810 = vmatprep.subr.bf16.mxu0 0
        %811 = vmatpush1.bf16.msra.mxu0 %v802
        %812 = vmatprep.subr.bf16.mxu0 0
        %813 = vmatpush1.bf16.msra.mxu0 0
        %814 = vmatprep.subr.bf16.mxu0 0
        %815 = vmatpush1.bf16.msra.mxu0 0
        %816 = vmatprep.subr.bf16.mxu0 0
        %817 = vmatpush1.bf16.msra.mxu0 0
        %818 = vmatprep.subr.bf16.mxu0 0
        %819 = vmatpush1.bf16.msra.mxu0 0
        %820 = vmatprep.subr.bf16.mxu0 0
        %821 = vmatpush1.bf16.msra.mxu0 0
        %822 = vmatprep.subr.bf16.mxu0 0
        %823 = vmatpush1.bf16.msra.mxu0 0
        %824 = vmatprep.subr.bf16.mxu0 0
        %825 = vmatpush1.bf16.msra.mxu0 0
        %826 = vmatprep.subr.bf16.mxu0 0
        %827 = vmatpush1.bf16.msra.mxu0 0
        %828 = vmatprep.subr.bf16.mxu0 0
        %829 = vmatpush1.bf16.msra.mxu0 0
        %830 = vmatprep.subr.bf16.mxu0 0
        %831 = vmatpush1.bf16.msra.mxu0 0
        %832 = vmatprep.subr.bf16.mxu0 0
        %833 = vmatpush1.bf16.msra.mxu0 0
        %834 = vmatprep.subr.bf16.mxu0 0
        %835 = vmatpush1.bf16.msra.mxu0 0
        %836 = vmatprep.subr.bf16.mxu0 0
        %837 = vmatpush1.bf16.msra.mxu0 0
        %838 = vmatprep.subr.bf16.mxu0 0
        %839 = vmatpush1.bf16.msra.mxu0 0
        %840 = vmatprep.mubr.bf16.mxu0 0
        %841 = vmatmul.mubr.bf16.gmra.mrb[0].mxu0 %v806
        %v842 = vpop.f32.mrb[0].mxu0
        %v843 = vadd.f32 %v792, %v842
        %v844 = vpop.f32.mrb[0].mxu0
        %v845 = vpop.f32.mrb[0].mxu0
        %v846 = vadd.f32 %v792, %v845
        %v847 = vpop.f32.mrb[0].mxu0
        %848 = vdwg.mxu0
        %v849 = vld [vmem:[%s604] sm:$0xf]
        %v850 = vld [vmem:[%s604 + $0x4] sm:$0xf]
        %v851 = vld [vmem:[%s604 + $0x8] sm:$0xf]
        %v852 = vld [vmem:[%s604 + $0xc] sm:$0xf]
        %v853 = vld [vmem:[%s640 + $0x6] sm:$0x1]
        %v854 = vld [vmem:[#allocation7] sm:$0xff]
        %v855 = vld [vmem:[#allocation7 + $0x8] sm:$0xff]
        %v856 = vpack.c.bf16 %v843, %v843
        %v857 = vpack.c.bf16 %v846, %v846
        %859 = vrot.lane.b32.xlu0 %v856, 96
        %v860 = vpop.permute.xlu0 %859
        %vm861 = vcmask 64512
        %v863 = vsel %vm861, %v856, 0
        %v866 = vsel %vm861, %v860, 0
        %868 = vmatprep.subr.bf16.mxu0 0
        %869 = vmatpush1.bf16.xpose.msra.mxu0 %v866
        %870 = vmatprep.subr.bf16.mxu0 0
        %871 = vmatpush1.bf16.xpose.msra.mxu0 0
        %872 = vmatprep.subr.bf16.mxu0 0
        %873 = vmatpush1.bf16.xpose.msra.mxu0 0
        %874 = vmatprep.subr.bf16.mxu0 0
        %875 = vmatpush1.bf16.xpose.msra.mxu0 0
        %876 = vmatprep.subr.bf16.mxu0 0
        %877 = vmatpush1.bf16.xpose.msra.mxu0 0
        %878 = vmatprep.subr.bf16.mxu0 0
        %879 = vmatpush1.bf16.xpose.msra.mxu0 0
        %880 = vmatprep.subr.bf16.mxu0 0
        %881 = vmatpush1.bf16.xpose.msra.mxu0 0
        %882 = vmatprep.subr.bf16.mxu0 0
        %883 = vmatpush1.bf16.xpose.msra.mxu0 0
        %884 = vmatprep.subr.bf16.mxu0 0
        %885 = vmatpush1.bf16.xpose.msra.mxu0 0
        %886 = vmatprep.subr.bf16.mxu0 0
        %887 = vmatpush1.bf16.xpose.msra.mxu0 0
        %888 = vmatprep.subr.bf16.mxu0 0
        %889 = vmatpush1.bf16.xpose.msra.mxu0 0
        %890 = vmatprep.subr.bf16.mxu0 0
        %891 = vmatpush1.bf16.xpose.msra.mxu0 0
        %892 = vmatprep.subr.bf16.mxu0 0
        %893 = vmatpush1.bf16.xpose.msra.mxu0 0
        %894 = vmatprep.subr.bf16.mxu0 0
        %895 = vmatpush1.bf16.xpose.msra.mxu0 0
        %896 = vmatprep.subr.bf16.mxu0 0
        %897 = vmatpush1.bf16.xpose.msra.mxu0 0
        %898 = vmatprep.subr.bf16.mxu0 0
        %899 = vmatpush1.bf16.xpose.msra.mxu0 0
        %900 = vmatprep.mubr.bf16.mxu0 0
        %901 = vmatmul.mubr.bf16.gmra.mrb[0].mxu0 %v863
        %v902 = vpop.f32.mrb[0].mxu0
        %v903 = vadd.f32 0.0, %v902
        %v904 = vpop.f32.mrb[0].mxu0
        %v905 = vpop.f32.mrb[0].mxu0
        %v906 = vpop.f32.mrb[0].mxu0
        %907 = vdwg.mxu0
        %909 = vrot.lane.b32.xlu0 %v857, 96
        %v910 = vpop.permute.xlu0 %909
        %v912 = vsel %vm861, %v857, 0
        %v915 = vsel %vm861, %v910, 0
        %917 = vmatprep.subr.bf16.mxu0 0
        %918 = vmatpush1.bf16.xpose.msra.mxu0 %v915
        %919 = vmatprep.subr.bf16.mxu0 0
        %920 = vmatpush1.bf16.xpose.msra.mxu0 0
        %921 = vmatprep.subr.bf16.mxu0 0
        %922 = vmatpush1.bf16.xpose.msra.mxu0 0
        %923 = vmatprep.subr.bf16.mxu0 0
        %924 = vmatpush1.bf16.xpose.msra.mxu0 0
        %925 = vmatprep.subr.bf16.mxu0 0
        %926 = vmatpush1.bf16.xpose.msra.mxu0 0
        %927 = vmatprep.subr.bf16.mxu0 0
        %928 = vmatpush1.bf16.xpose.msra.mxu0 0
        %929 = vmatprep.subr.bf16.mxu0 0
        %930 = vmatpush1.bf16.xpose.msra.mxu0 0
        %931 = vmatprep.subr.bf16.mxu0 0
        %932 = vmatpush1.bf16.xpose.msra.mxu0 0
        %933 = vmatprep.subr.bf16.mxu0 0
        %934 = vmatpush1.bf16.xpose.msra.mxu0 0
        %935 = vmatprep.subr.bf16.mxu0 0
        %936 = vmatpush1.bf16.xpose.msra.mxu0 0
        %937 = vmatprep.subr.bf16.mxu0 0
        %938 = vmatpush1.bf16.xpose.msra.mxu0 0
        %939 = vmatprep.subr.bf16.mxu0 0
        %940 = vmatpush1.bf16.xpose.msra.mxu0 0
        %941 = vmatprep.subr.bf16.mxu0 0
        %942 = vmatpush1.bf16.xpose.msra.mxu0 0
        %943 = vmatprep.subr.bf16.mxu0 0
        %944 = vmatpush1.bf16.xpose.msra.mxu0 0
        %945 = vmatprep.subr.bf16.mxu0 0
        %946 = vmatpush1.bf16.xpose.msra.mxu0 0
        %947 = vmatprep.subr.bf16.mxu0 0
        %948 = vmatpush1.bf16.xpose.msra.mxu0 0
        %949 = vmatprep.mubr.bf16.mxu0 0
        %950 = vmatmul.mubr.bf16.gmra.mrb[0].mxu0 %v912
        %v951 = vpop.f32.mrb[0].mxu0
        %v952 = vadd.f32 0.0, %v951
        %v953 = vpop.f32.mrb[0].mxu0
        %v954 = vpop.f32.mrb[0].mxu0
        %v955 = vpop.f32.mrb[0].mxu0
        %956 = vdwg.mxu0
        %v957 = vmul.f32 %v903, 0.35355338
        %v958 = vmul.f32 %v952, 0.35355338
        %v959 = vadd.f32 %v957, %v854
        %v960 = vadd.f32 %v958, %v855
        %v961 = vsel %vm861, %v959, -inf
        %962 = vmax.xlane.f32.xlu0 %v961
        %v963 = vpop.xlane.xlu0 %962
        %v964 = vsel %vm861, %v960, -inf
        %965 = vmax.xlane.f32.xlu0 %v964
        %v966 = vpop.xlane.xlu0 %965
        %v967 = vsub.f32 %v959, %v963
        %v968 = vsub.f32 %v960, %v966
        %v969 = vmul.f32 %v967, 1.442695
        %v970 = vpow.pop %v969
        %v971 = vmul.f32 %v968, 1.442695
        %v972 = vpow.pop %v971
        %v973 = vsel %vm861, %v970, 0.0
        %974 = vadd.xlane.f32.xlu0 %v973
        %v975 = vpop.xlane.xlu0 %974
        %v976 = vsel %vm861, %v972, 0.0
        %977 = vadd.xlane.f32.xlu0 %v976
        %v978 = vpop.xlane.xlu0 %977
        %v979 = vrcp.pop %v975
        %v980 = vrcp.pop %v978
        %v981 = vmul.f32 %v970, %v979
        %v982 = vmul.f32 %v972, %v980
        %v983 = vpack.c.bf16 %v981, %v981
        %v984 = vpack.c.bf16 %v982, %v982
        %985 = vrot.lane.b32.xlu0 %v856, 64
        %v986 = vpop.permute.xlu0 %985
        %v988 = vsel %vm861, %v983, 0
        %vm990 = vcmask 1043456
        %v992 = vsel %vm990, %v986, 0
        %994 = vmatprep.subr.bf16.mxu0 0
        %995 = vmatpush1.bf16.msra.mxu0 %v992
        %996 = vmatprep.subr.bf16.mxu0 0
        %997 = vmatpush1.bf16.msra.mxu0 0
        %998 = vmatprep.subr.bf16.mxu0 0
        %999 = vmatpush1.bf16.msra.mxu0 0
        %1000 = vmatprep.subr.bf16.mxu0 0
        %1001 = vmatpush1.bf16.msra.mxu0 0
        %1002 = vmatprep.subr.bf16.mxu0 0
        %1003 = vmatpush1.bf16.msra.mxu0 0
        %1004 = vmatprep.subr.bf16.mxu0 0
        %1005 = vmatpush1.bf16.msra.mxu0 0
        %1006 = vmatprep.subr.bf16.mxu0 0
        %1007 = vmatpush1.bf16.msra.mxu0 0
        %1008 = vmatprep.subr.bf16.mxu0 0
        %1009 = vmatpush1.bf16.msra.mxu0 0
        %1010 = vmatprep.subr.bf16.mxu0 0
        %1011 = vmatpush1.bf16.msra.mxu0 0
        %1012 = vmatprep.subr.bf16.mxu0 0
        %1013 = vmatpush1.bf16.msra.mxu0 0
        %1014 = vmatprep.subr.bf16.mxu0 0
        %1015 = vmatpush1.bf16.msra.mxu0 0
        %1016 = vmatprep.subr.bf16.mxu0 0
        %1017 = vmatpush1.bf16.msra.mxu0 0
        %1018 = vmatprep.subr.bf16.mxu0 0
        %1019 = vmatpush1.bf16.msra.mxu0 0
        %1020 = vmatprep.subr.bf16.mxu0 0
        %1021 = vmatpush1.bf16.msra.mxu0 0
        %1022 = vmatprep.subr.bf16.mxu0 0
        %1023 = vmatpush1.bf16.msra.mxu0 0
        %1024 = vmatprep.subr.bf16.mxu0 0
        %1025 = vmatpush1.bf16.msra.mxu0 0
        %1026 = vmatprep.mubr.bf16.mxu0 0
        %1027 = vmatmul.mubr.bf16.gmra.mrb[0].mxu0 %v988
        %v1028 = vpop.f32.mrb[0].mxu0
        %v1029 = vadd.f32 0.0, %v1028
        %v1030 = vpop.f32.mrb[0].mxu0
        %v1031 = vpop.f32.mrb[0].mxu0
        %v1032 = vpop.f32.mrb[0].mxu0
        %1033 = vdwg.mxu0
        %1034 = vrot.lane.b32.xlu0 %v857, 64
        %v1035 = vpop.permute.xlu0 %1034
        %v1037 = vsel %vm861, %v984, 0
        %v1040 = vsel %vm990, %v1035, 0
        %1042 = vmatprep.subr.bf16.mxu0 0
        %1043 = vmatpush1.bf16.msra.mxu0 %v1040
        %1044 = vmatprep.subr.bf16.mxu0 0
        %1045 = vmatpush1.bf16.msra.mxu0 0
        %1046 = vmatprep.subr.bf16.mxu0 0
        %1047 = vmatpush1.bf16.msra.mxu0 0
        %1048 = vmatprep.subr.bf16.mxu0 0
        %1049 = vmatpush1.bf16.msra.mxu0 0
        %1050 = vmatprep.subr.bf16.mxu0 0
        %1051 = vmatpush1.bf16.msra.mxu0 0
        %1052 = vmatprep.subr.bf16.mxu0 0
        %1053 = vmatpush1.bf16.msra.mxu0 0
        %1054 = vmatprep.subr.bf16.mxu0 0
        %1055 = vmatpush1.bf16.msra.mxu0 0
        %1056 = vmatprep.subr.bf16.mxu0 0
        %1057 = vmatpush1.bf16.msra.mxu0 0
        %1058 = vmatprep.subr.bf16.mxu0 0
        %1059 = vmatpush1.bf16.msra.mxu0 0
        %1060 = vmatprep.subr.bf16.mxu0 0
        %1061 = vmatpush1.bf16.msra.mxu0 0
        %1062 = vmatprep.subr.bf16.mxu0 0
        %1063 = vmatpush1.bf16.msra.mxu0 0
        %1064 = vmatprep.subr.bf16.mxu0 0
        %1065 = vmatpush1.bf16.msra.mxu0 0
        %1066 = vmatprep.subr.bf16.mxu0 0
        %1067 = vmatpush1.bf16.msra.mxu0 0
        %1068 = vmatprep.subr.bf16.mxu0 0
        %1069 = vmatpush1.bf16.msra.mxu0 0
        %1070 = vmatprep.subr.bf16.mxu0 0
        %1071 = vmatpush1.bf16.msra.mxu0 0
        %1072 = vmatprep.subr.bf16.mxu0 0
        %1073 = vmatpush1.bf16.msra.mxu0 0
        %1074 = vmatprep.mubr.bf16.mxu0 0
        %1075 = vmatmul.mubr.bf16.gmra.mrb[0].mxu0 %v1037
        %v1076 = vpop.f32.mrb[0].mxu0
        %v1077 = vadd.f32 0.0, %v1076
        %v1078 = vpop.f32.mrb[0].mxu0
        %v1079 = vpop.f32.mrb[0].mxu0
        %v1080 = vpop.f32.mrb[0].mxu0
        %1081 = vdwg.mxu0
        %1082 = vrot.lane.b32.xlu0 %v856, 120
        %v1083 = vpop.permute.xlu0 %1082
        %1084 = vrot.lane.b32.xlu0 %v856, 88
        %v1085 = vpop.permute.xlu0 %1084
        %v1087 = vsel %vm861, %v1083, 0
        %v1090 = vsel %vm861, %v1085, 0
        %1092 = vmatprep.subr.bf16.mxu0 0
        %1093 = vmatpush1.bf16.xpose.msra.mxu0 %v1090
        %1094 = vmatprep.subr.bf16.mxu0 0
        %1095 = vmatpush1.bf16.xpose.msra.mxu0 0
        %1096 = vmatprep.subr.bf16.mxu0 0
        %1097 = vmatpush1.bf16.xpose.msra.mxu0 0
        %1098 = vmatprep.subr.bf16.mxu0 0
        %1099 = vmatpush1.bf16.xpose.msra.mxu0 0
        %1100 = vmatprep.subr.bf16.mxu0 0
        %1101 = vmatpush1.bf16.xpose.msra.mxu0 0
        %1102 = vmatprep.subr.bf16.mxu0 0
        %1103 = vmatpush1.bf16.xpose.msra.mxu0 0
        %1104 = vmatprep.subr.bf16.mxu0 0
        %1105 = vmatpush1.bf16.xpose.msra.mxu0 0
        %1106 = vmatprep.subr.bf16.mxu0 0
        %1107 = vmatpush1.bf16.xpose.msra.mxu0 0
        %1108 = vmatprep.subr.bf16.mxu0 0
        %1109 = vmatpush1.bf16.xpose.msra.mxu0 0
        %1110 = vmatprep.subr.bf16.mxu0 0
        %1111 = vmatpush1.bf16.xpose.msra.mxu0 0
        %1112 = vmatprep.subr.bf16.mxu0 0
        %1113 = vmatpush1.bf16.xpose.msra.mxu0 0
        %1114 = vmatprep.subr.bf16.mxu0 0
        %1115 = vmatpush1.bf16.xpose.msra.mxu0 0
        %1116 = vmatprep.subr.bf16.mxu0 0
        %1117 = vmatpush1.bf16.xpose.msra.mxu0 0
        %1118 = vmatprep.subr.bf16.mxu0 0
        %1119 = vmatpush1.bf16.xpose.msra.mxu0 0
        %1120 = vmatprep.subr.bf16.mxu0 0
        %1121 = vmatpush1.bf16.xpose.msra.mxu0 0
        %1122 = vmatprep.subr.bf16.mxu0 0
        %1123 = vmatpush1.bf16.xpose.msra.mxu0 0
        %1124 = vmatprep.mubr.bf16.mxu0 0
        %1125 = vmatmul.mubr.bf16.gmra.mrb[0].mxu0 %v1087
        %v1126 = vpop.f32.mrb[0].mxu0
        %v1127 = vadd.f32 0.0, %v1126
        %v1128 = vpop.f32.mrb[0].mxu0
        %v1129 = vpop.f32.mrb[0].mxu0
        %v1130 = vpop.f32.mrb[0].mxu0
        %1131 = vdwg.mxu0
        %1132 = vrot.lane.b32.xlu0 %v857, 120
        %v1133 = vpop.permute.xlu0 %1132
        %1134 = vrot.lane.b32.xlu0 %v857, 88
        %v1135 = vpop.permute.xlu0 %1134
        %v1137 = vsel %vm861, %v1133, 0
        %v1140 = vsel %vm861, %v1135, 0
        %1142 = vmatprep.subr.bf16.mxu0 0
        %1143 = vmatpush1.bf16.xpose.msra.mxu0 %v1140
        %1144 = vmatprep.subr.bf16.mxu0 0
        %1145 = vmatpush1.bf16.xpose.msra.mxu0 0
        %1146 = vmatprep.subr.bf16.mxu0 0
        %1147 = vmatpush1.bf16.xpose.msra.mxu0 0
        %1148 = vmatprep.subr.bf16.mxu0 0
        %1149 = vmatpush1.bf16.xpose.msra.mxu0 0
        %1150 = vmatprep.subr.bf16.mxu0 0
        %1151 = vmatpush1.bf16.xpose.msra.mxu0 0
        %1152 = vmatprep.subr.bf16.mxu0 0
        %1153 = vmatpush1.bf16.xpose.msra.mxu0 0
        %1154 = vmatprep.subr.bf16.mxu0 0
        %1155 = vmatpush1.bf16.xpose.msra.mxu0 0
        %1156 = vmatprep.subr.bf16.mxu0 0
        %1157 = vmatpush1.bf16.xpose.msra.mxu0 0
        %1158 = vmatprep.subr.bf16.mxu0 0
        %1159 = vmatpush1.bf16.xpose.msra.mxu0 0
        %1160 = vmatprep.subr.bf16.mxu0 0
        %1161 = vmatpush1.bf16.xpose.msra.mxu0 0
        %1162 = vmatprep.subr.bf16.mxu0 0
        %1163 = vmatpush1.bf16.xpose.msra.mxu0 0
        %1164 = vmatprep.subr.bf16.mxu0 0
        %1165 = vmatpush1.bf16.xpose.msra.mxu0 0
        %1166 = vmatprep.subr.bf16.mxu0 0
        %1167 = vmatpush1.bf16.xpose.msra.mxu0 0
        %1168 = vmatprep.subr.bf16.mxu0 0
        %1169 = vmatpush1.bf16.xpose.msra.mxu0 0
        %1170 = vmatprep.subr.bf16.mxu0 0
        %1171 = vmatpush1.bf16.xpose.msra.mxu0 0
        %1172 = vmatprep.subr.bf16.mxu0 0
        %1173 = vmatpush1.bf16.xpose.msra.mxu0 0
        %1174 = vmatprep.mubr.bf16.mxu0 0
        %1175 = vmatmul.mubr.bf16.gmra.mrb[0].mxu0 %v1137
        %v1176 = vpop.f32.mrb[0].mxu0
        %v1177 = vadd.f32 0.0, %v1176
        %v1178 = vpop.f32.mrb[0].mxu0
        %v1179 = vpop.f32.mrb[0].mxu0
        %v1180 = vpop.f32.mrb[0].mxu0
        %1181 = vdwg.mxu0
        %v1182 = vmul.f32 %v1127, 0.35355338
        %v1183 = vmul.f32 %v1177, 0.35355338
        %v1184 = vadd.f32 %v1182, %v854
        %v1185 = vadd.f32 %v1183, %v855
        %v1186 = vsel %vm861, %v1184, -inf
        %1187 = vmax.xlane.f32.xlu0 %v1186
        %v1188 = vpop.xlane.xlu0 %1187
        %v1189 = vsel %vm861, %v1185, -inf
        %1190 = vmax.xlane.f32.xlu0 %v1189
        %v1191 = vpop.xlane.xlu0 %1190
        %v1192 = vsub.f32 %v1184, %v1188
        %v1193 = vsub.f32 %v1185, %v1191
        %v1194 = vmul.f32 %v1192, 1.442695
        %v1195 = vpow.pop %v1194
        %v1196 = vmul.f32 %v1193, 1.442695
        %v1197 = vpow.pop %v1196
        %v1198 = vsel %vm861, %v1195, 0.0
        %1199 = vadd.xlane.f32.xlu0 %v1198
        %v1200 = vpop.xlane.xlu0 %1199
        %v1201 = vsel %vm861, %v1197, 0.0
        %1202 = vadd.xlane.f32.xlu0 %v1201
        %v1203 = vpop.xlane.xlu0 %1202
        %v1204 = vrcp.pop %v1200
        %v1205 = vrcp.pop %v1203
        %v1206 = vmul.f32 %v1195, %v1204
        %v1207 = vmul.f32 %v1197, %v1205
        %v1208 = vpack.c.bf16 %v1206, %v1206
        %v1209 = vpack.c.bf16 %v1207, %v1207
        %1210 = vrot.lane.b32.xlu0 %v856, 56
        %v1211 = vpop.permute.xlu0 %1210
        %v1213 = vsel %vm861, %v1208, 0
        %v1216 = vsel %vm990, %v1211, 0
        %1218 = vmatprep.subr.bf16.mxu0 0
        %1219 = vmatpush1.bf16.msra.mxu0 %v1216
        %1220 = vmatprep.subr.bf16.mxu0 0
        %1221 = vmatpush1.bf16.msra.mxu0 0
        %1222 = vmatprep.subr.bf16.mxu0 0
        %1223 = vmatpush1.bf16.msra.mxu0 0
        %1224 = vmatprep.subr.bf16.mxu0 0
        %1225 = vmatpush1.bf16.msra.mxu0 0
        %1226 = vmatprep.subr.bf16.mxu0 0
        %1227 = vmatpush1.bf16.msra.mxu0 0
        %1228 = vmatprep.subr.bf16.mxu0 0
        %1229 = vmatpush1.bf16.msra.mxu0 0
        %1230 = vmatprep.subr.bf16.mxu0 0
        %1231 = vmatpush1.bf16.msra.mxu0 0
        %1232 = vmatprep.subr.bf16.mxu0 0
        %1233 = vmatpush1.bf16.msra.mxu0 0
        %1234 = vmatprep.subr.bf16.mxu0 0
        %1235 = vmatpush1.bf16.msra.mxu0 0
        %1236 = vmatprep.subr.bf16.mxu0 0
        %1237 = vmatpush1.bf16.msra.mxu0 0
        %1238 = vmatprep.subr.bf16.mxu0 0
        %1239 = vmatpush1.bf16.msra.mxu0 0
        %1240 = vmatprep.subr.bf16.mxu0 0
        %1241 = vmatpush1.bf16.msra.mxu0 0
        %1242 = vmatprep.subr.bf16.mxu0 0
        %1243 = vmatpush1.bf16.msra.mxu0 0
        %1244 = vmatprep.subr.bf16.mxu0 0
        %1245 = vmatpush1.bf16.msra.mxu0 0
        %1246 = vmatprep.subr.bf16.mxu0 0
        %1247 = vmatpush1.bf16.msra.mxu0 0
        %1248 = vmatprep.subr.bf16.mxu0 0
        %1249 = vmatpush1.bf16.msra.mxu0 0
        %1250 = vmatprep.mubr.bf16.mxu0 0
        %1251 = vmatmul.mubr.bf16.gmra.mrb[0].mxu0 %v1213
        %v1252 = vpop.f32.mrb[0].mxu0
        %v1253 = vadd.f32 0.0, %v1252
        %v1254 = vpop.f32.mrb[0].mxu0
        %v1255 = vpop.f32.mrb[0].mxu0
        %v1256 = vpop.f32.mrb[0].mxu0
        %1257 = vdwg.mxu0
        %1258 = vrot.lane.b32.xlu0 %v857, 56
        %v1259 = vpop.permute.xlu0 %1258
        %v1261 = vsel %vm861, %v1209, 0
        %v1264 = vsel %vm990, %v1259, 0
        %1266 = vmatprep.subr.bf16.mxu0 0
        %1267 = vmatpush1.bf16.msra.mxu0 %v1264
        %1268 = vmatprep.subr.bf16.mxu0 0
        %1269 = vmatpush1.bf16.msra.mxu0 0
        %1270 = vmatprep.subr.bf16.mxu0 0
        %1271 = vmatpush1.bf16.msra.mxu0 0
        %1272 = vmatprep.subr.bf16.mxu0 0
        %1273 = vmatpush1.bf16.msra.mxu0 0
        %1274 = vmatprep.subr.bf16.mxu0 0
        %1275 = vmatpush1.bf16.msra.mxu0 0
        %1276 = vmatprep.subr.bf16.mxu0 0
        %1277 = vmatpush1.bf16.msra.mxu0 0
        %1278 = vmatprep.subr.bf16.mxu0 0
        %1279 = vmatpush1.bf16.msra.mxu0 0
        %1280 = vmatprep.subr.bf16.mxu0 0
        %1281 = vmatpush1.bf16.msra.mxu0 0
        %1282 = vmatprep.subr.bf16.mxu0 0
        %1283 = vmatpush1.bf16.msra.mxu0 0
        %1284 = vmatprep.subr.bf16.mxu0 0
        %1285 = vmatpush1.bf16.msra.mxu0 0
        %1286 = vmatprep.subr.bf16.mxu0 0
        %1287 = vmatpush1.bf16.msra.mxu0 0
        %1288 = vmatprep.subr.bf16.mxu0 0
        %1289 = vmatpush1.bf16.msra.mxu0 0
        %1290 = vmatprep.subr.bf16.mxu0 0
        %1291 = vmatpush1.bf16.msra.mxu0 0
        %1292 = vmatprep.subr.bf16.mxu0 0
        %1293 = vmatpush1.bf16.msra.mxu0 0
        %1294 = vmatprep.subr.bf16.mxu0 0
        %1295 = vmatpush1.bf16.msra.mxu0 0
        %1296 = vmatprep.subr.bf16.mxu0 0
        %1297 = vmatpush1.bf16.msra.mxu0 0
        %1298 = vmatprep.mubr.bf16.mxu0 0
        %1299 = vmatmul.mubr.bf16.gmra.mrb[0].mxu0 %v1261
        %v1300 = vpop.f32.mrb[0].mxu0
        %v1301 = vadd.f32 0.0, %v1300
        %v1302 = vpop.f32.mrb[0].mxu0
        %v1303 = vpop.f32.mrb[0].mxu0
        %v1304 = vpop.f32.mrb[0].mxu0
        %1305 = vdwg.mxu0
        %1306 = vrot.lane.b32.xlu0 %v856, 112
        %v1307 = vpop.permute.xlu0 %1306
        %1308 = vrot.lane.b32.xlu0 %v856, 80
        %v1309 = vpop.permute.xlu0 %1308
        %v1311 = vsel %vm861, %v1307, 0
        %v1314 = vsel %vm861, %v1309, 0
        %1316 = vmatprep.subr.bf16.mxu0 0
        %1317 = vmatpush1.bf16.xpose.msra.mxu0 %v1314
        %1318 = vmatprep.subr.bf16.mxu0 0
        %1319 = vmatpush1.bf16.xpose.msra.mxu0 0
        %1320 = vmatprep.subr.bf16.mxu0 0
        %1321 = vmatpush1.bf16.xpose.msra.mxu0 0
        %1322 = vmatprep.subr.bf16.mxu0 0
        %1323 = vmatpush1.bf16.xpose.msra.mxu0 0
        %1324 = vmatprep.subr.bf16.mxu0 0
        %1325 = vmatpush1.bf16.xpose.msra.mxu0 0
        %1326 = vmatprep.subr.bf16.mxu0 0
        %1327 = vmatpush1.bf16.xpose.msra.mxu0 0
        %1328 = vmatprep.subr.bf16.mxu0 0
        %1329 = vmatpush1.bf16.xpose.msra.mxu0 0
        %1330 = vmatprep.subr.bf16.mxu0 0
        %1331 = vmatpush1.bf16.xpose.msra.mxu0 0
        %1332 = vmatprep.subr.bf16.mxu0 0
        %1333 = vmatpush1.bf16.xpose.msra.mxu0 0
        %1334 = vmatprep.subr.bf16.mxu0 0
        %1335 = vmatpush1.bf16.xpose.msra.mxu0 0
        %1336 = vmatprep.subr.bf16.mxu0 0
        %1337 = vmatpush1.bf16.xpose.msra.mxu0 0
        %1338 = vmatprep.subr.bf16.mxu0 0
        %1339 = vmatpush1.bf16.xpose.msra.mxu0 0
        %1340 = vmatprep.subr.bf16.mxu0 0
        %1341 = vmatpush1.bf16.xpose.msra.mxu0 0
        %1342 = vmatprep.subr.bf16.mxu0 0
        %1343 = vmatpush1.bf16.xpose.msra.mxu0 0
        %1344 = vmatprep.subr.bf16.mxu0 0
        %1345 = vmatpush1.bf16.xpose.msra.mxu0 0
        %1346 = vmatprep.subr.bf16.mxu0 0
        %1347 = vmatpush1.bf16.xpose.msra.mxu0 0
        %1348 = vmatprep.mubr.bf16.mxu0 0
        %1349 = vmatmul.mubr.bf16.gmra.mrb[0].mxu0 %v1311
        %v1350 = vpop.f32.mrb[0].mxu0
        %v1351 = vadd.f32 0.0, %v1350
        %v1352 = vpop.f32.mrb[0].mxu0
        %v1353 = vpop.f32.mrb[0].mxu0
        %v1354 = vpop.f32.mrb[0].mxu0
        %1355 = vdwg.mxu0
        %1356 = vrot.lane.b32.xlu0 %v857, 112
        %v1357 = vpop.permute.xlu0 %1356
        %1358 = vrot.lane.b32.xlu0 %v857, 80
        %v1359 = vpop.permute.xlu0 %1358
        %v1361 = vsel %vm861, %v1357, 0
        %v1364 = vsel %vm861, %v1359, 0
        %1366 = vmatprep.subr.bf16.mxu0 0
        %1367 = vmatpush1.bf16.xpose.msra.mxu0 %v1364
        %1368 = vmatprep.subr.bf16.mxu0 0
        %1369 = vmatpush1.bf16.xpose.msra.mxu0 0
        %1370 = vmatprep.subr.bf16.mxu0 0
        %1371 = vmatpush1.bf16.xpose.msra.mxu0 0
        %1372 = vmatprep.subr.bf16.mxu0 0
        %1373 = vmatpush1.bf16.xpose.msra.mxu0 0
        %1374 = vmatprep.subr.bf16.mxu0 0
        %1375 = vmatpush1.bf16.xpose.msra.mxu0 0
        %1376 = vmatprep.subr.bf16.mxu0 0
        %1377 = vmatpush1.bf16.xpose.msra.mxu0 0
        %1378 = vmatprep.subr.bf16.mxu0 0
        %1379 = vmatpush1.bf16.xpose.msra.mxu0 0
        %1380 = vmatprep.subr.bf16.mxu0 0
        %1381 = vmatpush1.bf16.xpose.msra.mxu0 0
        %1382 = vmatprep.subr.bf16.mxu0 0
        %1383 = vmatpush1.bf16.xpose.msra.mxu0 0
        %1384 = vmatprep.subr.bf16.mxu0 0
        %1385 = vmatpush1.bf16.xpose.msra.mxu0 0
        %1386 = vmatprep.subr.bf16.mxu0 0
        %1387 = vmatpush1.bf16.xpose.msra.mxu0 0
        %1388 = vmatprep.subr.bf16.mxu0 0
        %1389 = vmatpush1.bf16.xpose.msra.mxu0 0
        %1390 = vmatprep.subr.bf16.mxu0 0
        %1391 = vmatpush1.bf16.xpose.msra.mxu0 0
        %1392 = vmatprep.subr.bf16.mxu0 0
        %1393 = vmatpush1.bf16.xpose.msra.mxu0 0
        %1394 = vmatprep.subr.bf16.mxu0 0
        %1395 = vmatpush1.bf16.xpose.msra.mxu0 0
        %1396 = vmatprep.subr.bf16.mxu0 0
        %1397 = vmatpush1.bf16.xpose.msra.mxu0 0
        %1398 = vmatprep.mubr.bf16.mxu0 0
        %1399 = vmatmul.mubr.bf16.gmra.mrb[0].mxu0 %v1361
        %v1400 = vpop.f32.mrb[0].mxu0
        %v1401 = vadd.f32 0.0, %v1400
        %v1402 = vpop.f32.mrb[0].mxu0
        %v1403 = vpop.f32.mrb[0].mxu0
        %v1404 = vpop.f32.mrb[0].mxu0
        %1405 = vdwg.mxu0
        %v1406 = vmul.f32 %v1351, 0.35355338
        %v1407 = vmul.f32 %v1401, 0.35355338
        %v1408 = vadd.f32 %v1406, %v854
        %v1409 = vadd.f32 %v1407, %v855
        %v1410 = vsel %vm861, %v1408, -inf
        %1411 = vmax.xlane.f32.xlu0 %v1410
        %v1412 = vpop.xlane.xlu0 %1411
        %v1413 = vsel %vm861, %v1409, -inf
        %1414 = vmax.xlane.f32.xlu0 %v1413
        %v1415 = vpop.xlane.xlu0 %1414
        %v1416 = vsub.f32 %v1408, %v1412
        %v1417 = vsub.f32 %v1409, %v1415
        %v1418 = vmul.f32 %v1416, 1.442695
        %v1419 = vpow.pop %v1418
        %v1420 = vmul.f32 %v1417, 1.442695
        %v1421 = vpow.pop %v1420
        %v1422 = vsel %vm861, %v1419, 0.0
        %1423 = vadd.xlane.f32.xlu0 %v1422
        %v1424 = vpop.xlane.xlu0 %1423
        %v1425 = vsel %vm861, %v1421, 0.0
        %1426 = vadd.xlane.f32.xlu0 %v1425
        %v1427 = vpop.xlane.xlu0 %1426
        %v1428 = vrcp.pop %v1424
        %v1429 = vrcp.pop %v1427
        %v1430 = vmul.f32 %v1419, %v1428
        %v1431 = vmul.f32 %v1421, %v1429
        %v1432 = vpack.c.bf16 %v1430, %v1430
        %v1433 = vpack.c.bf16 %v1431, %v1431
        %1434 = vrot.lane.b32.xlu0 %v856, 48
        %v1435 = vpop.permute.xlu0 %1434
        %v1437 = vsel %vm861, %v1432, 0
        %v1440 = vsel %vm990, %v1435, 0
        %1442 = vmatprep.subr.bf16.mxu0 0
        %1443 = vmatpush1.bf16.msra.mxu0 %v1440
        %1444 = vmatprep.subr.bf16.mxu0 0
        %1445 = vmatpush1.bf16.msra.mxu0 0
        %1446 = vmatprep.subr.bf16.mxu0 0
        %1447 = vmatpush1.bf16.msra.mxu0 0
        %1448 = vmatprep.subr.bf16.mxu0 0
        %1449 = vmatpush1.bf16.msra.mxu0 0
        %1450 = vmatprep.subr.bf16.mxu0 0
        %1451 = vmatpush1.bf16.msra.mxu0 0
        %1452 = vmatprep.subr.bf16.mxu0 0
        %1453 = vmatpush1.bf16.msra.mxu0 0
        %1454 = vmatprep.subr.bf16.mxu0 0
        %1455 = vmatpush1.bf16.msra.mxu0 0
        %1456 = vmatprep.subr.bf16.mxu0 0
        %1457 = vmatpush1.bf16.msra.mxu0 0
        %1458 = vmatprep.subr.bf16.mxu0 0
        %1459 = vmatpush1.bf16.msra.mxu0 0
        %1460 = vmatprep.subr.bf16.mxu0 0
        %1461 = vmatpush1.bf16.msra.mxu0 0
        %1462 = vmatprep.subr.bf16.mxu0 0
        %1463 = vmatpush1.bf16.msra.mxu0 0
        %1464 = vmatprep.subr.bf16.mxu0 0
        %1465 = vmatpush1.bf16.msra.mxu0 0
        %1466 = vmatprep.subr.bf16.mxu0 0
        %1467 = vmatpush1.bf16.msra.mxu0 0
        %1468 = vmatprep.subr.bf16.mxu0 0
        %1469 = vmatpush1.bf16.msra.mxu0 0
        %1470 = vmatprep.subr.bf16.mxu0 0
        %1471 = vmatpush1.bf16.msra.mxu0 0
        %1472 = vmatprep.subr.bf16.mxu0 0
        %1473 = vmatpush1.bf16.msra.mxu0 0
        %1474 = vmatprep.mubr.bf16.mxu0 0
        %1475 = vmatmul.mubr.bf16.gmra.mrb[0].mxu0 %v1437
        %v1476 = vpop.f32.mrb[0].mxu0
        %v1477 = vadd.f32 0.0, %v1476
        %v1478 = vpop.f32.mrb[0].mxu0
        %v1479 = vpop.f32.mrb[0].mxu0
        %v1480 = vpop.f32.mrb[0].mxu0
        %1481 = vdwg.mxu0
        %1482 = vrot.lane.b32.xlu0 %v857, 48
        %v1483 = vpop.permute.xlu0 %1482
        %v1485 = vsel %vm861, %v1433, 0
        %v1488 = vsel %vm990, %v1483, 0
        %1490 = vmatprep.subr.bf16.mxu0 0
        %1491 = vmatpush1.bf16.msra.mxu0 %v1488
        %1492 = vmatprep.subr.bf16.mxu0 0
        %1493 = vmatpush1.bf16.msra.mxu0 0
        %1494 = vmatprep.subr.bf16.mxu0 0
        %1495 = vmatpush1.bf16.msra.mxu0 0
        %1496 = vmatprep.subr.bf16.mxu0 0
        %1497 = vmatpush1.bf16.msra.mxu0 0
        %1498 = vmatprep.subr.bf16.mxu0 0
        %1499 = vmatpush1.bf16.msra.mxu0 0
        %1500 = vmatprep.subr.bf16.mxu0 0
        %1501 = vmatpush1.bf16.msra.mxu0 0
        %1502 = vmatprep.subr.bf16.mxu0 0
        %1503 = vmatpush1.bf16.msra.mxu0 0
        %1504 = vmatprep.subr.bf16.mxu0 0
        %1505 = vmatpush1.bf16.msra.mxu0 0
        %1506 = vmatprep.subr.bf16.mxu0 0
        %1507 = vmatpush1.bf16.msra.mxu0 0
        %1508 = vmatprep.subr.bf16.mxu0 0
        %1509 = vmatpush1.bf16.msra.mxu0 0
        %1510 = vmatprep.subr.bf16.mxu0 0
        %1511 = vmatpush1.bf16.msra.mxu0 0
        %1512 = vmatprep.subr.bf16.mxu0 0
        %1513 = vmatpush1.bf16.msra.mxu0 0
        %1514 = vmatprep.subr.bf16.mxu0 0
        %1515 = vmatpush1.bf16.msra.mxu0 0
        %1516 = vmatprep.subr.bf16.mxu0 0
        %1517 = vmatpush1.bf16.msra.mxu0 0
        %1518 = vmatprep.subr.bf16.mxu0 0
        %1519 = vmatpush1.bf16.msra.mxu0 0
        %1520 = vmatprep.subr.bf16.mxu0 0
        %1521 = vmatpush1.bf16.msra.mxu0 0
        %1522 = vmatprep.mubr.bf16.mxu0 0
        %1523 = vmatmul.mubr.bf16.gmra.mrb[0].mxu0 %v1485
        %v1524 = vpop.f32.mrb[0].mxu0
        %v1525 = vadd.f32 0.0, %v1524
        %v1526 = vpop.f32.mrb[0].mxu0
        %v1527 = vpop.f32.mrb[0].mxu0
        %v1528 = vpop.f32.mrb[0].mxu0
        %1529 = vdwg.mxu0
        %1530 = vrot.lane.b32.xlu0 %v856, 104
        %v1531 = vpop.permute.xlu0 %1530
        %1532 = vrot.lane.b32.xlu0 %v856, 72
        %v1533 = vpop.permute.xlu0 %1532
        %v1535 = vsel %vm861, %v1531, 0
        %v1538 = vsel %vm861, %v1533, 0
        %1540 = vmatprep.subr.bf16.mxu0 0
        %1541 = vmatpush1.bf16.xpose.msra.mxu0 %v1538
        %1542 = vmatprep.subr.bf16.mxu0 0
        %1543 = vmatpush1.bf16.xpose.msra.mxu0 0
        %1544 = vmatprep.subr.bf16.mxu0 0
        %1545 = vmatpush1.bf16.xpose.msra.mxu0 0
        %1546 = vmatprep.subr.bf16.mxu0 0
        %1547 = vmatpush1.bf16.xpose.msra.mxu0 0
        %1548 = vmatprep.subr.bf16.mxu0 0
        %1549 = vmatpush1.bf16.xpose.msra.mxu0 0
        %1550 = vmatprep.subr.bf16.mxu0 0
        %1551 = vmatpush1.bf16.xpose.msra.mxu0 0
        %1552 = vmatprep.subr.bf16.mxu0 0
        %1553 = vmatpush1.bf16.xpose.msra.mxu0 0
        %1554 = vmatprep.subr.bf16.mxu0 0
        %1555 = vmatpush1.bf16.xpose.msra.mxu0 0
        %1556 = vmatprep.subr.bf16.mxu0 0
        %1557 = vmatpush1.bf16.xpose.msra.mxu0 0
        %1558 = vmatprep.subr.bf16.mxu0 0
        %1559 = vmatpush1.bf16.xpose.msra.mxu0 0
        %1560 = vmatprep.subr.bf16.mxu0 0
        %1561 = vmatpush1.bf16.xpose.msra.mxu0 0
        %1562 = vmatprep.subr.bf16.mxu0 0
        %1563 = vmatpush1.bf16.xpose.msra.mxu0 0
        %1564 = vmatprep.subr.bf16.mxu0 0
        %1565 = vmatpush1.bf16.xpose.msra.mxu0 0
        %1566 = vmatprep.subr.bf16.mxu0 0
        %1567 = vmatpush1.bf16.xpose.msra.mxu0 0
        %1568 = vmatprep.subr.bf16.mxu0 0
        %1569 = vmatpush1.bf16.xpose.msra.mxu0 0
        %1570 = vmatprep.subr.bf16.mxu0 0
        %1571 = vmatpush1.bf16.xpose.msra.mxu0 0
        %1572 = vmatprep.mubr.bf16.mxu0 0
        %1573 = vmatmul.mubr.bf16.gmra.mrb[0].mxu0 %v1535
        %v1574 = vpop.f32.mrb[0].mxu0
        %v1575 = vadd.f32 0.0, %v1574
        %v1576 = vpop.f32.mrb[0].mxu0
        %v1577 = vpop.f32.mrb[0].mxu0
        %v1578 = vpop.f32.mrb[0].mxu0
        %1579 = vdwg.mxu0
        %1580 = vrot.lane.b32.xlu0 %v857, 104
        %v1581 = vpop.permute.xlu0 %1580
        %1582 = vrot.lane.b32.xlu0 %v857, 72
        %v1583 = vpop.permute.xlu0 %1582
        %v1585 = vsel %vm861, %v1581, 0
        %v1588 = vsel %vm861, %v1583, 0
        %1590 = vmatprep.subr.bf16.mxu0 0
        %1591 = vmatpush1.bf16.xpose.msra.mxu0 %v1588
        %1592 = vmatprep.subr.bf16.mxu0 0
        %1593 = vmatpush1.bf16.xpose.msra.mxu0 0
        %1594 = vmatprep.subr.bf16.mxu0 0
        %1595 = vmatpush1.bf16.xpose.msra.mxu0 0
        %1596 = vmatprep.subr.bf16.mxu0 0
        %1597 = vmatpush1.bf16.xpose.msra.mxu0 0
        %1598 = vmatprep.subr.bf16.mxu0 0
        %1599 = vmatpush1.bf16.xpose.msra.mxu0 0
        %1600 = vmatprep.subr.bf16.mxu0 0
        %1601 = vmatpush1.bf16.xpose.msra.mxu0 0
        %1602 = vmatprep.subr.bf16.mxu0 0
        %1603 = vmatpush1.bf16.xpose.msra.mxu0 0
        %1604 = vmatprep.subr.bf16.mxu0 0
        %1605 = vmatpush1.bf16.xpose.msra.mxu0 0
        %1606 = vmatprep.subr.bf16.mxu0 0
        %1607 = vmatpush1.bf16.xpose.msra.mxu0 0
        %1608 = vmatprep.subr.bf16.mxu0 0
        %1609 = vmatpush1.bf16.xpose.msra.mxu0 0
        %1610 = vmatprep.subr.bf16.mxu0 0
        %1611 = vmatpush1.bf16.xpose.msra.mxu0 0
        %1612 = vmatprep.subr.bf16.mxu0 0
        %1613 = vmatpush1.bf16.xpose.msra.mxu0 0
        %1614 = vmatprep.subr.bf16.mxu0 0
        %1615 = vmatpush1.bf16.xpose.msra.mxu0 0
        %1616 = vmatprep.subr.bf16.mxu0 0
        %1617 = vmatpush1.bf16.xpose.msra.mxu0 0
        %1618 = vmatprep.subr.bf16.mxu0 0
        %1619 = vmatpush1.bf16.xpose.msra.mxu0 0
        %1620 = vmatprep.subr.bf16.mxu0 0
        %1621 = vmatpush1.bf16.xpose.msra.mxu0 0
        %1622 = vmatprep.mubr.bf16.mxu0 0
        %1623 = vmatmul.mubr.bf16.gmra.mrb[0].mxu0 %v1585
        %v1624 = vpop.f32.mrb[0].mxu0
        %v1625 = vadd.f32 0.0, %v1624
        %v1626 = vpop.f32.mrb[0].mxu0
        %v1627 = vpop.f32.mrb[0].mxu0
        %v1628 = vpop.f32.mrb[0].mxu0
        %1629 = vdwg.mxu0
        %v1630 = vmul.f32 %v1575, 0.35355338
        %v1631 = vmul.f32 %v1625, 0.35355338
        %v1632 = vadd.f32 %v1630, %v854
        %v1633 = vadd.f32 %v1631, %v855
        %v1634 = vsel %vm861, %v1632, -inf
        %1635 = vmax.xlane.f32.xlu0 %v1634
        %v1636 = vpop.xlane.xlu0 %1635
        %v1637 = vsel %vm861, %v1633, -inf
        %1638 = vmax.xlane.f32.xlu0 %v1637
        %v1639 = vpop.xlane.xlu0 %1638
        %v1640 = vsub.f32 %v1632, %v1636
        %v1641 = vsub.f32 %v1633, %v1639
        %v1642 = vmul.f32 %v1640, 1.442695
        %v1643 = vpow.pop %v1642
        %v1644 = vmul.f32 %v1641, 1.442695
        %v1645 = vpow.pop %v1644
        %v1646 = vsel %vm861, %v1643, 0.0
        %1647 = vadd.xlane.f32.xlu0 %v1646
        %v1648 = vpop.xlane.xlu0 %1647
        %v1649 = vsel %vm861, %v1645, 0.0
        %1650 = vadd.xlane.f32.xlu0 %v1649
        %v1651 = vpop.xlane.xlu0 %1650
        %v1652 = vrcp.pop %v1648
        %v1653 = vrcp.pop %v1651
        %v1654 = vmul.f32 %v1643, %v1652
        %v1655 = vmul.f32 %v1645, %v1653
        %v1656 = vpack.c.bf16 %v1654, %v1654
        %v1657 = vpack.c.bf16 %v1655, %v1655
        %1658 = vrot.lane.b32.xlu0 %v856, 40
        %v1659 = vpop.permute.xlu0 %1658
        %v1661 = vsel %vm861, %v1656, 0
        %v1664 = vsel %vm990, %v1659, 0
        %1666 = vmatprep.subr.bf16.mxu0 0
        %1667 = vmatpush1.bf16.msra.mxu0 %v1664
        %1668 = vmatprep.subr.bf16.mxu0 0
        %1669 = vmatpush1.bf16.msra.mxu0 0
        %1670 = vmatprep.subr.bf16.mxu0 0
        %1671 = vmatpush1.bf16.msra.mxu0 0
        %1672 = vmatprep.subr.bf16.mxu0 0
        %1673 = vmatpush1.bf16.msra.mxu0 0
        %1674 = vmatprep.subr.bf16.mxu0 0
        %1675 = vmatpush1.bf16.msra.mxu0 0
        %1676 = vmatprep.subr.bf16.mxu0 0
        %1677 = vmatpush1.bf16.msra.mxu0 0
        %1678 = vmatprep.subr.bf16.mxu0 0
        %1679 = vmatpush1.bf16.msra.mxu0 0
        %1680 = vmatprep.subr.bf16.mxu0 0
        %1681 = vmatpush1.bf16.msra.mxu0 0
        %1682 = vmatprep.subr.bf16.mxu0 0
        %1683 = vmatpush1.bf16.msra.mxu0 0
        %1684 = vmatprep.subr.bf16.mxu0 0
        %1685 = vmatpush1.bf16.msra.mxu0 0
        %1686 = vmatprep.subr.bf16.mxu0 0
        %1687 = vmatpush1.bf16.msra.mxu0 0
        %1688 = vmatprep.subr.bf16.mxu0 0
        %1689 = vmatpush1.bf16.msra.mxu0 0
        %1690 = vmatprep.subr.bf16.mxu0 0
        %1691 = vmatpush1.bf16.msra.mxu0 0
        %1692 = vmatprep.subr.bf16.mxu0 0
        %1693 = vmatpush1.bf16.msra.mxu0 0
        %1694 = vmatprep.subr.bf16.mxu0 0
        %1695 = vmatpush1.bf16.msra.mxu0 0
        %1696 = vmatprep.subr.bf16.mxu0 0
        %1697 = vmatpush1.bf16.msra.mxu0 0
        %1698 = vmatprep.mubr.bf16.mxu0 0
        %1699 = vmatmul.mubr.bf16.gmra.mrb[0].mxu0 %v1661
        %v1700 = vpop.f32.mrb[0].mxu0
        %v1701 = vadd.f32 0.0, %v1700
        %v1702 = vpop.f32.mrb[0].mxu0
        %v1703 = vpop.f32.mrb[0].mxu0
        %v1704 = vpop.f32.mrb[0].mxu0
        %1705 = vdwg.mxu0
        %1706 = vrot.lane.b32.xlu0 %v857, 40
        %v1707 = vpop.permute.xlu0 %1706
        %v1709 = vsel %vm861, %v1657, 0
        %v1712 = vsel %vm990, %v1707, 0
        %1714 = vmatprep.subr.bf16.mxu0 0
        %1715 = vmatpush1.bf16.msra.mxu0 %v1712
        %1716 = vmatprep.subr.bf16.mxu0 0
        %1717 = vmatpush1.bf16.msra.mxu0 0
        %1718 = vmatprep.subr.bf16.mxu0 0
        %1719 = vmatpush1.bf16.msra.mxu0 0
        %1720 = vmatprep.subr.bf16.mxu0 0
        %1721 = vmatpush1.bf16.msra.mxu0 0
        %1722 = vmatprep.subr.bf16.mxu0 0
        %1723 = vmatpush1.bf16.msra.mxu0 0
        %1724 = vmatprep.subr.bf16.mxu0 0
        %1725 = vmatpush1.bf16.msra.mxu0 0
        %1726 = vmatprep.subr.bf16.mxu0 0
        %1727 = vmatpush1.bf16.msra.mxu0 0
        %1728 = vmatprep.subr.bf16.mxu0 0
        %1729 = vmatpush1.bf16.msra.mxu0 0
        %1730 = vmatprep.subr.bf16.mxu0 0
        %1731 = vmatpush1.bf16.msra.mxu0 0
        %1732 = vmatprep.subr.bf16.mxu0 0
        %1733 = vmatpush1.bf16.msra.mxu0 0
        %1734 = vmatprep.subr.bf16.mxu0 0
        %1735 = vmatpush1.bf16.msra.mxu0 0
        %1736 = vmatprep.subr.bf16.mxu0 0
        %1737 = vmatpush1.bf16.msra.mxu0 0
        %1738 = vmatprep.subr.bf16.mxu0 0
        %1739 = vmatpush1.bf16.msra.mxu0 0
        %1740 = vmatprep.subr.bf16.mxu0 0
        %1741 = vmatpush1.bf16.msra.mxu0 0
        %1742 = vmatprep.subr.bf16.mxu0 0
        %1743 = vmatpush1.bf16.msra.mxu0 0
        %1744 = vmatprep.subr.bf16.mxu0 0
        %1745 = vmatpush1.bf16.msra.mxu0 0
        %1746 = vmatprep.mubr.bf16.mxu0 0
        %1747 = vmatmul.mubr.bf16.gmra.mrb[0].mxu0 %v1709
        %v1748 = vpop.f32.mrb[0].mxu0
        %v1749 = vadd.f32 0.0, %v1748
        %v1750 = vpop.f32.mrb[0].mxu0
        %v1751 = vpop.f32.mrb[0].mxu0
        %v1752 = vpop.f32.mrb[0].mxu0
        %1753 = vdwg.mxu0
        %1756 = vrot.lane.b32.xlu0 %v1253, 8
        %v1757 = vpop.permute.xlu0 %1756
        %1758 = vrot.lane.b32.xlu0 %v1301, 8
        %v1759 = vpop.permute.xlu0 %1758
        %1764 = vrot.lane.b32.xlu0 %v1477, 16
        %v1765 = vpop.permute.xlu0 %1764
        %1766 = vrot.lane.b32.xlu0 %v1525, 16
        %v1767 = vpop.permute.xlu0 %1766
        %1772 = vrot.lane.b32.xlu0 %v1701, 24
        %v1773 = vpop.permute.xlu0 %1772
        %1774 = vrot.lane.b32.xlu0 %v1749, 24
        %v1775 = vpop.permute.xlu0 %1774
        %v1778 = vsel %vm861, %v1029, %v1757
        %v1779 = vsel %vm861, %v1077, %v1759
        %vm1780 = vcmask 130048
        %v1781 = vsel %vm1780, %v1778, %v1765
        %v1782 = vsel %vm1780, %v1779, %v1767
        %vm1783 = vcmask 195584
        %v1784 = vsel %vm1783, %v1781, %v1773
        %v1785 = vsel %vm1783, %v1782, %v1775
        %v1786 = vpack.c.bf16 %v1785, %v1784
        %v1787 = vlaneseq
        %v1788 = vshrl.u32 %v1787, 7
        %v1789 = vsub.s32 0, %v1788
        %v1790 = vrot.slane %v853, %v1789
        %v1795 = vunpack.c.l.b16 %v849
        %v1796 = vunpack.c.l.b16 %v850
        %v1797 = vunpack.c.l.b16 %v851
        %v1798 = vunpack.c.l.b16 %v852
        %v1799 = vpack.c.b16 %v1796, %v1795
        %v1800 = vpack.c.b16 %v1798, %v1797
        %v1804 = vsel %vm729, %v1786, 0
        %1806 = vmatprep.subr.bf16.mxu0 0
        %1807 = vmatpush1.bf16.msra.mxu0 %v1799
        %1808 = vmatprep.subr.bf16.mxu0 0
        %1809 = vmatpush1.bf16.msra.mxu0 %v1800
        %1810 = vmatprep.subr.bf16.mxu0 0
        %1811 = vmatpush1.bf16.msra.mxu0 0
        %1812 = vmatprep.subr.bf16.mxu0 0
        %1813 = vmatpush1.bf16.msra.mxu0 0
        %1814 = vmatprep.subr.bf16.mxu0 0
        %1815 = vmatpush1.bf16.msra.mxu0 0
        %1816 = vmatprep.subr.bf16.mxu0 0
        %1817 = vmatpush1.bf16.msra.mxu0 0
        %1818 = vmatprep.subr.bf16.mxu0 0
        %1819 = vmatpush1.bf16.msra.mxu0 0
        %1820 = vmatprep.subr.bf16.mxu0 0
        %1821 = vmatpush1.bf16.msra.mxu0 0
        %1822 = vmatprep.subr.bf16.mxu0 0
        %1823 = vmatpush1.bf16.msra.mxu0 0
        %1824 = vmatprep.subr.bf16.mxu0 0
        %1825 = vmatpush1.bf16.msra.mxu0 0
        %1826 = vmatprep.subr.bf16.mxu0 0
        %1827 = vmatpush1.bf16.msra.mxu0 0
        %1828 = vmatprep.subr.bf16.mxu0 0
        %1829 = vmatpush1.bf16.msra.mxu0 0
        %1830 = vmatprep.subr.bf16.mxu0 0
        %1831 = vmatpush1.bf16.msra.mxu0 0
        %1832 = vmatprep.subr.bf16.mxu0 0
        %1833 = vmatpush1.bf16.msra.mxu0 0
        %1834 = vmatprep.subr.bf16.mxu0 0
        %1835 = vmatpush1.bf16.msra.mxu0 0
        %1836 = vmatprep.subr.bf16.mxu0 0
        %1837 = vmatpush1.bf16.msra.mxu0 0
        %1838 = vmatprep.mubr.bf16.mxu0 0
        %1839 = vmatmul.mubr.bf16.gmra.mrb[0].mxu0 %v1804
        %v1840 = vpop.f32.mrb[0].mxu0
        %v1841 = vadd.f32 %v1790, %v1840
        %v1842 = vpop.f32.mrb[0].mxu0
        %v1843 = vpop.f32.mrb[0].mxu0
        %v1844 = vadd.f32 %v1790, %v1843
        %v1845 = vpop.f32.mrb[0].mxu0
        %1846 = vdwg.mxu0
        %v1847 = vadd.f32 %v723, %v1841
        %v1848 = vadd.f32 %v724, %v1844
        %v1849 = vld [vmem:[%s640 + $0x2] sm:$0x1]
        %v1850 = vld [vmem:[%s640 + $0x3] sm:$0x1]
        %v1851 = vsel %vm729, %v1847, 0.0
        %1852 = vadd.xlane.f32.xlu0 %v1851
        %v1853 = vpop.xlane.xlu0 %1852
        %v1854 = vsel %vm729, %v1848, 0.0
        %1855 = vadd.xlane.f32.xlu0 %v1854
        %v1856 = vpop.xlane.xlu0 %1855
        %v1857 = vmul.f32 %v1853, %v736
        %v1858 = vmul.f32 %v1856, %v736
        %v1859 = vsub.f32 %v1847, %v1857
        %v1860 = vsub.f32 %v1848, %v1858
        %v1861 = vmul.f32 %v1859, %v1859
        %v1862 = vmul.f32 %v1860, %v1860
        %v1863 = vsel %vm729, %v1861, 0.0
        %1864 = vadd.xlane.f32.xlu0 %v1863
        %v1865 = vpop.xlane.xlu0 %1864
        %v1866 = vsel %vm729, %v1862, 0.0
        %1867 = vadd.xlane.f32.xlu0 %v1866
        %v1868 = vpop.xlane.xlu0 %1867
        %v1869 = vmul.f32 %v1865, 0.032258064
        %v1870 = vmul.f32 %v1868, 0.032258064
        %v1871 = vrsqrt.pop %v1869
        %v1872 = vmul.f32 %v1869, %v1871
        %vm1873 = vcmp.eq.f32.partialorder %v1869, inf
        %v1874 = vsel %vm1873, %v1869, %v1872
        %vm1875 = vcmp.eq.f32.partialorder %v1869, 0.0
        %v1876 = vand.u32 %v1869, 2147483648
        %v1877 = vsel %vm1875, %v1876, %v1874
        %v1878 = vrsqrt.pop %v1870
        %v1879 = vmul.f32 %v1870, %v1878
        %vm1880 = vcmp.eq.f32.partialorder %v1870, inf
        %v1881 = vsel %vm1880, %v1870, %v1879
        %vm1882 = vcmp.eq.f32.partialorder %v1870, 0.0
        %v1883 = vand.u32 %v1870, 2147483648
        %v1884 = vsel %vm1882, %v1883, %v1881
        %v1885 = vadd.f32 %v1877, 1e-06
        %v1886 = vadd.f32 %v1884, 1e-06
        %v1887 = vrcp.pop %v1885
        %v1888 = vrcp.pop %v1886
        %v1889 = vlaneseq
        %v1890 = vshrl.u32 %v1889, 7
        %v1891 = vsub.s32 0, %v1890
        %v1892 = vrot.slane %v1849, %v1891
        %v1893 = vmul.f32 %v1892, %v1859
        %v1894 = vmul.f32 %v1892, %v1860
        %v1895 = vmul.f32 %v1893, %v1887
        %v1896 = vmul.f32 %v1894, %v1888
        %v1897 = vlaneseq
        %v1898 = vshrl.u32 %v1897, 7
        %v1899 = vsub.s32 0, %v1898
        %v1900 = vrot.slane %v1850, %v1899
        %v1901 = vadd.f32 %v1895, %v1900
        %v1902 = vadd.f32 %v1896, %v1900
        %s1903 = scalar_lea.vmem %s595, 16 [#allocation11]
        %v1904 = vld [vmem:[%s1903] sm:$0xf]
        %v1905 = vld [vmem:[%s1903 + $0x4] sm:$0xf]
        %v1906 = vld [vmem:[%s1903 + $0x8] sm:$0xf]
        %v1907 = vld [vmem:[%s1903 + $0xc] sm:$0xf]
        %v1908 = vld [vmem:[%s631 + $0x1] sm:$0x1]
        %v1909 = vpack.c.bf16 %v1902, %v1901
        %v1910 = vlaneseq
        %v1911 = vshrl.u32 %v1910, 7
        %v1912 = vsub.s32 0, %v1911
        %v1913 = vrot.slane %v1908, %v1912
        %v1918 = vunpack.c.l.b16 %v1904
        %v1919 = vunpack.c.l.b16 %v1905
        %v1920 = vunpack.c.l.b16 %v1906
        %v1921 = vunpack.c.l.b16 %v1907
        %v1922 = vpack.c.b16 %v1919, %v1918
        %v1923 = vpack.c.b16 %v1921, %v1920
        %v1927 = vsel %vm729, %v1909, 0
        %1929 = vmatprep.subr.bf16.mxu0 0
        %1930 = vmatpush1.bf16.msra.mxu0 %v1922
        %1931 = vmatprep.subr.bf16.mxu0 0
        %1932 = vmatpush1.bf16.msra.mxu0 %v1923
        %1933 = vmatprep.subr.bf16.mxu0 0
        %1934 = vmatpush1.bf16.msra.mxu0 0
        %1935 = vmatprep.subr.bf16.mxu0 0
        %1936 = vmatpush1.bf16.msra.mxu0 0
        %1937 = vmatprep.subr.bf16.mxu0 0
        %1938 = vmatpush1.bf16.msra.mxu0 0
        %1939 = vmatprep.subr.bf16.mxu0 0
        %1940 = vmatpush1.bf16.msra.mxu0 0
        %1941 = vmatprep.subr.bf16.mxu0 0
        %1942 = vmatpush1.bf16.msra.mxu0 0
        %1943 = vmatprep.subr.bf16.mxu0 0
        %1944 = vmatpush1.bf16.msra.mxu0 0
        %1945 = vmatprep.subr.bf16.mxu0 0
        %1946 = vmatpush1.bf16.msra.mxu0 0
        %1947 = vmatprep.subr.bf16.mxu0 0
        %1948 = vmatpush1.bf16.msra.mxu0 0
        %1949 = vmatprep.subr.bf16.mxu0 0
        %1950 = vmatpush1.bf16.msra.mxu0 0
        %1951 = vmatprep.subr.bf16.mxu0 0
        %1952 = vmatpush1.bf16.msra.mxu0 0
        %1953 = vmatprep.subr.bf16.mxu0 0
        %1954 = vmatpush1.bf16.msra.mxu0 0
        %1955 = vmatprep.subr.bf16.mxu0 0
        %1956 = vmatpush1.bf16.msra.mxu0 0
        %1957 = vmatprep.subr.bf16.mxu0 0
        %1958 = vmatpush1.bf16.msra.mxu0 0
        %1959 = vmatprep.subr.bf16.mxu0 0
        %1960 = vmatpush1.bf16.msra.mxu0 0
        %1961 = vmatprep.mubr.bf16.mxu0 0
        %1962 = vmatmul.mubr.bf16.gmra.mrb[0].mxu0 %v1927
        %v1963 = vpop.f32.mrb[0].mxu0
        %v1964 = vadd.f32 %v1913, %v1963
        %v1965 = vpop.f32.mrb[0].mxu0
        %v1966 = vpop.f32.mrb[0].mxu0
        %v1967 = vadd.f32 %v1913, %v1966
        %v1968 = vpop.f32.mrb[0].mxu0
        %1969 = vdwg.mxu0
        %v1970 = vpack.c.bf16 %v726, %v725
        %1971 = vrot.lane.b32.xlu0 %v1922, 96
        %v1972 = vpop.permute.xlu0 %1971
        %1973 = vrot.lane.b32.xlu0 %v1923, 96
        %v1974 = vpop.permute.xlu0 %1973
        %1978 = vrot.lane.b32.xlu0 %v1913, 96
        %v1979 = vpop.permute.xlu0 %1978
        %v1982 = vsel %vm729, %v1970, 0
        %1984 = vmatprep.subr.bf16.mxu0 0
        %1985 = vmatpush1.bf16.msra.mxu0 %v1972
        %1986 = vmatprep.subr.bf16.mxu0 0
        %1987 = vmatpush1.bf16.msra.mxu0 %v1974
        %1988 = vmatprep.subr.bf16.mxu0 0
        %1989 = vmatpush1.bf16.msra.mxu0 0
        %1990 = vmatprep.subr.bf16.mxu0 0
        %1991 = vmatpush1.bf16.msra.mxu0 0
        %1992 = vmatprep.subr.bf16.mxu0 0
        %1993 = vmatpush1.bf16.msra.mxu0 0
        %1994 = vmatprep.subr.bf16.mxu0 0
        %1995 = vmatpush1.bf16.msra.mxu0 0
        %1996 = vmatprep.subr.bf16.mxu0 0
        %1997 = vmatpush1.bf16.msra.mxu0 0
        %1998 = vmatprep.subr.bf16.mxu0 0
        %1999 = vmatpush1.bf16.msra.mxu0 0
        %2000 = vmatprep.subr.bf16.mxu0 0
        %2001 = vmatpush1.bf16.msra.mxu0 0
        %2002 = vmatprep.subr.bf16.mxu0 0
        %2003 = vmatpush1.bf16.msra.mxu0 0
        %2004 = vmatprep.subr.bf16.mxu0 0
        %2005 = vmatpush1.bf16.msra.mxu0 0
        %2006 = vmatprep.subr.bf16.mxu0 0
        %2007 = vmatpush1.bf16.msra.mxu0 0
        %2008 = vmatprep.subr.bf16.mxu0 0
        %2009 = vmatpush1.bf16.msra.mxu0 0
        %2010 = vmatprep.subr.bf16.mxu0 0
        %2011 = vmatpush1.bf16.msra.mxu0 0
        %2012 = vmatprep.subr.bf16.mxu0 0
        %2013 = vmatpush1.bf16.msra.mxu0 0
        %2014 = vmatprep.subr.bf16.mxu0 0
        %2015 = vmatpush1.bf16.msra.mxu0 0
        %2016 = vmatprep.mubr.bf16.mxu0 0
        %2017 = vmatmul.mubr.bf16.gmra.mrb[0].mxu0 %v1982
        %v2018 = vpop.f32.mrb[0].mxu0
        %v2019 = vadd.f32 %v1979, %v2018
        %v2020 = vpop.f32.mrb[0].mxu0
        %v2021 = vpop.f32.mrb[0].mxu0
        %v2022 = vadd.f32 %v1979, %v2021
        %v2023 = vpop.f32.mrb[0].mxu0
        %2024 = vdwg.mxu0
        %s2025 = scalar_lea.vmem %s604, 16 [#allocation13]
        %v2026 = vld [vmem:[%s2025] sm:$0xf]
        %v2027 = vld [vmem:[%s2025 + $0x4] sm:$0xf]
        %v2028 = vld [vmem:[%s2025 + $0x8] sm:$0xf]
        %v2029 = vld [vmem:[%s2025 + $0xc] sm:$0xf]
        %v2030 = vld [vmem:[%s640 + $0x7] sm:$0x1]
        %v2031 = vld [vmem:[#allocation8] sm:$0x1]
        %v2032 = vld [vmem:[#allocation8 + $0x1] sm:$0x1]
        %v2033 = vpack.c.bf16 %v1964, %v1964
        %v2034 = vpack.c.bf16 %v1967, %v1967
        %v2035 = vpack.c.bf16 %v2019, %v2019
        %v2036 = vpack.c.bf16 %v2022, %v2022
        %v2038 = vsel %vm861, %v2033, 0
        %v2041 = vsel %vm861, %v2035, 0
        %2043 = vmatprep.subr.bf16.mxu0 0
        %2044 = vmatpush1.bf16.xpose.msra.mxu0 %v2041
        %2045 = vmatprep.subr.bf16.mxu0 0
        %2046 = vmatpush1.bf16.xpose.msra.mxu0 0
        %2047 = vmatprep.subr.bf16.mxu0 0
        %2048 = vmatpush1.bf16.xpose.msra.mxu0 0
        %2049 = vmatprep.subr.bf16.mxu0 0
        %2050 = vmatpush1.bf16.xpose.msra.mxu0 0
        %2051 = vmatprep.subr.bf16.mxu0 0
        %2052 = vmatpush1.bf16.xpose.msra.mxu0 0
        %2053 = vmatprep.subr.bf16.mxu0 0
        %2054 = vmatpush1.bf16.xpose.msra.mxu0 0
        %2055 = vmatprep.subr.bf16.mxu0 0
        %2056 = vmatpush1.bf16.xpose.msra.mxu0 0
        %2057 = vmatprep.subr.bf16.mxu0 0
        %2058 = vmatpush1.bf16.xpose.msra.mxu0 0
        %2059 = vmatprep.subr.bf16.mxu0 0
        %2060 = vmatpush1.bf16.xpose.msra.mxu0 0
        %2061 = vmatprep.subr.bf16.mxu0 0
        %2062 = vmatpush1.bf16.xpose.msra.mxu0 0
        %2063 = vmatprep.subr.bf16.mxu0 0
        %2064 = vmatpush1.bf16.xpose.msra.mxu0 0
        %2065 = vmatprep.subr.bf16.mxu0 0
        %2066 = vmatpush1.bf16.xpose.msra.mxu0 0
        %2067 = vmatprep.subr.bf16.mxu0 0
        %2068 = vmatpush1.bf16.xpose.msra.mxu0 0
        %2069 = vmatprep.subr.bf16.mxu0 0
        %2070 = vmatpush1.bf16.xpose.msra.mxu0 0
        %2071 = vmatprep.subr.bf16.mxu0 0
        %2072 = vmatpush1.bf16.xpose.msra.mxu0 0
        %2073 = vmatprep.subr.bf16.mxu0 0
        %2074 = vmatpush1.bf16.xpose.msra.mxu0 0
        %2075 = vmatprep.mubr.bf16.mxu0 0
        %2076 = vmatmul.mubr.bf16.gmra.mrb[0].mxu0 %v2038
        %v2077 = vpop.f32.mrb[0].mxu0
        %v2078 = vadd.f32 0.0, %v2077
        %v2079 = vpop.f32.mrb[0].mxu0
        %v2080 = vpop.f32.mrb[0].mxu0
        %v2081 = vpop.f32.mrb[0].mxu0
        %2082 = vdwg.mxu0
        %v2084 = vsel %vm861, %v2034, 0
        %v2087 = vsel %vm861, %v2036, 0
        %2089 = vmatprep.subr.bf16.mxu0 0
        %2090 = vmatpush1.bf16.xpose.msra.mxu0 %v2087
        %2091 = vmatprep.subr.bf16.mxu0 0
        %2092 = vmatpush1.bf16.xpose.msra.mxu0 0
        %2093 = vmatprep.subr.bf16.mxu0 0
        %2094 = vmatpush1.bf16.xpose.msra.mxu0 0
        %2095 = vmatprep.subr.bf16.mxu0 0
        %2096 = vmatpush1.bf16.xpose.msra.mxu0 0
        %2097 = vmatprep.subr.bf16.mxu0 0
        %2098 = vmatpush1.bf16.xpose.msra.mxu0 0
        %2099 = vmatprep.subr.bf16.mxu0 0
        %2100 = vmatpush1.bf16.xpose.msra.mxu0 0
        %2101 = vmatprep.subr.bf16.mxu0 0
        %2102 = vmatpush1.bf16.xpose.msra.mxu0 0
        %2103 = vmatprep.subr.bf16.mxu0 0
        %2104 = vmatpush1.bf16.xpose.msra.mxu0 0
        %2105 = vmatprep.subr.bf16.mxu0 0
        %2106 = vmatpush1.bf16.xpose.msra.mxu0 0
        %2107 = vmatprep.subr.bf16.mxu0 0
        %2108 = vmatpush1.bf16.xpose.msra.mxu0 0
        %2109 = vmatprep.subr.bf16.mxu0 0
        %2110 = vmatpush1.bf16.xpose.msra.mxu0 0
        %2111 = vmatprep.subr.bf16.mxu0 0
        %2112 = vmatpush1.bf16.xpose.msra.mxu0 0
        %2113 = vmatprep.subr.bf16.mxu0 0
        %2114 = vmatpush1.bf16.xpose.msra.mxu0 0
        %2115 = vmatprep.subr.bf16.mxu0 0
        %2116 = vmatpush1.bf16.xpose.msra.mxu0 0
        %2117 = vmatprep.subr.bf16.mxu0 0
        %2118 = vmatpush1.bf16.xpose.msra.mxu0 0
        %2119 = vmatprep.subr.bf16.mxu0 0
        %2120 = vmatpush1.bf16.xpose.msra.mxu0 0
        %2121 = vmatprep.mubr.bf16.mxu0 0
        %2122 = vmatmul.mubr.bf16.gmra.mrb[0].mxu0 %v2084
        %v2123 = vpop.f32.mrb[0].mxu0
        %v2124 = vadd.f32 0.0, %v2123
        %v2125 = vpop.f32.mrb[0].mxu0
        %v2126 = vpop.f32.mrb[0].mxu0
        %v2127 = vpop.f32.mrb[0].mxu0
        %2128 = vdwg.mxu0
        %v2129 = vmul.f32 %v2078, 0.35355338
        %v2130 = vmul.f32 %v2124, 0.35355338
        %v2133 = vlaneseq
        %v2134 = vshrl.u32 %v2133, 7
        %v2135 = vsub.s32 0, %v2134
        %v2136 = vrot.slane %v2031, %v2135
        %v2137 = vlaneseq
        %v2138 = vshrl.u32 %v2137, 7
        %v2139 = vsub.s32 0, %v2138
        %v2140 = vrot.slane %v2032, %v2139
        %v2143 = vadd.f32 %v2129, %v2136
        %v2144 = vadd.f32 %v2130, %v2140
        %v2145 = vsel %vm861, %v2143, -inf
        %2146 = vmax.xlane.f32.xlu0 %v2145
        %v2147 = vpop.xlane.xlu0 %2146
        %v2148 = vsel %vm861, %v2144, -inf
        %2149 = vmax.xlane.f32.xlu0 %v2148
        %v2150 = vpop.xlane.xlu0 %2149
        %v2151 = vsub.f32 %v2143, %v2147
        %v2152 = vsub.f32 %v2144, %v2150
        %v2153 = vmul.f32 %v2151, 1.442695
        %v2154 = vpow.pop %v2153
        %v2155 = vmul.f32 %v2152, 1.442695
        %v2156 = vpow.pop %v2155
        %v2157 = vsel %vm861, %v2154, 0.0
        %2158 = vadd.xlane.f32.xlu0 %v2157
        %v2159 = vpop.xlane.xlu0 %2158
        %v2160 = vsel %vm861, %v2156, 0.0
        %2161 = vadd.xlane.f32.xlu0 %v2160
        %v2162 = vpop.xlane.xlu0 %2161
        %v2163 = vrcp.pop %v2159
        %v2164 = vrcp.pop %v2162
        %v2165 = vmul.f32 %v2154, %v2163
        %v2166 = vmul.f32 %v2156, %v2164
        %v2167 = vpack.c.bf16 %v2165, %v2165
        %v2168 = vpack.c.bf16 %v2166, %v2166
        %2170 = vrot.lane.b32.xlu0 %v2035, 96
        %v2171 = vpop.permute.xlu0 %2170
        %v2173 = vsel %vm861, %v2167, 0
        %v2176 = vsel %vm990, %v2171, 0
        %2178 = vmatprep.subr.bf16.mxu0 0
        %2179 = vmatpush1.bf16.msra.mxu0 %v2176
        %2180 = vmatprep.subr.bf16.mxu0 0
        %2181 = vmatpush1.bf16.msra.mxu0 0
        %2182 = vmatprep.subr.bf16.mxu0 0
        %2183 = vmatpush1.bf16.msra.mxu0 0
        %2184 = vmatprep.subr.bf16.mxu0 0
        %2185 = vmatpush1.bf16.msra.mxu0 0
        %2186 = vmatprep.subr.bf16.mxu0 0
        %2187 = vmatpush1.bf16.msra.mxu0 0
        %2188 = vmatprep.subr.bf16.mxu0 0
        %2189 = vmatpush1.bf16.msra.mxu0 0
        %2190 = vmatprep.subr.bf16.mxu0 0
        %2191 = vmatpush1.bf16.msra.mxu0 0
        %2192 = vmatprep.subr.bf16.mxu0 0
        %2193 = vmatpush1.bf16.msra.mxu0 0
        %2194 = vmatprep.subr.bf16.mxu0 0
        %2195 = vmatpush1.bf16.msra.mxu0 0
        %2196 = vmatprep.subr.bf16.mxu0 0
        %2197 = vmatpush1.bf16.msra.mxu0 0
        %2198 = vmatprep.subr.bf16.mxu0 0
        %2199 = vmatpush1.bf16.msra.mxu0 0
        %2200 = vmatprep.subr.bf16.mxu0 0
        %2201 = vmatpush1.bf16.msra.mxu0 0
        %2202 = vmatprep.subr.bf16.mxu0 0
        %2203 = vmatpush1.bf16.msra.mxu0 0
        %2204 = vmatprep.subr.bf16.mxu0 0
        %2205 = vmatpush1.bf16.msra.mxu0 0
        %2206 = vmatprep.subr.bf16.mxu0 0
        %2207 = vmatpush1.bf16.msra.mxu0 0
        %2208 = vmatprep.subr.bf16.mxu0 0
        %2209 = vmatpush1.bf16.msra.mxu0 0
        %2210 = vmatprep.mubr.bf16.mxu0 0
        %2211 = vmatmul.mubr.bf16.gmra.mrb[0].mxu0 %v2173
        %v2212 = vpop.f32.mrb[0].mxu0
        %v2213 = vadd.f32 0.0, %v2212
        %v2214 = vpop.f32.mrb[0].mxu0
        %v2215 = vpop.f32.mrb[0].mxu0
        %v2216 = vpop.f32.mrb[0].mxu0
        %2217 = vdwg.mxu0
        %2219 = vrot.lane.b32.xlu0 %v2036, 96
        %v2220 = vpop.permute.xlu0 %2219
        %v2222 = vsel %vm861, %v2168, 0
        %v2225 = vsel %vm990, %v2220, 0
        %2227 = vmatprep.subr.bf16.mxu0 0
        %2228 = vmatpush1.bf16.msra.mxu0 %v2225
        %2229 = vmatprep.subr.bf16.mxu0 0
        %2230 = vmatpush1.bf16.msra.mxu0 0
        %2231 = vmatprep.subr.bf16.mxu0 0
        %2232 = vmatpush1.bf16.msra.mxu0 0
        %2233 = vmatprep.subr.bf16.mxu0 0
        %2234 = vmatpush1.bf16.msra.mxu0 0
        %2235 = vmatprep.subr.bf16.mxu0 0
        %2236 = vmatpush1.bf16.msra.mxu0 0
        %2237 = vmatprep.subr.bf16.mxu0 0
        %2238 = vmatpush1.bf16.msra.mxu0 0
        %2239 = vmatprep.subr.bf16.mxu0 0
        %2240 = vmatpush1.bf16.msra.mxu0 0
        %2241 = vmatprep.subr.bf16.mxu0 0
        %2242 = vmatpush1.bf16.msra.mxu0 0
        %2243 = vmatprep.subr.bf16.mxu0 0
        %2244 = vmatpush1.bf16.msra.mxu0 0
        %2245 = vmatprep.subr.bf16.mxu0 0
        %2246 = vmatpush1.bf16.msra.mxu0 0
        %2247 = vmatprep.subr.bf16.mxu0 0
        %2248 = vmatpush1.bf16.msra.mxu0 0
        %2249 = vmatprep.subr.bf16.mxu0 0
        %2250 = vmatpush1.bf16.msra.mxu0 0
        %2251 = vmatprep.subr.bf16.mxu0 0
        %2252 = vmatpush1.bf16.msra.mxu0 0
        %2253 = vmatprep.subr.bf16.mxu0 0
        %2254 = vmatpush1.bf16.msra.mxu0 0
        %2255 = vmatprep.subr.bf16.mxu0 0
        %2256 = vmatpush1.bf16.msra.mxu0 0
        %2257 = vmatprep.subr.bf16.mxu0 0
        %2258 = vmatpush1.bf16.msra.mxu0 0
        %2259 = vmatprep.mubr.bf16.mxu0 0
        %2260 = vmatmul.mubr.bf16.gmra.mrb[0].mxu0 %v2222
        %v2261 = vpop.f32.mrb[0].mxu0
        %v2262 = vadd.f32 0.0, %v2261
        %v2263 = vpop.f32.mrb[0].mxu0
        %v2264 = vpop.f32.mrb[0].mxu0
        %v2265 = vpop.f32.mrb[0].mxu0
        %2266 = vdwg.mxu0
        %2268 = vrot.lane.b32.xlu0 %v2033, 120
        %v2269 = vpop.permute.xlu0 %2268
        %2270 = vrot.lane.b32.xlu0 %v2035, 120
        %v2271 = vpop.permute.xlu0 %2270
        %v2273 = vsel %vm861, %v2269, 0
        %v2276 = vsel %vm861, %v2271, 0
        %2278 = vmatprep.subr.bf16.mxu0 0
        %2279 = vmatpush1.bf16.xpose.msra.mxu0 %v2276
        %2280 = vmatprep.subr.bf16.mxu0 0
        %2281 = vmatpush1.bf16.xpose.msra.mxu0 0
        %2282 = vmatprep.subr.bf16.mxu0 0
        %2283 = vmatpush1.bf16.xpose.msra.mxu0 0
        %2284 = vmatprep.subr.bf16.mxu0 0
        %2285 = vmatpush1.bf16.xpose.msra.mxu0 0
        %2286 = vmatprep.subr.bf16.mxu0 0
        %2287 = vmatpush1.bf16.xpose.msra.mxu0 0
        %2288 = vmatprep.subr.bf16.mxu0 0
        %2289 = vmatpush1.bf16.xpose.msra.mxu0 0
        %2290 = vmatprep.subr.bf16.mxu0 0
        %2291 = vmatpush1.bf16.xpose.msra.mxu0 0
        %2292 = vmatprep.subr.bf16.mxu0 0
        %2293 = vmatpush1.bf16.xpose.msra.mxu0 0
        %2294 = vmatprep.subr.bf16.mxu0 0
        %2295 = vmatpush1.bf16.xpose.msra.mxu0 0
        %2296 = vmatprep.subr.bf16.mxu0 0
        %2297 = vmatpush1.bf16.xpose.msra.mxu0 0
        %2298 = vmatprep.subr.bf16.mxu0 0
        %2299 = vmatpush1.bf16.xpose.msra.mxu0 0
        %2300 = vmatprep.subr.bf16.mxu0 0
        %2301 = vmatpush1.bf16.xpose.msra.mxu0 0
        %2302 = vmatprep.subr.bf16.mxu0 0
        %2303 = vmatpush1.bf16.xpose.msra.mxu0 0
        %2304 = vmatprep.subr.bf16.mxu0 0
        %2305 = vmatpush1.bf16.xpose.msra.mxu0 0
        %2306 = vmatprep.subr.bf16.mxu0 0
        %2307 = vmatpush1.bf16.xpose.msra.mxu0 0
        %2308 = vmatprep.subr.bf16.mxu0 0
        %2309 = vmatpush1.bf16.xpose.msra.mxu0 0
        %2310 = vmatprep.mubr.bf16.mxu0 0
        %2311 = vmatmul.mubr.bf16.gmra.mrb[0].mxu0 %v2273
        %v2312 = vpop.f32.mrb[0].mxu0
        %v2313 = vadd.f32 0.0, %v2312
        %v2314 = vpop.f32.mrb[0].mxu0
        %v2315 = vpop.f32.mrb[0].mxu0
        %v2316 = vpop.f32.mrb[0].mxu0
        %2317 = vdwg.mxu0
        %2319 = vrot.lane.b32.xlu0 %v2034, 120
        %v2320 = vpop.permute.xlu0 %2319
        %2321 = vrot.lane.b32.xlu0 %v2036, 120
        %v2322 = vpop.permute.xlu0 %2321
        %v2324 = vsel %vm861, %v2320, 0
        %v2327 = vsel %vm861, %v2322, 0
        %2329 = vmatprep.subr.bf16.mxu0 0
        %2330 = vmatpush1.bf16.xpose.msra.mxu0 %v2327
        %2331 = vmatprep.subr.bf16.mxu0 0
        %2332 = vmatpush1.bf16.xpose.msra.mxu0 0
        %2333 = vmatprep.subr.bf16.mxu0 0
        %2334 = vmatpush1.bf16.xpose.msra.mxu0 0
        %2335 = vmatprep.subr.bf16.mxu0 0
        %2336 = vmatpush1.bf16.xpose.msra.mxu0 0
        %2337 = vmatprep.subr.bf16.mxu0 0
        %2338 = vmatpush1.bf16.xpose.msra.mxu0 0
        %2339 = vmatprep.subr.bf16.mxu0 0
        %2340 = vmatpush1.bf16.xpose.msra.mxu0 0
        %2341 = vmatprep.subr.bf16.mxu0 0
        %2342 = vmatpush1.bf16.xpose.msra.mxu0 0
        %2343 = vmatprep.subr.bf16.mxu0 0
        %2344 = vmatpush1.bf16.xpose.msra.mxu0 0
        %2345 = vmatprep.subr.bf16.mxu0 0
        %2346 = vmatpush1.bf16.xpose.msra.mxu0 0
        %2347 = vmatprep.subr.bf16.mxu0 0
        %2348 = vmatpush1.bf16.xpose.msra.mxu0 0
        %2349 = vmatprep.subr.bf16.mxu0 0
        %2350 = vmatpush1.bf16.xpose.msra.mxu0 0
        %2351 = vmatprep.subr.bf16.mxu0 0
        %2352 = vmatpush1.bf16.xpose.msra.mxu0 0
        %2353 = vmatprep.subr.bf16.mxu0 0
        %2354 = vmatpush1.bf16.xpose.msra.mxu0 0
        %2355 = vmatprep.subr.bf16.mxu0 0
        %2356 = vmatpush1.bf16.xpose.msra.mxu0 0
        %2357 = vmatprep.subr.bf16.mxu0 0
        %2358 = vmatpush1.bf16.xpose.msra.mxu0 0
        %2359 = vmatprep.subr.bf16.mxu0 0
        %2360 = vmatpush1.bf16.xpose.msra.mxu0 0
        %2361 = vmatprep.mubr.bf16.mxu0 0
        %2362 = vmatmul.mubr.bf16.gmra.mrb[0].mxu0 %v2324
        %v2363 = vpop.f32.mrb[0].mxu0
        %v2364 = vadd.f32 0.0, %v2363
        %v2365 = vpop.f32.mrb[0].mxu0
        %v2366 = vpop.f32.mrb[0].mxu0
        %v2367 = vpop.f32.mrb[0].mxu0
        %2368 = vdwg.mxu0
        %v2369 = vmul.f32 %v2313, 0.35355338
        %v2370 = vmul.f32 %v2364, 0.35355338
        %v2371 = vadd.f32 %v2369, %v2136
        %v2372 = vadd.f32 %v2370, %v2140
        %v2373 = vsel %vm861, %v2371, -inf
        %2374 = vmax.xlane.f32.xlu0 %v2373
        %v2375 = vpop.xlane.xlu0 %2374
        %v2376 = vsel %vm861, %v2372, -inf
        %2377 = vmax.xlane.f32.xlu0 %v2376
        %v2378 = vpop.xlane.xlu0 %2377
        %v2379 = vsub.f32 %v2371, %v2375
        %v2380 = vsub.f32 %v2372, %v2378
        %v2381 = vmul.f32 %v2379, 1.442695
        %v2382 = vpow.pop %v2381
        %v2383 = vmul.f32 %v2380, 1.442695
        %v2384 = vpow.pop %v2383
        %v2385 = vsel %vm861, %v2382, 0.0
        %2386 = vadd.xlane.f32.xlu0 %v2385
        %v2387 = vpop.xlane.xlu0 %2386
        %v2388 = vsel %vm861, %v2384, 0.0
        %2389 = vadd.xlane.f32.xlu0 %v2388
        %v2390 = vpop.xlane.xlu0 %2389
        %v2391 = vrcp.pop %v2387
        %v2392 = vrcp.pop %v2390
        %v2393 = vmul.f32 %v2382, %v2391
        %v2394 = vmul.f32 %v2384, %v2392
        %v2395 = vpack.c.bf16 %v2393, %v2393
        %v2396 = vpack.c.bf16 %v2394, %v2394
        %2397 = vrot.lane.b32.xlu0 %v2035, 88
        %v2398 = vpop.permute.xlu0 %2397
        %v2400 = vsel %vm861, %v2395, 0
        %v2403 = vsel %vm990, %v2398, 0
        %2405 = vmatprep.subr.bf16.mxu0 0
        %2406 = vmatpush1.bf16.msra.mxu0 %v2403
        %2407 = vmatprep.subr.bf16.mxu0 0
        %2408 = vmatpush1.bf16.msra.mxu0 0
        %2409 = vmatprep.subr.bf16.mxu0 0
        %2410 = vmatpush1.bf16.msra.mxu0 0
        %2411 = vmatprep.subr.bf16.mxu0 0
        %2412 = vmatpush1.bf16.msra.mxu0 0
        %2413 = vmatprep.subr.bf16.mxu0 0
        %2414 = vmatpush1.bf16.msra.mxu0 0
        %2415 = vmatprep.subr.bf16.mxu0 0
        %2416 = vmatpush1.bf16.msra.mxu0 0
        %2417 = vmatprep.subr.bf16.mxu0 0
        %2418 = vmatpush1.bf16.msra.mxu0 0
        %2419 = vmatprep.subr.bf16.mxu0 0
        %2420 = vmatpush1.bf16.msra.mxu0 0
        %2421 = vmatprep.subr.bf16.mxu0 0
        %2422 = vmatpush1.bf16.msra.mxu0 0
        %2423 = vmatprep.subr.bf16.mxu0 0
        %2424 = vmatpush1.bf16.msra.mxu0 0
        %2425 = vmatprep.subr.bf16.mxu0 0
        %2426 = vmatpush1.bf16.msra.mxu0 0
        %2427 = vmatprep.subr.bf16.mxu0 0
        %2428 = vmatpush1.bf16.msra.mxu0 0
        %2429 = vmatprep.subr.bf16.mxu0 0
        %2430 = vmatpush1.bf16.msra.mxu0 0
        %2431 = vmatprep.subr.bf16.mxu0 0
        %2432 = vmatpush1.bf16.msra.mxu0 0
        %2433 = vmatprep.subr.bf16.mxu0 0
        %2434 = vmatpush1.bf16.msra.mxu0 0
        %2435 = vmatprep.subr.bf16.mxu0 0
        %2436 = vmatpush1.bf16.msra.mxu0 0
        %2437 = vmatprep.mubr.bf16.mxu0 0
        %2438 = vmatmul.mubr.bf16.gmra.mrb[0].mxu0 %v2400
        %v2439 = vpop.f32.mrb[0].mxu0
        %v2440 = vadd.f32 0.0, %v2439
        %v2441 = vpop.f32.mrb[0].mxu0
        %v2442 = vpop.f32.mrb[0].mxu0
        %v2443 = vpop.f32.mrb[0].mxu0
        %2444 = vdwg.mxu0
        %2445 = vrot.lane.b32.xlu0 %v2036, 88
        %v2446 = vpop.permute.xlu0 %2445
        %v2448 = vsel %vm861, %v2396, 0
        %v2451 = vsel %vm990, %v2446, 0
        %2453 = vmatprep.subr.bf16.mxu0 0
        %2454 = vmatpush1.bf16.msra.mxu0 %v2451
        %2455 = vmatprep.subr.bf16.mxu0 0
        %2456 = vmatpush1.bf16.msra.mxu0 0
        %2457 = vmatprep.subr.bf16.mxu0 0
        %2458 = vmatpush1.bf16.msra.mxu0 0
        %2459 = vmatprep.subr.bf16.mxu0 0
        %2460 = vmatpush1.bf16.msra.mxu0 0
        %2461 = vmatprep.subr.bf16.mxu0 0
        %2462 = vmatpush1.bf16.msra.mxu0 0
        %2463 = vmatprep.subr.bf16.mxu0 0
        %2464 = vmatpush1.bf16.msra.mxu0 0
        %2465 = vmatprep.subr.bf16.mxu0 0
        %2466 = vmatpush1.bf16.msra.mxu0 0
        %2467 = vmatprep.subr.bf16.mxu0 0
        %2468 = vmatpush1.bf16.msra.mxu0 0
        %2469 = vmatprep.subr.bf16.mxu0 0
        %2470 = vmatpush1.bf16.msra.mxu0 0
        %2471 = vmatprep.subr.bf16.mxu0 0
        %2472 = vmatpush1.bf16.msra.mxu0 0
        %2473 = vmatprep.subr.bf16.mxu0 0
        %2474 = vmatpush1.bf16.msra.mxu0 0
        %2475 = vmatprep.subr.bf16.mxu0 0
        %2476 = vmatpush1.bf16.msra.mxu0 0
        %2477 = vmatprep.subr.bf16.mxu0 0
        %2478 = vmatpush1.bf16.msra.mxu0 0
        %2479 = vmatprep.subr.bf16.mxu0 0
        %2480 = vmatpush1.bf16.msra.mxu0 0
        %2481 = vmatprep.subr.bf16.mxu0 0
        %2482 = vmatpush1.bf16.msra.mxu0 0
        %2483 = vmatprep.subr.bf16.mxu0 0
        %2484 = vmatpush1.bf16.msra.mxu0 0
        %2485 = vmatprep.mubr.bf16.mxu0 0
        %2486 = vmatmul.mubr.bf16.gmra.mrb[0].mxu0 %v2448
        %v2487 = vpop.f32.mrb[0].mxu0
        %v2488 = vadd.f32 0.0, %v2487
        %v2489 = vpop.f32.mrb[0].mxu0
        %v2490 = vpop.f32.mrb[0].mxu0
        %v2491 = vpop.f32.mrb[0].mxu0
        %2492 = vdwg.mxu0
        %2493 = vrot.lane.b32.xlu0 %v2033, 112
        %v2494 = vpop.permute.xlu0 %2493
        %2495 = vrot.lane.b32.xlu0 %v2035, 112
        %v2496 = vpop.permute.xlu0 %2495
        %v2498 = vsel %vm861, %v2494, 0
        %v2501 = vsel %vm861, %v2496, 0
        %2503 = vmatprep.subr.bf16.mxu0 0
        %2504 = vmatpush1.bf16.xpose.msra.mxu0 %v2501
        %2505 = vmatprep.subr.bf16.mxu0 0
        %2506 = vmatpush1.bf16.xpose.msra.mxu0 0
        %2507 = vmatprep.subr.bf16.mxu0 0
        %2508 = vmatpush1.bf16.xpose.msra.mxu0 0
        %2509 = vmatprep.subr.bf16.mxu0 0
        %2510 = vmatpush1.bf16.xpose.msra.mxu0 0
        %2511 = vmatprep.subr.bf16.mxu0 0
        %2512 = vmatpush1.bf16.xpose.msra.mxu0 0
        %2513 = vmatprep.subr.bf16.mxu0 0
        %2514 = vmatpush1.bf16.xpose.msra.mxu0 0
        %2515 = vmatprep.subr.bf16.mxu0 0
        %2516 = vmatpush1.bf16.xpose.msra.mxu0 0
        %2517 = vmatprep.subr.bf16.mxu0 0
        %2518 = vmatpush1.bf16.xpose.msra.mxu0 0
        %2519 = vmatprep.subr.bf16.mxu0 0
        %2520 = vmatpush1.bf16.xpose.msra.mxu0 0
        %2521 = vmatprep.subr.bf16.mxu0 0
        %2522 = vmatpush1.bf16.xpose.msra.mxu0 0
        %2523 = vmatprep.subr.bf16.mxu0 0
        %2524 = vmatpush1.bf16.xpose.msra.mxu0 0
        %2525 = vmatprep.subr.bf16.mxu0 0
        %2526 = vmatpush1.bf16.xpose.msra.mxu0 0
        %2527 = vmatprep.subr.bf16.mxu0 0
        %2528 = vmatpush1.bf16.xpose.msra.mxu0 0
        %2529 = vmatprep.subr.bf16.mxu0 0
        %2530 = vmatpush1.bf16.xpose.msra.mxu0 0
        %2531 = vmatprep.subr.bf16.mxu0 0
        %2532 = vmatpush1.bf16.xpose.msra.mxu0 0
        %2533 = vmatprep.subr.bf16.mxu0 0
        %2534 = vmatpush1.bf16.xpose.msra.mxu0 0
        %2535 = vmatprep.mubr.bf16.mxu0 0
        %2536 = vmatmul.mubr.bf16.gmra.mrb[0].mxu0 %v2498
        %v2537 = vpop.f32.mrb[0].mxu0
        %v2538 = vadd.f32 0.0, %v2537
        %v2539 = vpop.f32.mrb[0].mxu0
        %v2540 = vpop.f32.mrb[0].mxu0
        %v2541 = vpop.f32.mrb[0].mxu0
        %2542 = vdwg.mxu0
        %2543 = vrot.lane.b32.xlu0 %v2034, 112
        %v2544 = vpop.permute.xlu0 %2543
        %2545 = vrot.lane.b32.xlu0 %v2036, 112
        %v2546 = vpop.permute.xlu0 %2545
        %v2548 = vsel %vm861, %v2544, 0
        %v2551 = vsel %vm861, %v2546, 0
        %2553 = vmatprep.subr.bf16.mxu0 0
        %2554 = vmatpush1.bf16.xpose.msra.mxu0 %v2551
        %2555 = vmatprep.subr.bf16.mxu0 0
        %2556 = vmatpush1.bf16.xpose.msra.mxu0 0
        %2557 = vmatprep.subr.bf16.mxu0 0
        %2558 = vmatpush1.bf16.xpose.msra.mxu0 0
        %2559 = vmatprep.subr.bf16.mxu0 0
        %2560 = vmatpush1.bf16.xpose.msra.mxu0 0
        %2561 = vmatprep.subr.bf16.mxu0 0
        %2562 = vmatpush1.bf16.xpose.msra.mxu0 0
        %2563 = vmatprep.subr.bf16.mxu0 0
        %2564 = vmatpush1.bf16.xpose.msra.mxu0 0
        %2565 = vmatprep.subr.bf16.mxu0 0
        %2566 = vmatpush1.bf16.xpose.msra.mxu0 0
        %2567 = vmatprep.subr.bf16.mxu0 0
        %2568 = vmatpush1.bf16.xpose.msra.mxu0 0
        %2569 = vmatprep.subr.bf16.mxu0 0
        %2570 = vmatpush1.bf16.xpose.msra.mxu0 0
        %2571 = vmatprep.subr.bf16.mxu0 0
        %2572 = vmatpush1.bf16.xpose.msra.mxu0 0
        %2573 = vmatprep.subr.bf16.mxu0 0
        %2574 = vmatpush1.bf16.xpose.msra.mxu0 0
        %2575 = vmatprep.subr.bf16.mxu0 0
        %2576 = vmatpush1.bf16.xpose.msra.mxu0 0
        %2577 = vmatprep.subr.bf16.mxu0 0
        %2578 = vmatpush1.bf16.xpose.msra.mxu0 0
        %2579 = vmatprep.subr.bf16.mxu0 0
        %2580 = vmatpush1.bf16.xpose.msra.mxu0 0
        %2581 = vmatprep.subr.bf16.mxu0 0
        %2582 = vmatpush1.bf16.xpose.msra.mxu0 0
        %2583 = vmatprep.subr.bf16.mxu0 0
        %2584 = vmatpush1.bf16.xpose.msra.mxu0 0
        %2585 = vmatprep.mubr.bf16.mxu0 0
        %2586 = vmatmul.mubr.bf16.gmra.mrb[0].mxu0 %v2548
        %v2587 = vpop.f32.mrb[0].mxu0
        %v2588 = vadd.f32 0.0, %v2587
        %v2589 = vpop.f32.mrb[0].mxu0
        %v2590 = vpop.f32.mrb[0].mxu0
        %v2591 = vpop.f32.mrb[0].mxu0
        %2592 = vdwg.mxu0
        %v2593 = vmul.f32 %v2538, 0.35355338
        %v2594 = vmul.f32 %v2588, 0.35355338
        %v2595 = vadd.f32 %v2593, %v2136
        %v2596 = vadd.f32 %v2594, %v2140
        %v2597 = vsel %vm861, %v2595, -inf
        %2598 = vmax.xlane.f32.xlu0 %v2597
        %v2599 = vpop.xlane.xlu0 %2598
        %v2600 = vsel %vm861, %v2596, -inf
        %2601 = vmax.xlane.f32.xlu0 %v2600
        %v2602 = vpop.xlane.xlu0 %2601
        %v2603 = vsub.f32 %v2595, %v2599
        %v2604 = vsub.f32 %v2596, %v2602
        %v2605 = vmul.f32 %v2603, 1.442695
        %v2606 = vpow.pop %v2605
        %v2607 = vmul.f32 %v2604, 1.442695
        %v2608 = vpow.pop %v2607
        %v2609 = vsel %vm861, %v2606, 0.0
        %2610 = vadd.xlane.f32.xlu0 %v2609
        %v2611 = vpop.xlane.xlu0 %2610
        %v2612 = vsel %vm861, %v2608, 0.0
        %2613 = vadd.xlane.f32.xlu0 %v2612
        %v2614 = vpop.xlane.xlu0 %2613
        %v2615 = vrcp.pop %v2611
        %v2616 = vrcp.pop %v2614
        %v2617 = vmul.f32 %v2606, %v2615
        %v2618 = vmul.f32 %v2608, %v2616
        %v2619 = vpack.c.bf16 %v2617, %v2617
        %v2620 = vpack.c.bf16 %v2618, %v2618
        %2621 = vrot.lane.b32.xlu0 %v2035, 80
        %v2622 = vpop.permute.xlu0 %2621
        %v2624 = vsel %vm861, %v2619, 0
        %v2627 = vsel %vm990, %v2622, 0
        %2629 = vmatprep.subr.bf16.mxu0 0
        %2630 = vmatpush1.bf16.msra.mxu0 %v2627
        %2631 = vmatprep.subr.bf16.mxu0 0
        %2632 = vmatpush1.bf16.msra.mxu0 0
        %2633 = vmatprep.subr.bf16.mxu0 0
        %2634 = vmatpush1.bf16.msra.mxu0 0
        %2635 = vmatprep.subr.bf16.mxu0 0
        %2636 = vmatpush1.bf16.msra.mxu0 0
        %2637 = vmatprep.subr.bf16.mxu0 0
        %2638 = vmatpush1.bf16.msra.mxu0 0
        %2639 = vmatprep.subr.bf16.mxu0 0
        %2640 = vmatpush1.bf16.msra.mxu0 0
        %2641 = vmatprep.subr.bf16.mxu0 0
        %2642 = vmatpush1.bf16.msra.mxu0 0
        %2643 = vmatprep.subr.bf16.mxu0 0
        %2644 = vmatpush1.bf16.msra.mxu0 0
        %2645 = vmatprep.subr.bf16.mxu0 0
        %2646 = vmatpush1.bf16.msra.mxu0 0
        %2647 = vmatprep.subr.bf16.mxu0 0
        %2648 = vmatpush1.bf16.msra.mxu0 0
        %2649 = vmatprep.subr.bf16.mxu0 0
        %2650 = vmatpush1.bf16.msra.mxu0 0
        %2651 = vmatprep.subr.bf16.mxu0 0
        %2652 = vmatpush1.bf16.msra.mxu0 0
        %2653 = vmatprep.subr.bf16.mxu0 0
        %2654 = vmatpush1.bf16.msra.mxu0 0
        %2655 = vmatprep.subr.bf16.mxu0 0
        %2656 = vmatpush1.bf16.msra.mxu0 0
        %2657 = vmatprep.subr.bf16.mxu0 0
        %2658 = vmatpush1.bf16.msra.mxu0 0
        %2659 = vmatprep.subr.bf16.mxu0 0
        %2660 = vmatpush1.bf16.msra.mxu0 0
        %2661 = vmatprep.mubr.bf16.mxu0 0
        %2662 = vmatmul.mubr.bf16.gmra.mrb[0].mxu0 %v2624
        %v2663 = vpop.f32.mrb[0].mxu0
        %v2664 = vadd.f32 0.0, %v2663
        %v2665 = vpop.f32.mrb[0].mxu0
        %v2666 = vpop.f32.mrb[0].mxu0
        %v2667 = vpop.f32.mrb[0].mxu0
        %2668 = vdwg.mxu0
        %2669 = vrot.lane.b32.xlu0 %v2036, 80
        %v2670 = vpop.permute.xlu0 %2669
        %v2672 = vsel %vm861, %v2620, 0
        %v2675 = vsel %vm990, %v2670, 0
        %2677 = vmatprep.subr.bf16.mxu0 0
        %2678 = vmatpush1.bf16.msra.mxu0 %v2675
        %2679 = vmatprep.subr.bf16.mxu0 0
        %2680 = vmatpush1.bf16.msra.mxu0 0
        %2681 = vmatprep.subr.bf16.mxu0 0
        %2682 = vmatpush1.bf16.msra.mxu0 0
        %2683 = vmatprep.subr.bf16.mxu0 0
        %2684 = vmatpush1.bf16.msra.mxu0 0
        %2685 = vmatprep.subr.bf16.mxu0 0
        %2686 = vmatpush1.bf16.msra.mxu0 0
        %2687 = vmatprep.subr.bf16.mxu0 0
        %2688 = vmatpush1.bf16.msra.mxu0 0
        %2689 = vmatprep.subr.bf16.mxu0 0
        %2690 = vmatpush1.bf16.msra.mxu0 0
        %2691 = vmatprep.subr.bf16.mxu0 0
        %2692 = vmatpush1.bf16.msra.mxu0 0
        %2693 = vmatprep.subr.bf16.mxu0 0
        %2694 = vmatpush1.bf16.msra.mxu0 0
        %2695 = vmatprep.subr.bf16.mxu0 0
        %2696 = vmatpush1.bf16.msra.mxu0 0
        %2697 = vmatprep.subr.bf16.mxu0 0
        %2698 = vmatpush1.bf16.msra.mxu0 0
        %2699 = vmatprep.subr.bf16.mxu0 0
        %2700 = vmatpush1.bf16.msra.mxu0 0
        %2701 = vmatprep.subr.bf16.mxu0 0
        %2702 = vmatpush1.bf16.msra.mxu0 0
        %2703 = vmatprep.subr.bf16.mxu0 0
        %2704 = vmatpush1.bf16.msra.mxu0 0
        %2705 = vmatprep.subr.bf16.mxu0 0
        %2706 = vmatpush1.bf16.msra.mxu0 0
        %2707 = vmatprep.subr.bf16.mxu0 0
        %2708 = vmatpush1.bf16.msra.mxu0 0
        %2709 = vmatprep.mubr.bf16.mxu0 0
        %2710 = vmatmul.mubr.bf16.gmra.mrb[0].mxu0 %v2672
        %v2711 = vpop.f32.mrb[0].mxu0
        %v2712 = vadd.f32 0.0, %v2711
        %v2713 = vpop.f32.mrb[0].mxu0
        %v2714 = vpop.f32.mrb[0].mxu0
        %v2715 = vpop.f32.mrb[0].mxu0
        %2716 = vdwg.mxu0
        %2717 = vrot.lane.b32.xlu0 %v2033, 104
        %v2718 = vpop.permute.xlu0 %2717
        %2719 = vrot.lane.b32.xlu0 %v2035, 104
        %v2720 = vpop.permute.xlu0 %2719
        %v2722 = vsel %vm861, %v2718, 0
        %v2725 = vsel %vm861, %v2720, 0
        %2727 = vmatprep.subr.bf16.mxu0 0
        %2728 = vmatpush1.bf16.xpose.msra.mxu0 %v2725
        %2729 = vmatprep.subr.bf16.mxu0 0
        %2730 = vmatpush1.bf16.xpose.msra.mxu0 0
        %2731 = vmatprep.subr.bf16.mxu0 0
        %2732 = vmatpush1.bf16.xpose.msra.mxu0 0
        %2733 = vmatprep.subr.bf16.mxu0 0
        %2734 = vmatpush1.bf16.xpose.msra.mxu0 0
        %2735 = vmatprep.subr.bf16.mxu0 0
        %2736 = vmatpush1.bf16.xpose.msra.mxu0 0
        %2737 = vmatprep.subr.bf16.mxu0 0
        %2738 = vmatpush1.bf16.xpose.msra.mxu0 0
        %2739 = vmatprep.subr.bf16.mxu0 0
        %2740 = vmatpush1.bf16.xpose.msra.mxu0 0
        %2741 = vmatprep.subr.bf16.mxu0 0
        %2742 = vmatpush1.bf16.xpose.msra.mxu0 0
        %2743 = vmatprep.subr.bf16.mxu0 0
        %2744 = vmatpush1.bf16.xpose.msra.mxu0 0
        %2745 = vmatprep.subr.bf16.mxu0 0
        %2746 = vmatpush1.bf16.xpose.msra.mxu0 0
        %2747 = vmatprep.subr.bf16.mxu0 0
        %2748 = vmatpush1.bf16.xpose.msra.mxu0 0
        %2749 = vmatprep.subr.bf16.mxu0 0
        %2750 = vmatpush1.bf16.xpose.msra.mxu0 0
        %2751 = vmatprep.subr.bf16.mxu0 0
        %2752 = vmatpush1.bf16.xpose.msra.mxu0 0
        %2753 = vmatprep.subr.bf16.mxu0 0
        %2754 = vmatpush1.bf16.xpose.msra.mxu0 0
        %2755 = vmatprep.subr.bf16.mxu0 0
        %2756 = vmatpush1.bf16.xpose.msra.mxu0 0
        %2757 = vmatprep.subr.bf16.mxu0 0
        %2758 = vmatpush1.bf16.xpose.msra.mxu0 0
        %2759 = vmatprep.mubr.bf16.mxu0 0
        %2760 = vmatmul.mubr.bf16.gmra.mrb[0].mxu0 %v2722
        %v2761 = vpop.f32.mrb[0].mxu0
        %v2762 = vadd.f32 0.0, %v2761
        %v2763 = vpop.f32.mrb[0].mxu0
        %v2764 = vpop.f32.mrb[0].mxu0
        %v2765 = vpop.f32.mrb[0].mxu0
        %2766 = vdwg.mxu0
        %2767 = vrot.lane.b32.xlu0 %v2034, 104
        %v2768 = vpop.permute.xlu0 %2767
        %2769 = vrot.lane.b32.xlu0 %v2036, 104
        %v2770 = vpop.permute.xlu0 %2769
        %v2772 = vsel %vm861, %v2768, 0
        %v2775 = vsel %vm861, %v2770, 0
        %2777 = vmatprep.subr.bf16.mxu0 0
        %2778 = vmatpush1.bf16.xpose.msra.mxu0 %v2775
        %2779 = vmatprep.subr.bf16.mxu0 0
        %2780 = vmatpush1.bf16.xpose.msra.mxu0 0
        %2781 = vmatprep.subr.bf16.mxu0 0
        %2782 = vmatpush1.bf16.xpose.msra.mxu0 0
        %2783 = vmatprep.subr.bf16.mxu0 0
        %2784 = vmatpush1.bf16.xpose.msra.mxu0 0
        %2785 = vmatprep.subr.bf16.mxu0 0
        %2786 = vmatpush1.bf16.xpose.msra.mxu0 0
        %2787 = vmatprep.subr.bf16.mxu0 0
        %2788 = vmatpush1.bf16.xpose.msra.mxu0 0
        %2789 = vmatprep.subr.bf16.mxu0 0
        %2790 = vmatpush1.bf16.xpose.msra.mxu0 0
        %2791 = vmatprep.subr.bf16.mxu0 0
        %2792 = vmatpush1.bf16.xpose.msra.mxu0 0
        %2793 = vmatprep.subr.bf16.mxu0 0
        %2794 = vmatpush1.bf16.xpose.msra.mxu0 0
        %2795 = vmatprep.subr.bf16.mxu0 0
        %2796 = vmatpush1.bf16.xpose.msra.mxu0 0
        %2797 = vmatprep.subr.bf16.mxu0 0
        %2798 = vmatpush1.bf16.xpose.msra.mxu0 0
        %2799 = vmatprep.subr.bf16.mxu0 0
        %2800 = vmatpush1.bf16.xpose.msra.mxu0 0
        %2801 = vmatprep.subr.bf16.mxu0 0
        %2802 = vmatpush1.bf16.xpose.msra.mxu0 0
        %2803 = vmatprep.subr.bf16.mxu0 0
        %2804 = vmatpush1.bf16.xpose.msra.mxu0 0
        %2805 = vmatprep.subr.bf16.mxu0 0
        %2806 = vmatpush1.bf16.xpose.msra.mxu0 0
        %2807 = vmatprep.subr.bf16.mxu0 0
        %2808 = vmatpush1.bf16.xpose.msra.mxu0 0
        %2809 = vmatprep.mubr.bf16.mxu0 0
        %2810 = vmatmul.mubr.bf16.gmra.mrb[0].mxu0 %v2772
        %v2811 = vpop.f32.mrb[0].mxu0
        %v2812 = vadd.f32 0.0, %v2811
        %v2813 = vpop.f32.mrb[0].mxu0
        %v2814 = vpop.f32.mrb[0].mxu0
        %v2815 = vpop.f32.mrb[0].mxu0
        %2816 = vdwg.mxu0
        %v2817 = vmul.f32 %v2762, 0.35355338
        %v2818 = vmul.f32 %v2812, 0.35355338
        %v2819 = vadd.f32 %v2817, %v2136
        %v2820 = vadd.f32 %v2818, %v2140
        %v2821 = vsel %vm861, %v2819, -inf
        %2822 = vmax.xlane.f32.xlu0 %v2821
        %v2823 = vpop.xlane.xlu0 %2822
        %v2824 = vsel %vm861, %v2820, -inf
        %2825 = vmax.xlane.f32.xlu0 %v2824
        %v2826 = vpop.xlane.xlu0 %2825
        %v2827 = vsub.f32 %v2819, %v2823
        %v2828 = vsub.f32 %v2820, %v2826
        %v2829 = vmul.f32 %v2827, 1.442695
        %v2830 = vpow.pop %v2829
        %v2831 = vmul.f32 %v2828, 1.442695
        %v2832 = vpow.pop %v2831
        %v2833 = vsel %vm861, %v2830, 0.0
        %2834 = vadd.xlane.f32.xlu0 %v2833
        %v2835 = vpop.xlane.xlu0 %2834
        %v2836 = vsel %vm861, %v2832, 0.0
        %2837 = vadd.xlane.f32.xlu0 %v2836
        %v2838 = vpop.xlane.xlu0 %2837
        %v2839 = vrcp.pop %v2835
        %v2840 = vrcp.pop %v2838
        %v2841 = vmul.f32 %v2830, %v2839
        %v2842 = vmul.f32 %v2832, %v2840
        %v2843 = vpack.c.bf16 %v2841, %v2841
        %v2844 = vpack.c.bf16 %v2842, %v2842
        %2845 = vrot.lane.b32.xlu0 %v2035, 72
        %v2846 = vpop.permute.xlu0 %2845
        %v2848 = vsel %vm861, %v2843, 0
        %v2851 = vsel %vm990, %v2846, 0
        %2853 = vmatprep.subr.bf16.mxu0 0
        %2854 = vmatpush1.bf16.msra.mxu0 %v2851
        %2855 = vmatprep.subr.bf16.mxu0 0
        %2856 = vmatpush1.bf16.msra.mxu0 0
        %2857 = vmatprep.subr.bf16.mxu0 0
        %2858 = vmatpush1.bf16.msra.mxu0 0
        %2859 = vmatprep.subr.bf16.mxu0 0
        %2860 = vmatpush1.bf16.msra.mxu0 0
        %2861 = vmatprep.subr.bf16.mxu0 0
        %2862 = vmatpush1.bf16.msra.mxu0 0
        %2863 = vmatprep.subr.bf16.mxu0 0
        %2864 = vmatpush1.bf16.msra.mxu0 0
        %2865 = vmatprep.subr.bf16.mxu0 0
        %2866 = vmatpush1.bf16.msra.mxu0 0
        %2867 = vmatprep.subr.bf16.mxu0 0
        %2868 = vmatpush1.bf16.msra.mxu0 0
        %2869 = vmatprep.subr.bf16.mxu0 0
        %2870 = vmatpush1.bf16.msra.mxu0 0
        %2871 = vmatprep.subr.bf16.mxu0 0
        %2872 = vmatpush1.bf16.msra.mxu0 0
        %2873 = vmatprep.subr.bf16.mxu0 0
        %2874 = vmatpush1.bf16.msra.mxu0 0
        %2875 = vmatprep.subr.bf16.mxu0 0
        %2876 = vmatpush1.bf16.msra.mxu0 0
        %2877 = vmatprep.subr.bf16.mxu0 0
        %2878 = vmatpush1.bf16.msra.mxu0 0
        %2879 = vmatprep.subr.bf16.mxu0 0
        %2880 = vmatpush1.bf16.msra.mxu0 0
        %2881 = vmatprep.subr.bf16.mxu0 0
        %2882 = vmatpush1.bf16.msra.mxu0 0
        %2883 = vmatprep.subr.bf16.mxu0 0
        %2884 = vmatpush1.bf16.msra.mxu0 0
        %2885 = vmatprep.mubr.bf16.mxu0 0
        %2886 = vmatmul.mubr.bf16.gmra.mrb[0].mxu0 %v2848
        %v2887 = vpop.f32.mrb[0].mxu0
        %v2888 = vadd.f32 0.0, %v2887
        %v2889 = vpop.f32.mrb[0].mxu0
        %v2890 = vpop.f32.mrb[0].mxu0
        %v2891 = vpop.f32.mrb[0].mxu0
        %2892 = vdwg.mxu0
        %2893 = vrot.lane.b32.xlu0 %v2036, 72
        %v2894 = vpop.permute.xlu0 %2893
        %v2896 = vsel %vm861, %v2844, 0
        %v2899 = vsel %vm990, %v2894, 0
        %2901 = vmatprep.subr.bf16.mxu0 0
        %2902 = vmatpush1.bf16.msra.mxu0 %v2899
        %2903 = vmatprep.subr.bf16.mxu0 0
        %2904 = vmatpush1.bf16.msra.mxu0 0
        %2905 = vmatprep.subr.bf16.mxu0 0
        %2906 = vmatpush1.bf16.msra.mxu0 0
        %2907 = vmatprep.subr.bf16.mxu0 0
        %2908 = vmatpush1.bf16.msra.mxu0 0
        %2909 = vmatprep.subr.bf16.mxu0 0
        %2910 = vmatpush1.bf16.msra.mxu0 0
        %2911 = vmatprep.subr.bf16.mxu0 0
        %2912 = vmatpush1.bf16.msra.mxu0 0
        %2913 = vmatprep.subr.bf16.mxu0 0
        %2914 = vmatpush1.bf16.msra.mxu0 0
        %2915 = vmatprep.subr.bf16.mxu0 0
        %2916 = vmatpush1.bf16.msra.mxu0 0
        %2917 = vmatprep.subr.bf16.mxu0 0
        %2918 = vmatpush1.bf16.msra.mxu0 0
        %2919 = vmatprep.subr.bf16.mxu0 0
        %2920 = vmatpush1.bf16.msra.mxu0 0
        %2921 = vmatprep.subr.bf16.mxu0 0
        %2922 = vmatpush1.bf16.msra.mxu0 0
        %2923 = vmatprep.subr.bf16.mxu0 0
        %2924 = vmatpush1.bf16.msra.mxu0 0
        %2925 = vmatprep.subr.bf16.mxu0 0
        %2926 = vmatpush1.bf16.msra.mxu0 0
        %2927 = vmatprep.subr.bf16.mxu0 0
        %2928 = vmatpush1.bf16.msra.mxu0 0
        %2929 = vmatprep.subr.bf16.mxu0 0
        %2930 = vmatpush1.bf16.msra.mxu0 0
        %2931 = vmatprep.subr.bf16.mxu0 0
        %2932 = vmatpush1.bf16.msra.mxu0 0
        %2933 = vmatprep.mubr.bf16.mxu0 0
        %2934 = vmatmul.mubr.bf16.gmra.mrb[0].mxu0 %v2896
        %v2935 = vpop.f32.mrb[0].mxu0
        %v2936 = vadd.f32 0.0, %v2935
        %v2937 = vpop.f32.mrb[0].mxu0
        %v2938 = vpop.f32.mrb[0].mxu0
        %v2939 = vpop.f32.mrb[0].mxu0
        %2940 = vdwg.mxu0
        %2943 = vrot.lane.b32.xlu0 %v2440, 8
        %v2944 = vpop.permute.xlu0 %2943
        %2945 = vrot.lane.b32.xlu0 %v2488, 8
        %v2946 = vpop.permute.xlu0 %2945
        %2951 = vrot.lane.b32.xlu0 %v2664, 16
        %v2952 = vpop.permute.xlu0 %2951
        %2953 = vrot.lane.b32.xlu0 %v2712, 16
        %v2954 = vpop.permute.xlu0 %2953
        %2959 = vrot.lane.b32.xlu0 %v2888, 24
        %v2960 = vpop.permute.xlu0 %2959
        %2961 = vrot.lane.b32.xlu0 %v2936, 24
        %v2962 = vpop.permute.xlu0 %2961
        %v2965 = vsel %vm861, %v2213, %v2944
        %v2966 = vsel %vm861, %v2262, %v2946
        %v2967 = vsel %vm1780, %v2965, %v2952
        %v2968 = vsel %vm1780, %v2966, %v2954
        %v2969 = vsel %vm1783, %v2967, %v2960
        %v2970 = vsel %vm1783, %v2968, %v2962
        %v2971 = vpack.c.bf16 %v2970, %v2969
        %v2972 = vlaneseq
        %v2973 = vshrl.u32 %v2972, 7
        %v2974 = vsub.s32 0, %v2973
        %v2975 = vrot.slane %v2030, %v2974
        %v2980 = vunpack.c.l.b16 %v2026
        %v2981 = vunpack.c.l.b16 %v2027
        %v2982 = vunpack.c.l.b16 %v2028
        %v2983 = vunpack.c.l.b16 %v2029
        %v2984 = vpack.c.b16 %v2981, %v2980
        %v2985 = vpack.c.b16 %v2983, %v2982
        %v2989 = vsel %vm729, %v2971, 0
        %2991 = vmatprep.subr.bf16.mxu0 0
        %2992 = vmatpush1.bf16.msra.mxu0 %v2984
        %2993 = vmatprep.subr.bf16.mxu0 0
        %2994 = vmatpush1.bf16.msra.mxu0 %v2985
        %2995 = vmatprep.subr.bf16.mxu0 0
        %2996 = vmatpush1.bf16.msra.mxu0 0
        %2997 = vmatprep.subr.bf16.mxu0 0
        %2998 = vmatpush1.bf16.msra.mxu0 0
        %2999 = vmatprep.subr.bf16.mxu0 0
        %3000 = vmatpush1.bf16.msra.mxu0 0
        %3001 = vmatprep.subr.bf16.mxu0 0
        %3002 = vmatpush1.bf16.msra.mxu0 0
        %3003 = vmatprep.subr.bf16.mxu0 0
        %3004 = vmatpush1.bf16.msra.mxu0 0
        %3005 = vmatprep.subr.bf16.mxu0 0
        %3006 = vmatpush1.bf16.msra.mxu0 0
        %3007 = vmatprep.subr.bf16.mxu0 0
        %3008 = vmatpush1.bf16.msra.mxu0 0
        %3009 = vmatprep.subr.bf16.mxu0 0
        %3010 = vmatpush1.bf16.msra.mxu0 0
        %3011 = vmatprep.subr.bf16.mxu0 0
        %3012 = vmatpush1.bf16.msra.mxu0 0
        %3013 = vmatprep.subr.bf16.mxu0 0
        %3014 = vmatpush1.bf16.msra.mxu0 0
        %3015 = vmatprep.subr.bf16.mxu0 0
        %3016 = vmatpush1.bf16.msra.mxu0 0
        %3017 = vmatprep.subr.bf16.mxu0 0
        %3018 = vmatpush1.bf16.msra.mxu0 0
        %3019 = vmatprep.subr.bf16.mxu0 0
        %3020 = vmatpush1.bf16.msra.mxu0 0
        %3021 = vmatprep.subr.bf16.mxu0 0
        %3022 = vmatpush1.bf16.msra.mxu0 0
        %3023 = vmatprep.mubr.bf16.mxu0 0
        %3024 = vmatmul.mubr.bf16.gmra.mrb[0].mxu0 %v2989
        %v3025 = vpop.f32.mrb[0].mxu0
        %v3026 = vadd.f32 %v2975, %v3025
        %v3027 = vpop.f32.mrb[0].mxu0
        %v3028 = vpop.f32.mrb[0].mxu0
        %v3029 = vadd.f32 %v2975, %v3028
        %v3030 = vpop.f32.mrb[0].mxu0
        %3031 = vdwg.mxu0
        %v3032 = vadd.f32 %v1847, %v3026
        %v3033 = vadd.f32 %v1848, %v3029
        %v3034 = vlaneseq
        %v3035 = vshrl.u32 %v3034, 7
        %vm3036 = vcmp.ne.s32.totalorder %v3035, 0
        %v3037 = vsel %vm3036, 1, 0
        %v3038 = vcvt.s32.f32 %v3037
        %vm3039 = vcmp.ne.s32.totalorder %v3035, 7
        %v3040 = vsel %vm3039, 1, 0
        %v3041 = vcvt.s32.f32 %v3040
        %v3042 = vld [vmem:[%s640 + $0x4] sm:$0x1]
        %v3043 = vld [vmem:[%s640 + $0x5] sm:$0x1]
        %v3044 = vsel %vm729, %v3032, 0.0
        %3045 = vadd.xlane.f32.xlu0 %v3044
        %v3046 = vpop.xlane.xlu0 %3045
        %v3047 = vsel %vm729, %v3033, 0.0
        %3048 = vadd.xlane.f32.xlu0 %v3047
        %v3049 = vpop.xlane.xlu0 %3048
        %v3050 = vmul.f32 %v3046, %v736
        %v3051 = vmul.f32 %v3049, %v736
        %v3052 = vsub.f32 %v3032, %v3050
        %v3053 = vsub.f32 %v3033, %v3051
        %v3054 = vmul.f32 %v3052, %v3052
        %v3055 = vmul.f32 %v3053, %v3053
        %v3056 = vsel %vm729, %v3054, 0.0
        %3057 = vadd.xlane.f32.xlu0 %v3056
        %v3058 = vpop.xlane.xlu0 %3057
        %v3059 = vsel %vm729, %v3055, 0.0
        %3060 = vadd.xlane.f32.xlu0 %v3059
        %v3061 = vpop.xlane.xlu0 %3060
        %v3062 = vmul.f32 %v3058, 0.032258064
        %v3063 = vmul.f32 %v3061, 0.032258064
        %v3064 = vrsqrt.pop %v3062
        %v3065 = vmul.f32 %v3062, %v3064
        %vm3066 = vcmp.eq.f32.partialorder %v3062, inf
        %v3067 = vsel %vm3066, %v3062, %v3065
        %vm3068 = vcmp.eq.f32.partialorder %v3062, 0.0
        %v3069 = vand.u32 %v3062, 2147483648
        %v3070 = vsel %vm3068, %v3069, %v3067
        %v3071 = vrsqrt.pop %v3063
        %v3072 = vmul.f32 %v3063, %v3071
        %vm3073 = vcmp.eq.f32.partialorder %v3063, inf
        %v3074 = vsel %vm3073, %v3063, %v3072
        %vm3075 = vcmp.eq.f32.partialorder %v3063, 0.0
        %v3076 = vand.u32 %v3063, 2147483648
        %v3077 = vsel %vm3075, %v3076, %v3074
        %v3078 = vadd.f32 %v3070, 1e-06
        %v3079 = vadd.f32 %v3077, 1e-06
        %v3080 = vrcp.pop %v3078
        %v3081 = vrcp.pop %v3079
        %v3082 = vlaneseq
        %v3083 = vshrl.u32 %v3082, 7
        %v3084 = vsub.s32 0, %v3083
        %v3085 = vrot.slane %v3042, %v3084
        %v3086 = vmul.f32 %v3085, %v3052
        %v3087 = vmul.f32 %v3085, %v3053
        %v3088 = vmul.f32 %v3086, %v3080
        %v3089 = vmul.f32 %v3087, %v3081
        %v3090 = vlaneseq
        %v3091 = vshrl.u32 %v3090, 7
        %v3092 = vsub.s32 0, %v3091
        %v3093 = vrot.slane %v3043, %v3092
        %v3094 = vadd.f32 %v3088, %v3093
        %v3095 = vadd.f32 %v3089, %v3093
        %v3096 = vld [vmem:[%s613] sm:$0xf]
        %v3097 = vld [vmem:[%s613 + $0x4] sm:$0xf]
        %v3098 = vld [vmem:[%s613 + $0x8] sm:$0xf]
        %v3099 = vld [vmem:[%s613 + $0xc] sm:$0xf]
        %v3100 = vld [vmem:[%s613 + $0x10] sm:$0xf]
        %v3101 = vld [vmem:[%s613 + $0x14] sm:$0xf]
        %v3102 = vld [vmem:[%s613 + $0x18] sm:$0xf]
        %v3103 = vld [vmem:[%s613 + $0x1c] sm:$0xf]
        %v3104 = vld [vmem:[%s613 + $0x20] sm:$0xf]
        %v3105 = vld [vmem:[%s613 + $0x24] sm:$0xf]
        %v3106 = vld [vmem:[%s613 + $0x28] sm:$0xf]
        %v3107 = vld [vmem:[%s613 + $0x2c] sm:$0xf]
        %v3108 = vld [vmem:[%s648] sm:$0x1]
        %v3109 = vrot.slane %v3094, 7
        %v3110 = vrot.slane %v3095, 7
        %vm3111 = vcmp.lt.s32.totalorder %v3035, 1
        %v3112 = vsel %vm3111, %v3109, %v3110
        %v3113 = vsel %vm3111, %v3110, %v3109
        %v3114 = vmul.f32 %v3113, %v3038
        %v3115 = vmul.f32 %v3112, %v3038
        %v3116 = vrot.slane %v3094, 1
        %v3117 = vrot.slane %v3095, 1
        %vm3118 = vcmp.lt.s32.totalorder %v3035, 7
        %v3119 = vsel %vm3118, %v3116, %v3117
        %v3120 = vsel %vm3118, %v3117, %v3116
        %v3121 = vmul.f32 %v3119, %v3041
        %v3122 = vmul.f32 %v3120, %v3041
        %3125 = vrot.lane.b32.xlu0 %v3094, 32
        %v3126 = vpop.permute.xlu0 %3125
        %3127 = vrot.lane.b32.xlu0 %v3095, 32
        %v3128 = vpop.permute.xlu0 %3127
        %3133 = vrot.lane.b32.xlu0 %v3121, 64
        %v3134 = vpop.permute.xlu0 %3133
        %3135 = vrot.lane.b32.xlu0 %v3122, 64
        %v3136 = vpop.permute.xlu0 %3135
        %v3139 = vsel %vm729, %v3114, %v3126
        %v3140 = vsel %vm729, %v3115, %v3128
        %vm3141 = vcmask 523264
        %v3142 = vsel %vm3141, %v3139, %v3134
        %v3143 = vsel %vm3141, %v3140, %v3136
        %v3144 = vpack.c.bf16 %v3143, %v3142
        %v3146 = vlaneseq
        %v3147 = vshrl.u32 %v3146, 7
        %v3148 = vsub.s32 0, %v3147
        %v3149 = vrot.slane %v3108, %v3148
        %v3163 = vunpack.c.l.b16 %v3096
        %v3164 = vunpack.c.l.b16 %v3097
        %v3165 = vunpack.c.l.b16 %v3098
        %v3166 = vunpack.c.l.b16 %v3099
        %v3167 = vunpack.c.l.b16 %v3100
        %v3168 = vunpack.c.l.b16 %v3101
        %v3169 = vunpack.c.l.b16 %v3102
        %v3170 = vunpack.c.l.b16 %v3103
        %v3171 = vunpack.c.l.b16 %v3104
        %v3172 = vunpack.c.l.b16 %v3105
        %v3173 = vunpack.c.l.b16 %v3106
        %v3174 = vunpack.c.l.b16 %v3107
        %v3175 = vpack.c.b16 %v3164, %v3163
        %v3176 = vpack.c.b16 %v3166, %v3165
        %v3177 = vpack.c.b16 %v3168, %v3167
        %v3178 = vpack.c.b16 %v3170, %v3169
        %v3179 = vpack.c.b16 %v3172, %v3171
        %v3180 = vpack.c.b16 %v3174, %v3173
        %vm3187 = vcmask 785408
        %v3189 = vsel %vm3187, %v3144, 0
        %3191 = vmatprep.subr.bf16.mxu0 0
        %3192 = vmatpush1.bf16.msra.mxu0 %v3175
        %3193 = vmatprep.subr.bf16.mxu0 0
        %3194 = vmatpush1.bf16.msra.mxu0 %v3176
        %3195 = vmatprep.subr.bf16.mxu0 0
        %3196 = vmatpush1.bf16.msra.mxu0 %v3177
        %3197 = vmatprep.subr.bf16.mxu0 0
        %3198 = vmatpush1.bf16.msra.mxu0 %v3178
        %3199 = vmatprep.subr.bf16.mxu0 0
        %3200 = vmatpush1.bf16.msra.mxu0 %v3179
        %3201 = vmatprep.subr.bf16.mxu0 0
        %3202 = vmatpush1.bf16.msra.mxu0 %v3180
        %3203 = vmatprep.subr.bf16.mxu0 0
        %3204 = vmatpush1.bf16.msra.mxu0 0
        %3205 = vmatprep.subr.bf16.mxu0 0
        %3206 = vmatpush1.bf16.msra.mxu0 0
        %3207 = vmatprep.subr.bf16.mxu0 0
        %3208 = vmatpush1.bf16.msra.mxu0 0
        %3209 = vmatprep.subr.bf16.mxu0 0
        %3210 = vmatpush1.bf16.msra.mxu0 0
        %3211 = vmatprep.subr.bf16.mxu0 0
        %3212 = vmatpush1.bf16.msra.mxu0 0
        %3213 = vmatprep.subr.bf16.mxu0 0
        %3214 = vmatpush1.bf16.msra.mxu0 0
        %3215 = vmatprep.subr.bf16.mxu0 0
        %3216 = vmatpush1.bf16.msra.mxu0 0
        %3217 = vmatprep.subr.bf16.mxu0 0
        %3218 = vmatpush1.bf16.msra.mxu0 0
        %3219 = vmatprep.subr.bf16.mxu0 0
        %3220 = vmatpush1.bf16.msra.mxu0 0
        %3221 = vmatprep.subr.bf16.mxu0 0
        %3222 = vmatpush1.bf16.msra.mxu0 0
        %3223 = vmatprep.mubr.bf16.mxu0 0
        %3224 = vmatmul.mubr.bf16.gmra.mrb[0].mxu0 %v3189
        %v3225 = vpop.f32.mrb[0].mxu0
        %v3226 = vadd.f32 %v3149, %v3225
        %v3227 = vpop.f32.mrb[0].mxu0
        %v3228 = vpop.f32.mrb[0].mxu0
        %v3229 = vadd.f32 %v3149, %v3228
        %v3230 = vpop.f32.mrb[0].mxu0
        %3231 = vdwg.mxu0
        %v3232 = vmax.f32 %v3226, 0.0
        %v3233 = vmax.f32 %v3229, 0.0
        %v3234 = vld [vmem:[%s622] sm:$0xf]
        %v3235 = vld [vmem:[%s622 + $0x4] sm:$0xf]
        %v3236 = vld [vmem:[%s622 + $0x8] sm:$0xf]
        %v3237 = vld [vmem:[%s622 + $0xc] sm:$0xf]
        %v3238 = vld [vmem:[%s622 + $0x10] sm:$0xf]
        %v3239 = vld [vmem:[%s622 + $0x14] sm:$0xf]
        %v3240 = vld [vmem:[%s622 + $0x18] sm:$0xf]
        %v3241 = vld [vmem:[%s622 + $0x1c] sm:$0xf]
        %v3242 = vld [vmem:[%s622 + $0x20] sm:$0xf]
        %v3243 = vld [vmem:[%s622 + $0x24] sm:$0xf]
        %v3244 = vld [vmem:[%s622 + $0x28] sm:$0xf]
        %v3245 = vld [vmem:[%s622 + $0x2c] sm:$0xf]
        %v3246 = vld [vmem:[%s622 + $0x30] sm:$0xf]
        %v3247 = vld [vmem:[%s622 + $0x34] sm:$0xf]
        %v3248 = vld [vmem:[%s622 + $0x38] sm:$0xf]
        %v3249 = vld [vmem:[%s622 + $0x3c] sm:$0xf]
        %v3250 = vld [vmem:[%s622 + $0x40] sm:$0xf]
        %v3251 = vld [vmem:[%s622 + $0x44] sm:$0xf]
        %v3252 = vld [vmem:[%s622 + $0x48] sm:$0xf]
        %v3253 = vld [vmem:[%s622 + $0x4c] sm:$0xf]
        %v3254 = vld [vmem:[%s622 + $0x50] sm:$0xf]
        %v3255 = vld [vmem:[%s622 + $0x54] sm:$0xf]
        %v3256 = vld [vmem:[%s622 + $0x58] sm:$0xf]
        %v3257 = vld [vmem:[%s622 + $0x5c] sm:$0xf]
        %v3258 = vld [vmem:[%s640 + $0x8] sm:$0x1]
        %v3259 = vrot.slane %v3232, 7
        %v3260 = vrot.slane %v3233, 7
        %v3261 = vsel %vm3111, %v3259, %v3260
        %v3262 = vsel %vm3111, %v3260, %v3259
        %v3263 = vmul.f32 %v3262, %v3038
        %v3264 = vmul.f32 %v3261, %v3038
        %v3265 = vrot.slane %v3232, 1
        %v3266 = vrot.slane %v3233, 1
        %v3267 = vsel %vm3118, %v3265, %v3266
        %v3268 = vsel %vm3118, %v3266, %v3265
        %v3269 = vmul.f32 %v3267, %v3041
        %v3270 = vmul.f32 %v3268, %v3041
        %3273 = vrot.lane.b32.xlu0 %v3232, 64
        %v3274 = vpop.permute.xlu0 %3273
        %3275 = vrot.lane.b32.xlu0 %v3233, 64
        %v3276 = vpop.permute.xlu0 %3275
        %v3279 = vsel %vm3141, %v3263, %v3274
        %v3280 = vsel %vm3141, %v3264, %v3276
        %v3281 = vpack.c.bf16 %v3280, %v3279
        %v3282 = vpack.c.bf16 %v3270, %v3269
        %v3283 = vlaneseq
        %v3284 = vshrl.u32 %v3283, 7
        %v3285 = vsub.s32 0, %v3284
        %v3286 = vrot.slane %v3258, %v3285
        %v3311 = vunpack.c.l.b16 %v3234
        %v3312 = vunpack.c.l.b16 %v3235
        %v3313 = vunpack.c.l.b16 %v3236
        %v3314 = vunpack.c.l.b16 %v3237
        %v3315 = vunpack.c.l.b16 %v3238
        %v3316 = vunpack.c.l.b16 %v3239
        %v3317 = vunpack.c.l.b16 %v3240
        %v3318 = vunpack.c.l.b16 %v3241
        %v3319 = vunpack.c.l.b16 %v3242
        %v3320 = vunpack.c.l.b16 %v3243
        %v3321 = vunpack.c.l.b16 %v3244
        %v3322 = vunpack.c.l.b16 %v3245
        %v3323 = vunpack.c.l.b16 %v3246
        %v3324 = vunpack.c.l.b16 %v3247
        %v3325 = vunpack.c.l.b16 %v3248
        %v3326 = vunpack.c.l.b16 %v3249
        %v3327 = vunpack.c.l.b16 %v3250
        %v3328 = vunpack.c.l.b16 %v3251
        %v3329 = vunpack.c.l.b16 %v3252
        %v3330 = vunpack.c.l.b16 %v3253
        %v3331 = vunpack.c.l.b16 %v3254
        %v3332 = vunpack.c.l.b16 %v3255
        %v3333 = vunpack.c.l.b16 %v3256
        %v3334 = vunpack.c.l.b16 %v3257
        %v3335 = vpack.c.b16 %v3312, %v3311
        %v3336 = vpack.c.b16 %v3314, %v3313
        %v3337 = vpack.c.b16 %v3316, %v3315
        %v3338 = vpack.c.b16 %v3318, %v3317
        %v3339 = vpack.c.b16 %v3320, %v3319
        %v3340 = vpack.c.b16 %v3322, %v3321
        %v3341 = vpack.c.b16 %v3324, %v3323
        %v3342 = vpack.c.b16 %v3326, %v3325
        %v3343 = vpack.c.b16 %v3328, %v3327
        %v3344 = vpack.c.b16 %v3330, %v3329
        %v3345 = vpack.c.b16 %v3332, %v3331
        %v3346 = vpack.c.b16 %v3334, %v3333
        %v3360 = vsel %vm3141, %v3282, 0
        %3362 = vmatprep.subr.bf16.mxu0 0
        %3363 = vmatpush1.bf16.msra.mxu0 %v3335
        %3364 = vmatprep.subr.bf16.mxu0 0
        %3365 = vmatpush1.bf16.msra.mxu0 %v3336
        %3366 = vmatprep.subr.bf16.mxu0 0
        %3367 = vmatpush1.bf16.msra.mxu0 %v3337
        %3368 = vmatprep.subr.bf16.mxu0 0
        %3369 = vmatpush1.bf16.msra.mxu0 %v3338
        %3370 = vmatprep.subr.bf16.mxu0 0
        %3371 = vmatpush1.bf16.msra.mxu0 %v3339
        %3372 = vmatprep.subr.bf16.mxu0 0
        %3373 = vmatpush1.bf16.msra.mxu0 %v3340
        %3374 = vmatprep.subr.bf16.mxu0 0
        %3375 = vmatpush1.bf16.msra.mxu0 %v3341
        %3376 = vmatprep.subr.bf16.mxu0 0
        %3377 = vmatpush1.bf16.msra.mxu0 %v3342
        %3378 = vmatprep.subr.bf16.mxu0 0
        %3379 = vmatpush1.bf16.msra.mxu0 %v3343
        %3380 = vmatprep.subr.bf16.mxu0 0
        %3381 = vmatpush1.bf16.msra.mxu0 %v3344
        %3382 = vmatprep.subr.bf16.mxu0 0
        %3383 = vmatpush1.bf16.msra.mxu0 %v3345
        %3384 = vmatprep.subr.bf16.mxu0 0
        %3385 = vmatpush1.bf16.msra.mxu0 %v3346
        %3386 = vmatprep.subr.bf16.mxu0 0
        %3387 = vmatpush1.bf16.msra.mxu0 0
        %3388 = vmatprep.subr.bf16.mxu0 0
        %3389 = vmatpush1.bf16.msra.mxu0 0
        %3390 = vmatprep.subr.bf16.mxu0 0
        %3391 = vmatpush1.bf16.msra.mxu0 0
        %3392 = vmatprep.subr.bf16.mxu0 0
        %3393 = vmatpush1.bf16.msra.mxu0 0
        %3394 = vmatprep.mubr.bf16.mxu0 %v3360
        %3395 = vmatmul.mubr.bf16.gmra.mrb[0].mxu0 %v3281
        %v3396 = vpop.f32.mrb[0].mxu0
        %v3397 = vadd.f32 %v3286, %v3396
        %v3398 = vpop.f32.mrb[0].mxu0
        %v3399 = vpop.f32.mrb[0].mxu0
        %v3400 = vadd.f32 %v3286, %v3399
        %v3401 = vpop.f32.mrb[0].mxu0
        %3402 = vdwg.mxu0
        %v3403 = vadd.f32 %v3032, %v3397
        %v3404 = vadd.f32 %v3033, %v3400
        %p3405 = scmp.lt.s32.totalorder %s39, 1
        // Predicated region
        $region121: #{fasttext_cnn_decoder.1} parent=67 // pred_check
          %p3406 = pneg %p3405
        $region122: #{fasttext_cnn_decoder.1} parent=67 // pred_check_branch
          %3408 = sbr.rel (%p3406) target = $region124
        $region123: #{fasttext_cnn_decoder.1} parent=67 // pred_region
          %3409 = vst.msk [vmem:[#allocation22] sm:$0xff] %vm729, %v3403
          %3410 = vst.msk [vmem:[#allocation22 + $0x8] sm:$0xff] %vm729, %v3404
        $region124: #{fasttext_cnn_decoder.1} parent=67 // pred_fallthru
          _
        %p3411 = scmp.eq.s32.totalorder %s39, 1
        // Predicated region
        $region125: #{fasttext_cnn_decoder.1} parent=67 // pred_check
          %p3412 = pneg %p3411
        $region126: #{fasttext_cnn_decoder.1} parent=67 // pred_check_branch
          %3414 = sbr.rel (%p3412) target = $region128
        $region127: #{fasttext_cnn_decoder.1} parent=67 // pred_region
          %v3415 = vld [vmem:[#allocation10] sm:$0x1]
          %v3416 = vld [vmem:[#allocation10 + $0x1] sm:$0x1]
          %v3417 = vsel %vm729, %v3403, 0.0
          %3418 = vadd.xlane.f32.xlu0 %v3417
          %v3419 = vpop.xlane.xlu0 %3418
          %v3420 = vsel %vm729, %v3404, 0.0
          %3421 = vadd.xlane.f32.xlu0 %v3420
          %v3422 = vpop.xlane.xlu0 %3421
          %v3423 = vmul.f32 %v3419, %v736
          %v3424 = vmul.f32 %v3422, %v736
          %v3425 = vsub.f32 %v3403, %v3423
          %v3426 = vsub.f32 %v3404, %v3424
          %v3427 = vmul.f32 %v3425, %v3425
          %v3428 = vmul.f32 %v3426, %v3426
          %v3429 = vsel %vm729, %v3427, 0.0
          %3430 = vadd.xlane.f32.xlu0 %v3429
          %v3431 = vpop.xlane.xlu0 %3430
          %v3432 = vsel %vm729, %v3428, 0.0
          %3433 = vadd.xlane.f32.xlu0 %v3432
          %v3434 = vpop.xlane.xlu0 %3433
          %v3435 = vmul.f32 %v3431, 0.032258064
          %v3436 = vmul.f32 %v3434, 0.032258064
          %v3437 = vrsqrt.pop %v3435
          %v3438 = vmul.f32 %v3435, %v3437
          %vm3439 = vcmp.eq.f32.partialorder %v3435, inf
          %v3440 = vsel %vm3439, %v3435, %v3438
          %vm3441 = vcmp.eq.f32.partialorder %v3435, 0.0
          %v3442 = vand.u32 %v3435, 2147483648
          %v3443 = vsel %vm3441, %v3442, %v3440
          %v3444 = vrsqrt.pop %v3436
          %v3445 = vmul.f32 %v3436, %v3444
          %vm3446 = vcmp.eq.f32.partialorder %v3436, inf
          %v3447 = vsel %vm3446, %v3436, %v3445
          %vm3448 = vcmp.eq.f32.partialorder %v3436, 0.0
          %v3449 = vand.u32 %v3436, 2147483648
          %v3450 = vsel %vm3448, %v3449, %v3447
          %v3451 = vadd.f32 %v3443, 1e-06
          %v3452 = vadd.f32 %v3450, 1e-06
          %v3453 = vrcp.pop %v3451
          %v3454 = vrcp.pop %v3452
          %v3455 = vlaneseq
          %v3456 = vshrl.u32 %v3455, 7
          %v3457 = vsub.s32 0, %v3456
          %v3458 = vrot.slane %v3415, %v3457
          %v3459 = vmul.f32 %v3458, %v3425
          %v3460 = vmul.f32 %v3458, %v3426
          %v3461 = vmul.f32 %v3459, %v3453
          %v3462 = vmul.f32 %v3460, %v3454
          %v3463 = vlaneseq
          %v3464 = vshrl.u32 %v3463, 7
          %v3465 = vsub.s32 0, %v3464
          %v3466 = vrot.slane %v3416, %v3465
          %v3467 = vadd.f32 %v3461, %v3466
          %v3468 = vadd.f32 %v3462, %v3466
          %3469 = vst.msk [vmem:[#allocation22] sm:$0xff] %vm729, %v3467
          %3470 = vst.msk [vmem:[#allocation22 + $0x8] sm:$0xff] %vm729, %v3468
        $region128: #{fasttext_cnn_decoder.1} parent=67 // pred_fallthru
          _
        // Predicated region
        $region129: #{fasttext_cnn_decoder.1} parent=67 // pred_check
          %p3471 = pneg %p339
        $region130: #{fasttext_cnn_decoder.1} parent=67 // pred_check_branch
          %3473 = sbr.rel (%p3471) target = $region132
        $region131: #{fasttext_cnn_decoder.1} parent=67 // pred_region
          %s3475 = ssub.s32 256, 256
          %3476 = vsyncadd [#allocation4], %s3475
          %s3477 = sshll.u32 [#allocation22], 4
          %s3478 = int_to_ptr.vmem [resolvable:$true] %s3477
          %3483 = dma.vmem_to_hbm [thread:$0]  %s3478, 256, %s12, [#allocation4], 128, 128, 8
        $region132: #{fasttext_cnn_decoder.1} parent=67 // pred_fallthru
          _
        // Predicated region
        $region133: #{fasttext_cnn_decoder.1} parent=67 // pred_check
          %p3484 = pneg %p339
        $region134: #{fasttext_cnn_decoder.1} parent=67 // pred_check_branch
          %3486 = sbr.rel (%p3484) target = $region136
        $region135: #{fasttext_cnn_decoder.1} parent=67 // pred_region
          %3487 = dma.done [#allocation4], 256
        $region136: #{fasttext_cnn_decoder.1} parent=67 // pred_fallthru
          _
      $region68: #{fasttext_cnn_decoder.1} parent=5 // pred_fallthru
        _
      %p3488 = scmp.le.s32.totalorder 2, %s34
      // Predicated region
      $region137: #{fasttext_cnn_decoder.1} parent=5 // pred_check
        %p3489 = pneg %p3488
      $region138: #{fasttext_cnn_decoder.1} parent=5 // pred_check_branch
        %3491 = sbr.rel (%p3489) target = $region140
      $region139: #{fasttext_cnn_decoder.1} parent=5 // pred_region
        %s3492 = ssub.s32 %s34, 2
      $region140: #{fasttext_cnn_decoder.1} parent=5 // pred_fallthru
        _
    $region6: #{fasttext_cnn_decoder.1} parent=1 // loop_footer
      %s38 = sadd.s32 1, %s34
    $region7: #{fasttext_cnn_decoder.1} parent=1 // loop_footer_branch
      %33 = sbr.rel target = $region3
    $region8: #{fasttext_cnn_decoder.1} parent=1 // loop_exit
      _
    %3493 = vsyncpa [#allocation3], 1
    %s3494 = scalar_lea.sflag [#allocation3], 1
    %3495 = vsyncpa %s3494, 1
    %3496 = vsyncpa [#allocation6], 1
    %3497 = vsyncpa [#allocation9], 1
    %3498 = vsyncpa [#allocation12], 1
    %s3499 = scalar_lea.sflag [#allocation12], 1
    %3500 = vsyncpa %s3499, 1
    %3501 = vsyncpa [#allocation15], 1
    %s3502 = scalar_lea.sflag [#allocation15], 1
    %3503 = vsyncpa %s3502, 1
    %3504 = vsyncpa [#allocation18], 1
    %s3505 = scalar_lea.sflag [#allocation18], 1
    %3506 = vsyncpa %s3505, 1
    %3507 = vsyncpa [#allocation21], 1
    %s3508 = scalar_lea.sflag [#allocation21], 1
    %3509 = vsyncpa %s3508, 1
    %3510 = vsyncpa [#allocation4], 1
    %s3511 = scalar_lea.sflag [#allocation4], 1
    %3512 = vsyncpa %s3511, 1

</llo_original>
